<compile_context>
chip_gen: v6e
topology: v6e:2x2x1
jax: 0.10.0
libtpu: 0.0.40
codegen_flags: <defaults>
</compile_context>

<pallas_src>
import functools

import numpy as np
import jax
import jax.numpy as jnp
from jax.experimental import pallas as pl
from jax.experimental.pallas import tpu as pltpu

# Module hyper-parameters (from the PyTorch file).
INPUT_SIZE = 25
HIDDEN_SIZE = 20
LATENT_SIZE = 10

GB = 128          # lane width of one (padded) gate block
GP = 4 * GB       # padded width of one LSTM's gate set (i|f|g|o)


def lstm_vae_kernel(
    x_ref,        # (S*B, I+1)   time-major flattened input, last column == 1 (bias)
    state_ref,    # (B, 384)     [h0 | c0 | noise] at 128-aligned lane blocks
    wih_ref,      # (I+1, 1024)  [enc gates | dec gates], gate-block aligned, bias row folded
    wrec_ref,     # (H, 1305)    [enc W_hh | dec W_hh | head_w | out_w]
    wsmall_ref,   # (16, 256)    dih_w / dih_b / head_b / out_b
    xhat_ref,     # (S*B, I)     output, time-major flattened
    small_ref,    # (B, 128)     packed [mean|logvar|z|h_n|c_n]  (ANY space, manual DMA)
    gx_ref,       # VMEM (S*B, 1024) scratch: hoisted input projection
    hs_ref,       # VMEM (S*B, 128)  scratch: decoder hidden states
    stage_ref,    # VMEM (B, 128)    scratch: staging for early small-output writeback
    sem,          # DMA semaphore
    *, seq_len, batch,
):
  H, L, I = HIDDEN_SIZE, LATENT_SIZE, INPUT_SIZE
  B = batch
  f32 = jnp.float32

  # ---- hoisted, fused input projection for BOTH LSTMs (biases folded) -------
  # One (S*B, I+1) @ (I+1, 1024) matmul, spilled to VMEM so it never lives in
  # vregs across the recurrences; per-step slices are static vlds.
  gx_ref[...] = jnp.dot(x_ref[...], wih_ref[...], preferred_element_type=f32)

  def cell(gx_t, h, c, whh):
    # gx_t: (B, 512) with gates i/f/g/o at 128-lane-aligned offsets.  The gate
    # slices below start at lane 0 of their own vreg -> no XLU lane rotation on
    # the serial chain.  Per-step work: one h @ W_hh MXU push + gate math.
    gates = gx_t + jnp.dot(h, whh, preferred_element_type=f32)   # (B, 512)
    i = jax.nn.sigmoid(gates[:, 0 * GB:0 * GB + H])
    f = jax.nn.sigmoid(gates[:, 1 * GB:1 * GB + H])
    g = jnp.tanh(gates[:, 2 * GB:2 * GB + H])
    o = jax.nn.sigmoid(gates[:, 3 * GB:3 * GB + H])
    c_new = f * c + i * g
    h_new = o * jnp.tanh(c_new)
    return h_new, c_new

  # ---------------- encoder LSTM (fully unrolled, static slices) -------------
  enc_whh = wrec_ref[:, 0:GP]                                    # (H, 512)
  h = state_ref[:, 0:H]
  c = state_ref[:, GB:GB + H]
  for t in range(seq_len):
    h, c = cell(gx_ref[t * B:(t + 1) * B, 0:GP], h, c, enc_whh)
  h_enc, c_enc = h, c

  # ---------------- latent head (mean & log_var fused into one matmul) -------
  heads = (jnp.dot(h_enc, wrec_ref[:, 2 * GP:2 * GP + 2 * GB],
                   preferred_element_type=f32)
           + wsmall_ref[11:12, :])                               # (B, 256)
  mean = heads[:, 0:L]
  log_var = heads[:, GB:GB + L]
  std = jnp.exp(0.5 * log_var)
  noise = state_ref[:, 2 * GB:2 * GB + L]
  z = noise * std + mean

  # Pack the small outputs into one dense (B, 128) tile and start its HBM
  # writeback NOW so it overlaps with the decoder recurrence below.
  stage_ref[...] = jnp.concatenate(
      [mean, log_var, z, h_enc, c_enc,
       jnp.zeros((B, 128 - 3 * L - 2 * H), f32)], axis=1)
  small_copy = pltpu.make_async_copy(stage_ref, small_ref, sem)
  small_copy.start()

  # ---------------- decoder LSTM (fully unrolled) ----------------------------
  hd = (jnp.dot(z, wsmall_ref[0:L, 0:H], preferred_element_type=f32)
        + wsmall_ref[10:11, 0:H])                                # h0 = c0 = hd
  dec_whh = wrec_ref[:, GP:2 * GP]                               # (H, 512)
  h, c = hd, hd
  for t in range(seq_len):
    h, c = cell(gx_ref[t * B:(t + 1) * B, GP:2 * GP], h, c, dec_whh)
    hs_ref[t * B:(t + 1) * B, 0:H] = h        # per-step store; hides in idle vst slots

  # ---- output projection hoisted out of the loop: one dense matmul ----------
  out_w = wrec_ref[:, 2 * GP + 2 * GB:2 * GP + 2 * GB + I]       # (H, I)
  xhat_ref[...] = (jnp.dot(hs_ref[:, 0:H], out_w, preferred_element_type=f32)
                   + wsmall_ref[12:13, 0:I])

  small_copy.wait()


def init_params(key):
  """Deterministic parameter init matching PyTorch shapes (transposed for x @ W)."""
  ks = jax.random.split(key, 16)
  H, I, L = HIDDEN_SIZE, INPUT_SIZE, LATENT_SIZE
  k_lstm = 1.0 / np.sqrt(H)

  def unif(k, shape, bound):
    return jax.random.uniform(k, shape, jnp.float32, -bound, bound)

  # encoder LSTM (PyTorch: weight_ih (4H,I), weight_hh (4H,H), biases (4H,))
  enc_wih = unif(ks[0], (4 * H, I), k_lstm).T          # (I, 4H)
  enc_whh = unif(ks[1], (4 * H, H), k_lstm).T          # (H, 4H)
  enc_b = (unif(ks[2], (4 * H,), k_lstm)
           + unif(ks[3], (4 * H,), k_lstm)).reshape(1, 4 * H)
  # decoder LSTM
  dec_wih = unif(ks[4], (4 * H, I), k_lstm).T
  dec_whh = unif(ks[5], (4 * H, H), k_lstm).T
  dec_b = (unif(ks[6], (4 * H,), k_lstm)
           + unif(ks[7], (4 * H,), k_lstm)).reshape(1, 4 * H)
  # Linear layers: weight (out, in), bias (out,), bound = 1/sqrt(in)
  mean_w = unif(ks[8], (L, H), 1.0 / np.sqrt(H)).T     # (H, L)
  mean_b = unif(ks[9], (L,), 1.0 / np.sqrt(H)).reshape(1, L)
  lv_w = unif(ks[10], (L, H), 1.0 / np.sqrt(H)).T
  lv_b = unif(ks[11], (L,), 1.0 / np.sqrt(H)).reshape(1, L)
  dih_w = unif(ks[12], (H, L), 1.0 / np.sqrt(L)).T     # (L, H)
  dih_b = unif(ks[13], (H,), 1.0 / np.sqrt(L)).reshape(1, H)
  out_w = unif(ks[14], (I, H), 1.0 / np.sqrt(H)).T     # (H, I)
  out_b = unif(ks[15], (I,), 1.0 / np.sqrt(H)).reshape(1, I)

  return (enc_wih, enc_whh, enc_b, mean_w, mean_b, lv_w, lv_b,
          dih_w, dih_b, dec_wih, dec_whh, dec_b, out_w, out_b)


def lstm_vae_forward(x, hidden_encoder, noise, params):
  """x: (B, S, I) batch-first; hidden_encoder: tuple of (1, B, H); noise: (B, L)."""
  (enc_wih, enc_whh, enc_b, mean_w, mean_b, lv_w, lv_b,
   dih_w, dih_b, dec_wih, dec_whh, dec_b, out_w, out_b) = params
  B, S, I = x.shape
  H, L = HIDDEN_SIZE, LATENT_SIZE

  # Pad batch to the 8-sublane tile so every vreg op is full-width.
  # (To batch many sequences per call, just raise B here — step latency is flat
  # up to B ~ 128-256, so throughput scales nearly linearly.)
  Bp = max(8, -(-B // 8) * 8)
  pad = Bp - B

  h0 = hidden_encoder[0].reshape(B, H)
  c0 = hidden_encoder[1].reshape(B, H)

  # Time-major, batch padded, constant-1 bias column appended.
  x_tm = jnp.transpose(x, (1, 0, 2))                    # (S, B, I)
  if pad:
    x_tm = jnp.pad(x_tm, ((0, 0), (0, pad), (0, 0)))
  ones = jnp.ones((S, Bp, 1), jnp.float32)
  x_aug = jnp.concatenate([x_tm, ones], axis=-1).reshape(S * Bp, I + 1)

  # Packed per-batch state: h0 | c0 | noise at 128-lane-aligned blocks.
  state = jnp.zeros((Bp, 3 * GB), jnp.float32)
  state = state.at[:B, 0:H].set(h0)
  state = state.at[:B, GB:GB + H].set(c0)
  state = state.at[:B, 2 * GB:2 * GB + L].set(noise)

  def gate_pad(w):
    """(rows, 4H) gate-major -> (rows, 512) with gate k at lanes [k*128, k*128+H)."""
    out = jnp.zeros((w.shape[0], GP), jnp.float32)
    for k in range(4):
      out = out.at[:, k * GB:k * GB + H].set(w[:, k * H:(k + 1) * H])
    return out

  # Input-projection slab: [enc gates | dec gates], bias row (b_ih+b_hh) folded.
  wih_cat = jnp.concatenate(
      [gate_pad(jnp.concatenate([enc_wih, enc_b], axis=0)),
       gate_pad(jnp.concatenate([dec_wih, dec_b], axis=0))], axis=1)   # (I+1, 1024)

  # Recurrent / head / output weight slab (rows = H).
  head_w_pad = jnp.zeros((H, 2 * GB), jnp.float32)
  head_w_pad = head_w_pad.at[:, 0:L].set(mean_w).at[:, GB:GB + L].set(lv_w)
  w_rec = jnp.concatenate(
      [gate_pad(enc_whh), gate_pad(dec_whh), head_w_pad, out_w], axis=1)  # (H, 1305)

  # Small-weight slab: dih_w / dih_b / head_b / out_b.
  w_small = jnp.zeros((16, 2 * GB), jnp.float32)
  w_small = w_small.at[0:L, 0:H].set(dih_w)
  w_small = w_small.at[10, 0:H].set(dih_b[0])
  w_small = w_small.at[11, 0:L].set(mean_b[0])
  w_small = w_small.at[11, GB:GB + L].set(lv_b[0])
  w_small = w_small.at[12, 0:I].set(out_b[0])

  kernel = functools.partial(lstm_vae_kernel, seq_len=S, batch=Bp)
  vmem = lambda: pl.BlockSpec(memory_space=pltpu.MemorySpace.VMEM)

  xhat_flat, small = pl.pallas_call(
      kernel,
      out_shape=(
          jax.ShapeDtypeStruct((S * Bp, I), jnp.float32),   # x_hat (time-major, flat)
          jax.ShapeDtypeStruct((Bp, 128), jnp.float32),     # packed mean|logvar|z|h_n|c_n
      ),
      in_specs=[vmem() for _ in range(5)],
      out_specs=(vmem(), pl.BlockSpec(memory_space=pl.ANY)),
      scratch_shapes=[
          pltpu.VMEM((S * Bp, 2 * GP), jnp.float32),   # gx precompute
          pltpu.VMEM((S * Bp, 128), jnp.float32),      # decoder hidden states
          pltpu.VMEM((Bp, 128), jnp.float32),          # small-output staging
          pltpu.SemaphoreType.DMA(()),
      ],
  )(x_aug, state, wih_cat, w_rec, w_small)

  x_hat = jnp.transpose(xhat_flat.reshape(S, Bp, I)[:, :B], (1, 0, 2))  # (B, S, I)
  mean = small[:B, 0:L]
  log_var = small[:B, L:2 * L]
  z = small[:B, 2 * L:3 * L]
  h_n = small[:B, 3 * L:3 * L + H]
  c_n = small[:B, 3 * L + H:3 * L + 2 * H]
  # PyTorch shapes: mean/log_var/z are (1, B, L); hidden_encoder is ((1,B,H), (1,B,H))
  return (x_hat, mean[None], log_var[None], z[None], (h_n[None], c_n[None]))


def _reference_forward(x, hidden_encoder, noise, params):
  """Pure-JAX reference of the same math, for correctness checking."""
  (enc_wih, enc_whh, enc_b, mean_w, mean_b, lv_w, lv_b,
   dih_w, dih_b, dec_wih, dec_whh, dec_b, out_w, out_b) = params
  B, S, I = x.shape
  H = HIDDEN_SIZE

  def cell(x_t, h, c, wih, whh, b):
    g = x_t @ wih + h @ whh + b
    i = jax.nn.sigmoid(g[:, :H]); f = jax.nn.sigmoid(g[:, H:2*H])
    gg = jnp.tanh(g[:, 2*H:3*H]); o = jax.nn.sigmoid(g[:, 3*H:])
    c = f * c + i * gg
    return o * jnp.tanh(c), c

  h, c = hidden_encoder[0][0], hidden_encoder[1][0]
  for t in range(S):
    h, c = cell(x[:, t], h, c, enc_wih, enc_whh, enc_b)
  mean = h @ mean_w + mean_b
  log_var = h @ lv_w + lv_b
  z = noise * jnp.exp(0.5 * log_var) + mean
  hd = z @ dih_w + dih_b
  dh, dc = hd, hd
  xs = []
  for t in range(S):
    dh, dc = cell(x[:, t], dh, dc, dec_wih, dec_whh, dec_b)
    xs.append(dh @ out_w + out_b)
  x_hat = jnp.stack(xs, axis=1)
  return x_hat, mean[None], log_var[None], z[None], (h[None], c[None])


if __name__ == "__main__":
  B, S = 4, 6
  key = jax.random.PRNGKey(0)
  k_x, k_noise, k_p = jax.random.split(key, 3)

  x = jax.random.normal(k_x, (B, S, INPUT_SIZE), jnp.float32)
  # init_hidden(batch_size): zeros
  hidden_encoder = (jnp.zeros((1, B, HIDDEN_SIZE), jnp.float32),
                    jnp.zeros((1, B, HIDDEN_SIZE), jnp.float32))
  # torch.randn(batch, latent) equivalent, generated deterministically in JAX
  noise = jax.random.normal(k_noise, (B, LATENT_SIZE), jnp.float32)
  params = init_params(k_p)

  out = jax.block_until_ready(lstm_vae_forward(x, hidden_encoder, noise, params))
  x_hat, mean, log_var, z, (h_n, c_n) = out

  # correctness check vs pure-JAX reference
  ref = _reference_forward(x, hidden_encoder, noise, params)
  np.testing.assert_allclose(np.asarray(x_hat), np.asarray(ref[0]), rtol=1e-4, atol=1e-4)
  np.testing.assert_allclose(np.asarray(mean), np.asarray(ref[1]), rtol=1e-4, atol=1e-4)
  np.testing.assert_allclose(np.asarray(log_var), np.asarray(ref[2]), rtol=1e-4, atol=1e-4)
  np.testing.assert_allclose(np.asarray(z), np.asarray(ref[3]), rtol=1e-4, atol=1e-4)
  np.testing.assert_allclose(np.asarray(h_n), np.asarray(ref[4][0]), rtol=1e-4, atol=1e-4)
  np.testing.assert_allclose(np.asarray(c_n), np.asarray(ref[4][1]), rtol=1e-4, atol=1e-4)

  assert x_hat.shape == (B, S, INPUT_SIZE)
  assert mean.shape == (1, B, LATENT_SIZE) and log_var.shape == (1, B, LATENT_SIZE)
  assert z.shape == (1, B, LATENT_SIZE)
  assert h_n.shape == (1, B, HIDDEN_SIZE) and c_n.shape == (1, B, HIDDEN_SIZE)
  print("KERNEL_OK")
</pallas_src>

<mosaic_0001>
module attributes {stable_mosaic.version = 11 : i64} {
  func.func @lstm_vae_kernel(%arg0: memref<48x26xf32, #tpu.memory_space<vmem>>, %arg1: memref<8x384xf32, #tpu.memory_space<vmem>>, %arg2: memref<26x1024xf32, #tpu.memory_space<vmem>>, %arg3: memref<20x1305xf32, #tpu.memory_space<vmem>>, %arg4: memref<16x256xf32, #tpu.memory_space<vmem>>, %arg5: memref<48x25xf32, #tpu.memory_space<vmem>>, %arg6: memref<8x128xf32, #tpu.memory_space<any>>, %arg7: memref<48x1024xf32, #tpu.memory_space<vmem>>, %arg8: memref<48x128xf32, #tpu.memory_space<vmem>>, %arg9: memref<8x128xf32, #tpu.memory_space<vmem>>, %arg10: memref<!tpu.dma_semaphore, #tpu.memory_space<semaphore_mem>>) attributes {dimension_semantics = [], scalar_prefetch = 0 : i64, scratch_operands = 4 : i64, tpu.core_type = #tpu.core_type<tc>} {
    %c0 = arith.constant 0 : index
    %c0_0 = arith.constant 0 : index
    %0 = vector.load %arg0[%c0, %c0_0] : memref<48x26xf32, #tpu.memory_space<vmem>>, vector<48x26xf32>
    %c0_1 = arith.constant 0 : index
    %c0_2 = arith.constant 0 : index
    %1 = vector.load %arg2[%c0_1, %c0_2] : memref<26x1024xf32, #tpu.memory_space<vmem>>, vector<26x1024xf32>
    %cst = arith.constant dense<0.000000e+00> : vector<48x1024xf32>
    %2 = tpu.matmul %0, %1, %cst {dimension_numbers = #tpu.dot_dimension_numbers<[1], [0], [0], [1], [0, 0, 1, 1], [], []>} : vector<48x26xf32>, vector<26x1024xf32>, vector<48x1024xf32> -> vector<48x1024xf32>
    %c0_3 = arith.constant 0 : index
    %c0_4 = arith.constant 0 : index
    %3 = vector.load %arg7[%c0_3, %c0_4] : memref<48x1024xf32, #tpu.memory_space<vmem>>, vector<48x1024xf32>
    tpu.vector_store %arg7[%c0_3, %c0_4], %2 {strides = array<i32>} : memref<48x1024xf32, #tpu.memory_space<vmem>>, vector<48x1024xf32>,
    %c0_5 = arith.constant 0 : index
    %c0_6 = arith.constant 0 : index
    %4 = vector.load %arg3[%c0_5, %c0_6] : memref<20x1305xf32, #tpu.memory_space<vmem>>, vector<20x512xf32>
    %c0_7 = arith.constant 0 : index
    %c0_8 = arith.constant 0 : index
    %5 = vector.load %arg1[%c0_7, %c0_8] : memref<8x384xf32, #tpu.memory_space<vmem>>, vector<8x20xf32>
    %c0_9 = arith.constant 0 : index
    %c128 = arith.constant 128 : index
    %6 = vector.load %arg1[%c0_9, %c128] : memref<8x384xf32, #tpu.memory_space<vmem>>, vector<8x20xf32>
    %c0_10 = arith.constant 0 : index
    %c0_11 = arith.constant 0 : index
    %7 = vector.load %arg7[%c0_10, %c0_11] : memref<48x1024xf32, #tpu.memory_space<vmem>>, vector<8x512xf32>
    %cst_12 = arith.constant dense<0.000000e+00> : vector<8x512xf32>
    %8 = tpu.matmul %5, %4, %cst_12 {dimension_numbers = #tpu.dot_dimension_numbers<[1], [0], [0], [1], [0, 0, 1, 1], [], []>} : vector<8x20xf32>, vector<20x512xf32>, vector<8x512xf32> -> vector<8x512xf32>
    %9 = arith.addf %7, %8 : vector<8x512xf32>
    %10 = vector.extract_strided_slice %9 {offsets = [0, 0], sizes = [8, 20], strides = [1, 1]} : vector<8x512xf32> to vector<8x20xf32>
    %11 = arith.negf %10 : vector<8x20xf32>
    %12 = math.exp %11 : vector<8x20xf32>
    %cst_13 = arith.constant 1.000000e+00 : f32
    %13 = vector.broadcast %cst_13 : f32 to vector<8x20xf32>
    %14 = arith.addf %13, %12 : vector<8x20xf32>
    %15 = arith.divf %13, %14 : vector<8x20xf32>
    %16 = vector.extract_strided_slice %9 {offsets = [0, 128], sizes = [8, 20], strides = [1, 1]} : vector<8x512xf32> to vector<8x20xf32>
    %17 = arith.negf %16 : vector<8x20xf32>
    %18 = math.exp %17 : vector<8x20xf32>
    %cst_14 = arith.constant 1.000000e+00 : f32
    %19 = vector.broadcast %cst_14 : f32 to vector<8x20xf32>
    %20 = arith.addf %19, %18 : vector<8x20xf32>
    %21 = arith.divf %19, %20 : vector<8x20xf32>
    %22 = vector.extract_strided_slice %9 {offsets = [0, 256], sizes = [8, 20], strides = [1, 1]} : vector<8x512xf32> to vector<8x20xf32>
    %23 = math.tanh %22 : vector<8x20xf32>
    %24 = vector.extract_strided_slice %9 {offsets = [0, 384], sizes = [8, 20], strides = [1, 1]} : vector<8x512xf32> to vector<8x20xf32>
    %25 = arith.negf %24 : vector<8x20xf32>
    %26 = math.exp %25 : vector<8x20xf32>
    %cst_15 = arith.constant 1.000000e+00 : f32
    %27 = vector.broadcast %cst_15 : f32 to vector<8x20xf32>
    %28 = arith.addf %27, %26 : vector<8x20xf32>
    %29 = arith.divf %27, %28 : vector<8x20xf32>
    %30 = arith.mulf %21, %6 : vector<8x20xf32>
    %31 = arith.mulf %15, %23 : vector<8x20xf32>
    %32 = arith.addf %30, %31 : vector<8x20xf32>
    %33 = math.tanh %32 : vector<8x20xf32>
    %34 = arith.mulf %29, %33 : vector<8x20xf32>
    %c8 = arith.constant 8 : index
    %c0_16 = arith.constant 0 : index
    %35 = vector.load %arg7[%c8, %c0_16] : memref<48x1024xf32, #tpu.memory_space<vmem>>, vector<8x512xf32>
    %cst_17 = arith.constant dense<0.000000e+00> : vector<8x512xf32>
    %36 = tpu.matmul %34, %4, %cst_17 {dimension_numbers = #tpu.dot_dimension_numbers<[1], [0], [0], [1], [0, 0, 1, 1], [], []>} : vector<8x20xf32>, vector<20x512xf32>, vector<8x512xf32> -> vector<8x512xf32>
    %37 = arith.addf %35, %36 : vector<8x512xf32>
    %38 = vector.extract_strided_slice %37 {offsets = [0, 0], sizes = [8, 20], strides = [1, 1]} : vector<8x512xf32> to vector<8x20xf32>
    %39 = arith.negf %38 : vector<8x20xf32>
    %40 = math.exp %39 : vector<8x20xf32>
    %cst_18 = arith.constant 1.000000e+00 : f32
    %41 = vector.broadcast %cst_18 : f32 to vector<8x20xf32>
    %42 = arith.addf %41, %40 : vector<8x20xf32>
    %43 = arith.divf %41, %42 : vector<8x20xf32>
    %44 = vector.extract_strided_slice %37 {offsets = [0, 128], sizes = [8, 20], strides = [1, 1]} : vector<8x512xf32> to vector<8x20xf32>
    %45 = arith.negf %44 : vector<8x20xf32>
    %46 = math.exp %45 : vector<8x20xf32>
    %cst_19 = arith.constant 1.000000e+00 : f32
    %47 = vector.broadcast %cst_19 : f32 to vector<8x20xf32>
    %48 = arith.addf %47, %46 : vector<8x20xf32>
    %49 = arith.divf %47, %48 : vector<8x20xf32>
    %50 = vector.extract_strided_slice %37 {offsets = [0, 256], sizes = [8, 20], strides = [1, 1]} : vector<8x512xf32> to vector<8x20xf32>
    %51 = math.tanh %50 : vector<8x20xf32>
    %52 = vector.extract_strided_slice %37 {offsets = [0, 384], sizes = [8, 20], strides = [1, 1]} : vector<8x512xf32> to vector<8x20xf32>
    %53 = arith.negf %52 : vector<8x20xf32>
    %54 = math.exp %53 : vector<8x20xf32>
    %cst_20 = arith.constant 1.000000e+00 : f32
    %55 = vector.broadcast %cst_20 : f32 to vector<8x20xf32>
    %56 = arith.addf %55, %54 : vector<8x20xf32>
    %57 = arith.divf %55, %56 : vector<8x20xf32>
    %58 = arith.mulf %49, %32 : vector<8x20xf32>
    %59 = arith.mulf %43, %51 : vector<8x20xf32>
    %60 = arith.addf %58, %59 : vector<8x20xf32>
    %61 = math.tanh %60 : vector<8x20xf32>
    %62 = arith.mulf %57, %61 : vector<8x20xf32>
    %c16 = arith.constant 16 : index
    %c0_21 = arith.constant 0 : index
    %63 = vector.load %arg7[%c16, %c0_21] : memref<48x1024xf32, #tpu.memory_space<vmem>>, vector<8x512xf32>
    %cst_22 = arith.constant dense<0.000000e+00> : vector<8x512xf32>
    %64 = tpu.matmul %62, %4, %cst_22 {dimension_numbers = #tpu.dot_dimension_numbers<[1], [0], [0], [1], [0, 0, 1, 1], [], []>} : vector<8x20xf32>, vector<20x512xf32>, vector<8x512xf32> -> vector<8x512xf32>
    %65 = arith.addf %63, %64 : vector<8x512xf32>
    %66 = vector.extract_strided_slice %65 {offsets = [0, 0], sizes = [8, 20], strides = [1, 1]} : vector<8x512xf32> to vector<8x20xf32>
    %67 = arith.negf %66 : vector<8x20xf32>
    %68 = math.exp %67 : vector<8x20xf32>
    %cst_23 = arith.constant 1.000000e+00 : f32
    %69 = vector.broadcast %cst_23 : f32 to vector<8x20xf32>
    %70 = arith.addf %69, %68 : vector<8x20xf32>
    %71 = arith.divf %69, %70 : vector<8x20xf32>
    %72 = vector.extract_strided_slice %65 {offsets = [0, 128], sizes = [8, 20], strides = [1, 1]} : vector<8x512xf32> to vector<8x20xf32>
    %73 = arith.negf %72 : vector<8x20xf32>
    %74 = math.exp %73 : vector<8x20xf32>
    %cst_24 = arith.constant 1.000000e+00 : f32
    %75 = vector.broadcast %cst_24 : f32 to vector<8x20xf32>
    %76 = arith.addf %75, %74 : vector<8x20xf32>
    %77 = arith.divf %75, %76 : vector<8x20xf32>
    %78 = vector.extract_strided_slice %65 {offsets = [0, 256], sizes = [8, 20], strides = [1, 1]} : vector<8x512xf32> to vector<8x20xf32>
    %79 = math.tanh %78 : vector<8x20xf32>
    %80 = vector.extract_strided_slice %65 {offsets = [0, 384], sizes = [8, 20], strides = [1, 1]} : vector<8x512xf32> to vector<8x20xf32>
    %81 = arith.negf %80 : vector<8x20xf32>
    %82 = math.exp %81 : vector<8x20xf32>
    %cst_25 = arith.constant 1.000000e+00 : f32
    %83 = vector.broadcast %cst_25 : f32 to vector<8x20xf32>
    %84 = arith.addf %83, %82 : vector<8x20xf32>
    %85 = arith.divf %83, %84 : vector<8x20xf32>
    %86 = arith.mulf %77, %60 : vector<8x20xf32>
    %87 = arith.mulf %71, %79 : vector<8x20xf32>
    %88 = arith.addf %86, %87 : vector<8x20xf32>
    %89 = math.tanh %88 : vector<8x20xf32>
    %90 = arith.mulf %85, %89 : vector<8x20xf32>
    %c24 = arith.constant 24 : index
    %c0_26 = arith.constant 0 : index
    %91 = vector.load %arg7[%c24, %c0_26] : memref<48x1024xf32, #tpu.memory_space<vmem>>, vector<8x512xf32>
    %cst_27 = arith.constant dense<0.000000e+00> : vector<8x512xf32>
    %92 = tpu.matmul %90, %4, %cst_27 {dimension_numbers = #tpu.dot_dimension_numbers<[1], [0], [0], [1], [0, 0, 1, 1], [], []>} : vector<8x20xf32>, vector<20x512xf32>, vector<8x512xf32> -> vector<8x512xf32>
    %93 = arith.addf %91, %92 : vector<8x512xf32>
    %94 = vector.extract_strided_slice %93 {offsets = [0, 0], sizes = [8, 20], strides = [1, 1]} : vector<8x512xf32> to vector<8x20xf32>
    %95 = arith.negf %94 : vector<8x20xf32>
    %96 = math.exp %95 : vector<8x20xf32>
    %cst_28 = arith.constant 1.000000e+00 : f32
    %97 = vector.broadcast %cst_28 : f32 to vector<8x20xf32>
    %98 = arith.addf %97, %96 : vector<8x20xf32>
    %99 = arith.divf %97, %98 : vector<8x20xf32>
    %100 = vector.extract_strided_slice %93 {offsets = [0, 128], sizes = [8, 20], strides = [1, 1]} : vector<8x512xf32> to vector<8x20xf32>
    %101 = arith.negf %100 : vector<8x20xf32>
    %102 = math.exp %101 : vector<8x20xf32>
    %cst_29 = arith.constant 1.000000e+00 : f32
    %103 = vector.broadcast %cst_29 : f32 to vector<8x20xf32>
    %104 = arith.addf %103, %102 : vector<8x20xf32>
    %105 = arith.divf %103, %104 : vector<8x20xf32>
    %106 = vector.extract_strided_slice %93 {offsets = [0, 256], sizes = [8, 20], strides = [1, 1]} : vector<8x512xf32> to vector<8x20xf32>
    %107 = math.tanh %106 : vector<8x20xf32>
    %108 = vector.extract_strided_slice %93 {offsets = [0, 384], sizes = [8, 20], strides = [1, 1]} : vector<8x512xf32> to vector<8x20xf32>
    %109 = arith.negf %108 : vector<8x20xf32>
    %110 = math.exp %109 : vector<8x20xf32>
    %cst_30 = arith.constant 1.000000e+00 : f32
    %111 = vector.broadcast %cst_30 : f32 to vector<8x20xf32>
    %112 = arith.addf %111, %110 : vector<8x20xf32>
    %113 = arith.divf %111, %112 : vector<8x20xf32>
    %114 = arith.mulf %105, %88 : vector<8x20xf32>
    %115 = arith.mulf %99, %107 : vector<8x20xf32>
    %116 = arith.addf %114, %115 : vector<8x20xf32>
    %117 = math.tanh %116 : vector<8x20xf32>
    %118 = arith.mulf %113, %117 : vector<8x20xf32>
    %c32 = arith.constant 32 : index
    %c0_31 = arith.constant 0 : index
    %119 = vector.load %arg7[%c32, %c0_31] : memref<48x1024xf32, #tpu.memory_space<vmem>>, vector<8x512xf32>
    %cst_32 = arith.constant dense<0.000000e+00> : vector<8x512xf32>
    %120 = tpu.matmul %118, %4, %cst_32 {dimension_numbers = #tpu.dot_dimension_numbers<[1], [0], [0], [1], [0, 0, 1, 1], [], []>} : vector<8x20xf32>, vector<20x512xf32>, vector<8x512xf32> -> vector<8x512xf32>
    %121 = arith.addf %119, %120 : vector<8x512xf32>
    %122 = vector.extract_strided_slice %121 {offsets = [0, 0], sizes = [8, 20], strides = [1, 1]} : vector<8x512xf32> to vector<8x20xf32>
    %123 = arith.negf %122 : vector<8x20xf32>
    %124 = math.exp %123 : vector<8x20xf32>
    %cst_33 = arith.constant 1.000000e+00 : f32
    %125 = vector.broadcast %cst_33 : f32 to vector<8x20xf32>
    %126 = arith.addf %125, %124 : vector<8x20xf32>
    %127 = arith.divf %125, %126 : vector<8x20xf32>
    %128 = vector.extract_strided_slice %121 {offsets = [0, 128], sizes = [8, 20], strides = [1, 1]} : vector<8x512xf32> to vector<8x20xf32>
    %129 = arith.negf %128 : vector<8x20xf32>
    %130 = math.exp %129 : vector<8x20xf32>
    %cst_34 = arith.constant 1.000000e+00 : f32
    %131 = vector.broadcast %cst_34 : f32 to vector<8x20xf32>
    %132 = arith.addf %131, %130 : vector<8x20xf32>
    %133 = arith.divf %131, %132 : vector<8x20xf32>
    %134 = vector.extract_strided_slice %121 {offsets = [0, 256], sizes = [8, 20], strides = [1, 1]} : vector<8x512xf32> to vector<8x20xf32>
    %135 = math.tanh %134 : vector<8x20xf32>
    %136 = vector.extract_strided_slice %121 {offsets = [0, 384], sizes = [8, 20], strides = [1, 1]} : vector<8x512xf32> to vector<8x20xf32>
    %137 = arith.negf %136 : vector<8x20xf32>
    %138 = math.exp %137 : vector<8x20xf32>
    %cst_35 = arith.constant 1.000000e+00 : f32
    %139 = vector.broadcast %cst_35 : f32 to vector<8x20xf32>
    %140 = arith.addf %139, %138 : vector<8x20xf32>
    %141 = arith.divf %139, %140 : vector<8x20xf32>
    %142 = arith.mulf %133, %116 : vector<8x20xf32>
    %143 = arith.mulf %127, %135 : vector<8x20xf32>
    %144 = arith.addf %142, %143 : vector<8x20xf32>
    %145 = math.tanh %144 : vector<8x20xf32>
    %146 = arith.mulf %141, %145 : vector<8x20xf32>
    %c40 = arith.constant 40 : index
    %c0_36 = arith.constant 0 : index
    %147 = vector.load %arg7[%c40, %c0_36] : memref<48x1024xf32, #tpu.memory_space<vmem>>, vector<8x512xf32>
    %cst_37 = arith.constant dense<0.000000e+00> : vector<8x512xf32>
    %148 = tpu.matmul %146, %4, %cst_37 {dimension_numbers = #tpu.dot_dimension_numbers<[1], [0], [0], [1], [0, 0, 1, 1], [], []>} : vector<8x20xf32>, vector<20x512xf32>, vector<8x512xf32> -> vector<8x512xf32>
    %149 = arith.addf %147, %148 : vector<8x512xf32>
    %150 = vector.extract_strided_slice %149 {offsets = [0, 0], sizes = [8, 20], strides = [1, 1]} : vector<8x512xf32> to vector<8x20xf32>
    %151 = arith.negf %150 : vector<8x20xf32>
    %152 = math.exp %151 : vector<8x20xf32>
    %cst_38 = arith.constant 1.000000e+00 : f32
    %153 = vector.broadcast %cst_38 : f32 to vector<8x20xf32>
    %154 = arith.addf %153, %152 : vector<8x20xf32>
    %155 = arith.divf %153, %154 : vector<8x20xf32>
    %156 = vector.extract_strided_slice %149 {offsets = [0, 128], sizes = [8, 20], strides = [1, 1]} : vector<8x512xf32> to vector<8x20xf32>
    %157 = arith.negf %156 : vector<8x20xf32>
    %158 = math.exp %157 : vector<8x20xf32>
    %cst_39 = arith.constant 1.000000e+00 : f32
    %159 = vector.broadcast %cst_39 : f32 to vector<8x20xf32>
    %160 = arith.addf %159, %158 : vector<8x20xf32>
    %161 = arith.divf %159, %160 : vector<8x20xf32>
    %162 = vector.extract_strided_slice %149 {offsets = [0, 256], sizes = [8, 20], strides = [1, 1]} : vector<8x512xf32> to vector<8x20xf32>
    %163 = math.tanh %162 : vector<8x20xf32>
    %164 = vector.extract_strided_slice %149 {offsets = [0, 384], sizes = [8, 20], strides = [1, 1]} : vector<8x512xf32> to vector<8x20xf32>
    %165 = arith.negf %164 : vector<8x20xf32>
    %166 = math.exp %165 : vector<8x20xf32>
    %cst_40 = arith.constant 1.000000e+00 : f32
    %167 = vector.broadcast %cst_40 : f32 to vector<8x20xf32>
    %168 = arith.addf %167, %166 : vector<8x20xf32>
    %169 = arith.divf %167, %168 : vector<8x20xf32>
    %170 = arith.mulf %161, %144 : vector<8x20xf32>
    %171 = arith.mulf %155, %163 : vector<8x20xf32>
    %172 = arith.addf %170, %171 : vector<8x20xf32>
    %173 = math.tanh %172 : vector<8x20xf32>
    %174 = arith.mulf %169, %173 : vector<8x20xf32>
    %c0_41 = arith.constant 0 : index
    %c1024 = arith.constant 1024 : index
    %175 = vector.load %arg3[%c0_41, %c1024] : memref<20x1305xf32, #tpu.memory_space<vmem>>, vector<20x256xf32>
    %cst_42 = arith.constant dense<0.000000e+00> : vector<8x256xf32>
    %176 = tpu.matmul %174, %175, %cst_42 {dimension_numbers = #tpu.dot_dimension_numbers<[1], [0], [0], [1], [0, 0, 1, 1], [], []>} : vector<8x20xf32>, vector<20x256xf32>, vector<8x256xf32> -> vector<8x256xf32>
    %c11 = arith.constant 11 : index
    %c0_43 = arith.constant 0 : index
    %177 = vector.load %arg4[%c11, %c0_43] : memref<16x256xf32, #tpu.memory_space<vmem>>, vector<1x256xf32>
    %178 = vector.broadcast %177 : vector<1x256xf32> to vector<8x256xf32>
    %179 = arith.addf %176, %178 : vector<8x256xf32>
    %180 = vector.extract_strided_slice %179 {offsets = [0, 0], sizes = [8, 10], strides = [1, 1]} : vector<8x256xf32> to vector<8x10xf32>
    %181 = vector.extract_strided_slice %179 {offsets = [0, 128], sizes = [8, 10], strides = [1, 1]} : vector<8x256xf32> to vector<8x10xf32>
    %cst_44 = arith.constant 5.000000e-01 : f32
    %182 = vector.broadcast %cst_44 : f32 to vector<8x10xf32>
    %183 = arith.mulf %182, %181 : vector<8x10xf32>
    %184 = math.exp %183 : vector<8x10xf32>
    %c0_45 = arith.constant 0 : index
    %c256 = arith.constant 256 : index
    %185 = vector.load %arg1[%c0_45, %c256] : memref<8x384xf32, #tpu.memory_space<vmem>>, vector<8x10xf32>
    %186 = arith.mulf %185, %184 : vector<8x10xf32>
    %187 = arith.addf %186, %180 : vector<8x10xf32>
    %cst_46 = arith.constant 0.000000e+00 : f32
    %188 = vector.broadcast %cst_46 : f32 to vector<8x58xf32>
    %189 = tpu.concatenate %180, %181, %187, %174, %172, %188 in 1 : vector<8x10xf32>, vector<8x10xf32>, vector<8x10xf32>, vector<8x20xf32>, vector<8x20xf32>, vector<8x58xf32> -> vector<8x128xf32>
    %c0_47 = arith.constant 0 : index
    %c0_48 = arith.constant 0 : index
    %190 = vector.load %arg9[%c0_47, %c0_48] : memref<8x128xf32, #tpu.memory_space<vmem>>, vector<8x128xf32>
    tpu.vector_store %arg9[%c0_47, %c0_48], %189 {strides = array<i32>} : memref<8x128xf32, #tpu.memory_space<vmem>>, vector<8x128xf32>,
    tpu.enqueue_dma source(%arg9 : memref<8x128xf32, #tpu.memory_space<vmem>>) target(%arg6 : memref<8x128xf32, #tpu.memory_space<any>>) target_semaphore(%arg10 : memref<!tpu.dma_semaphore, #tpu.memory_space<semaphore_mem>>)
    %c0_49 = arith.constant 0 : index
    %c0_50 = arith.constant 0 : index
    %191 = vector.load %arg4[%c0_49, %c0_50] : memref<16x256xf32, #tpu.memory_space<vmem>>, vector<10x20xf32>
    %cst_51 = arith.constant dense<0.000000e+00> : vector<8x20xf32>
    %192 = tpu.matmul %187, %191, %cst_51 {dimension_numbers = #tpu.dot_dimension_numbers<[1], [0], [0], [1], [0, 0, 1, 1], [], []>} : vector<8x10xf32>, vector<10x20xf32>, vector<8x20xf32> -> vector<8x20xf32>
    %c10 = arith.constant 10 : index
    %c0_52 = arith.constant 0 : index
    %193 = vector.load %arg4[%c10, %c0_52] : memref<16x256xf32, #tpu.memory_space<vmem>>, vector<1x20xf32>
    %194 = vector.broadcast %193 : vector<1x20xf32> to vector<8x20xf32>
    %195 = arith.addf %192, %194 : vector<8x20xf32>
    %c0_53 = arith.constant 0 : index
    %c512 = arith.constant 512 : index
    %196 = vector.load %arg3[%c0_53, %c512] : memref<20x1305xf32, #tpu.memory_space<vmem>>, vector<20x512xf32>
    %c0_54 = arith.constant 0 : index
    %c512_55 = arith.constant 512 : index
    %197 = vector.load %arg7[%c0_54, %c512_55] : memref<48x1024xf32, #tpu.memory_space<vmem>>, vector<8x512xf32>
    %cst_56 = arith.constant dense<0.000000e+00> : vector<8x512xf32>
    %198 = tpu.matmul %195, %196, %cst_56 {dimension_numbers = #tpu.dot_dimension_numbers<[1], [0], [0], [1], [0, 0, 1, 1], [], []>} : vector<8x20xf32>, vector<20x512xf32>, vector<8x512xf32> -> vector<8x512xf32>
    %199 = arith.addf %197, %198 : vector<8x512xf32>
    %200 = vector.extract_strided_slice %199 {offsets = [0, 0], sizes = [8, 20], strides = [1, 1]} : vector<8x512xf32> to vector<8x20xf32>
    %201 = arith.negf %200 : vector<8x20xf32>
    %202 = math.exp %201 : vector<8x20xf32>
    %cst_57 = arith.constant 1.000000e+00 : f32
    %203 = vector.broadcast %cst_57 : f32 to vector<8x20xf32>
    %204 = arith.addf %203, %202 : vector<8x20xf32>
    %205 = arith.divf %203, %204 : vector<8x20xf32>
    %206 = vector.extract_strided_slice %199 {offsets = [0, 128], sizes = [8, 20], strides = [1, 1]} : vector<8x512xf32> to vector<8x20xf32>
    %207 = arith.negf %206 : vector<8x20xf32>
    %208 = math.exp %207 : vector<8x20xf32>
    %cst_58 = arith.constant 1.000000e+00 : f32
    %209 = vector.broadcast %cst_58 : f32 to vector<8x20xf32>
    %210 = arith.addf %209, %208 : vector<8x20xf32>
    %211 = arith.divf %209, %210 : vector<8x20xf32>
    %212 = vector.extract_strided_slice %199 {offsets = [0, 256], sizes = [8, 20], strides = [1, 1]} : vector<8x512xf32> to vector<8x20xf32>
    %213 = math.tanh %212 : vector<8x20xf32>
    %214 = vector.extract_strided_slice %199 {offsets = [0, 384], sizes = [8, 20], strides = [1, 1]} : vector<8x512xf32> to vector<8x20xf32>
    %215 = arith.negf %214 : vector<8x20xf32>
    %216 = math.exp %215 : vector<8x20xf32>
    %cst_59 = arith.constant 1.000000e+00 : f32
    %217 = vector.broadcast %cst_59 : f32 to vector<8x20xf32>
    %218 = arith.addf %217, %216 : vector<8x20xf32>
    %219 = arith.divf %217, %218 : vector<8x20xf32>
    %220 = arith.mulf %211, %195 : vector<8x20xf32>
    %221 = arith.mulf %205, %213 : vector<8x20xf32>
    %222 = arith.addf %220, %221 : vector<8x20xf32>
    %223 = math.tanh %222 : vector<8x20xf32>
    %224 = arith.mulf %219, %223 : vector<8x20xf32>
    %c0_60 = arith.constant 0 : index
    %c0_61 = arith.constant 0 : index
    %225 = vector.load %arg8[%c0_60, %c0_61] : memref<48x128xf32, #tpu.memory_space<vmem>>, vector<8x20xf32>
    tpu.vector_store %arg8[%c0_60, %c0_61], %224 {strides = array<i32>} : memref<48x128xf32, #tpu.memory_space<vmem>>, vector<8x20xf32>,
    %c8_62 = arith.constant 8 : index
    %c512_63 = arith.constant 512 : index
    %226 = vector.load %arg7[%c8_62, %c512_63] : memref<48x1024xf32, #tpu.memory_space<vmem>>, vector<8x512xf32>
    %cst_64 = arith.constant dense<0.000000e+00> : vector<8x512xf32>
    %227 = tpu.matmul %224, %196, %cst_64 {dimension_numbers = #tpu.dot_dimension_numbers<[1], [0], [0], [1], [0, 0, 1, 1], [], []>} : vector<8x20xf32>, vector<20x512xf32>, vector<8x512xf32> -> vector<8x512xf32>
    %228 = arith.addf %226, %227 : vector<8x512xf32>
    %229 = vector.extract_strided_slice %228 {offsets = [0, 0], sizes = [8, 20], strides = [1, 1]} : vector<8x512xf32> to vector<8x20xf32>
    %230 = arith.negf %229 : vector<8x20xf32>
    %231 = math.exp %230 : vector<8x20xf32>
    %cst_65 = arith.constant 1.000000e+00 : f32
    %232 = vector.broadcast %cst_65 : f32 to vector<8x20xf32>
    %233 = arith.addf %232, %231 : vector<8x20xf32>
    %234 = arith.divf %232, %233 : vector<8x20xf32>
    %235 = vector.extract_strided_slice %228 {offsets = [0, 128], sizes = [8, 20], strides = [1, 1]} : vector<8x512xf32> to vector<8x20xf32>
    %236 = arith.negf %235 : vector<8x20xf32>
    %237 = math.exp %236 : vector<8x20xf32>
    %cst_66 = arith.constant 1.000000e+00 : f32
    %238 = vector.broadcast %cst_66 : f32 to vector<8x20xf32>
    %239 = arith.addf %238, %237 : vector<8x20xf32>
    %240 = arith.divf %238, %239 : vector<8x20xf32>
    %241 = vector.extract_strided_slice %228 {offsets = [0, 256], sizes = [8, 20], strides = [1, 1]} : vector<8x512xf32> to vector<8x20xf32>
    %242 = math.tanh %241 : vector<8x20xf32>
    %243 = vector.extract_strided_slice %228 {offsets = [0, 384], sizes = [8, 20], strides = [1, 1]} : vector<8x512xf32> to vector<8x20xf32>
    %244 = arith.negf %243 : vector<8x20xf32>
    %245 = math.exp %244 : vector<8x20xf32>
    %cst_67 = arith.constant 1.000000e+00 : f32
    %246 = vector.broadcast %cst_67 : f32 to vector<8x20xf32>
    %247 = arith.addf %246, %245 : vector<8x20xf32>
    %248 = arith.divf %246, %247 : vector<8x20xf32>
    %249 = arith.mulf %240, %222 : vector<8x20xf32>
    %250 = arith.mulf %234, %242 : vector<8x20xf32>
    %251 = arith.addf %249, %250 : vector<8x20xf32>
    %252 = math.tanh %251 : vector<8x20xf32>
    %253 = arith.mulf %248, %252 : vector<8x20xf32>
    %c8_68 = arith.constant 8 : index
    %c0_69 = arith.constant 0 : index
    %254 = vector.load %arg8[%c8_68, %c0_69] : memref<48x128xf32, #tpu.memory_space<vmem>>, vector<8x20xf32>
    tpu.vector_store %arg8[%c8_68, %c0_69], %253 {strides = array<i32>} : memref<48x128xf32, #tpu.memory_space<vmem>>, vector<8x20xf32>,
    %c16_70 = arith.constant 16 : index
    %c512_71 = arith.constant 512 : index
    %255 = vector.load %arg7[%c16_70, %c512_71] : memref<48x1024xf32, #tpu.memory_space<vmem>>, vector<8x512xf32>
    %cst_72 = arith.constant dense<0.000000e+00> : vector<8x512xf32>
    %256 = tpu.matmul %253, %196, %cst_72 {dimension_numbers = #tpu.dot_dimension_numbers<[1], [0], [0], [1], [0, 0, 1, 1], [], []>} : vector<8x20xf32>, vector<20x512xf32>, vector<8x512xf32> -> vector<8x512xf32>
    %257 = arith.addf %255, %256 : vector<8x512xf32>
    %258 = vector.extract_strided_slice %257 {offsets = [0, 0], sizes = [8, 20], strides = [1, 1]} : vector<8x512xf32> to vector<8x20xf32>
    %259 = arith.negf %258 : vector<8x20xf32>
    %260 = math.exp %259 : vector<8x20xf32>
    %cst_73 = arith.constant 1.000000e+00 : f32
    %261 = vector.broadcast %cst_73 : f32 to vector<8x20xf32>
    %262 = arith.addf %261, %260 : vector<8x20xf32>
    %263 = arith.divf %261, %262 : vector<8x20xf32>
    %264 = vector.extract_strided_slice %257 {offsets = [0, 128], sizes = [8, 20], strides = [1, 1]} : vector<8x512xf32> to vector<8x20xf32>
    %265 = arith.negf %264 : vector<8x20xf32>
    %266 = math.exp %265 : vector<8x20xf32>
    %cst_74 = arith.constant 1.000000e+00 : f32
    %267 = vector.broadcast %cst_74 : f32 to vector<8x20xf32>
    %268 = arith.addf %267, %266 : vector<8x20xf32>
    %269 = arith.divf %267, %268 : vector<8x20xf32>
    %270 = vector.extract_strided_slice %257 {offsets = [0, 256], sizes = [8, 20], strides = [1, 1]} : vector<8x512xf32> to vector<8x20xf32>
    %271 = math.tanh %270 : vector<8x20xf32>
    %272 = vector.extract_strided_slice %257 {offsets = [0, 384], sizes = [8, 20], strides = [1, 1]} : vector<8x512xf32> to vector<8x20xf32>
    %273 = arith.negf %272 : vector<8x20xf32>
    %274 = math.exp %273 : vector<8x20xf32>
    %cst_75 = arith.constant 1.000000e+00 : f32
    %275 = vector.broadcast %cst_75 : f32 to vector<8x20xf32>
    %276 = arith.addf %275, %274 : vector<8x20xf32>
    %277 = arith.divf %275, %276 : vector<8x20xf32>
    %278 = arith.mulf %269, %251 : vector<8x20xf32>
    %279 = arith.mulf %263, %271 : vector<8x20xf32>
    %280 = arith.addf %278, %279 : vector<8x20xf32>
    %281 = math.tanh %280 : vector<8x20xf32>
    %282 = arith.mulf %277, %281 : vector<8x20xf32>
    %c16_76 = arith.constant 16 : index
    %c0_77 = arith.constant 0 : index
    %283 = vector.load %arg8[%c16_76, %c0_77] : memref<48x128xf32, #tpu.memory_space<vmem>>, vector<8x20xf32>
    tpu.vector_store %arg8[%c16_76, %c0_77], %282 {strides = array<i32>} : memref<48x128xf32, #tpu.memory_space<vmem>>, vector<8x20xf32>,
    %c24_78 = arith.constant 24 : index
    %c512_79 = arith.constant 512 : index
    %284 = vector.load %arg7[%c24_78, %c512_79] : memref<48x1024xf32, #tpu.memory_space<vmem>>, vector<8x512xf32>
    %cst_80 = arith.constant dense<0.000000e+00> : vector<8x512xf32>
    %285 = tpu.matmul %282, %196, %cst_80 {dimension_numbers = #tpu.dot_dimension_numbers<[1], [0], [0], [1], [0, 0, 1, 1], [], []>} : vector<8x20xf32>, vector<20x512xf32>, vector<8x512xf32> -> vector<8x512xf32>
    %286 = arith.addf %284, %285 : vector<8x512xf32>
    %287 = vector.extract_strided_slice %286 {offsets = [0, 0], sizes = [8, 20], strides = [1, 1]} : vector<8x512xf32> to vector<8x20xf32>
    %288 = arith.negf %287 : vector<8x20xf32>
    %289 = math.exp %288 : vector<8x20xf32>
    %cst_81 = arith.constant 1.000000e+00 : f32
    %290 = vector.broadcast %cst_81 : f32 to vector<8x20xf32>
    %291 = arith.addf %290, %289 : vector<8x20xf32>
    %292 = arith.divf %290, %291 : vector<8x20xf32>
    %293 = vector.extract_strided_slice %286 {offsets = [0, 128], sizes = [8, 20], strides = [1, 1]} : vector<8x512xf32> to vector<8x20xf32>
    %294 = arith.negf %293 : vector<8x20xf32>
    %295 = math.exp %294 : vector<8x20xf32>
    %cst_82 = arith.constant 1.000000e+00 : f32
    %296 = vector.broadcast %cst_82 : f32 to vector<8x20xf32>
    %297 = arith.addf %296, %295 : vector<8x20xf32>
    %298 = arith.divf %296, %297 : vector<8x20xf32>
    %299 = vector.extract_strided_slice %286 {offsets = [0, 256], sizes = [8, 20], strides = [1, 1]} : vector<8x512xf32> to vector<8x20xf32>
    %300 = math.tanh %299 : vector<8x20xf32>
    %301 = vector.extract_strided_slice %286 {offsets = [0, 384], sizes = [8, 20], strides = [1, 1]} : vector<8x512xf32> to vector<8x20xf32>
    %302 = arith.negf %301 : vector<8x20xf32>
    %303 = math.exp %302 : vector<8x20xf32>
    %cst_83 = arith.constant 1.000000e+00 : f32
    %304 = vector.broadcast %cst_83 : f32 to vector<8x20xf32>
    %305 = arith.addf %304, %303 : vector<8x20xf32>
    %306 = arith.divf %304, %305 : vector<8x20xf32>
    %307 = arith.mulf %298, %280 : vector<8x20xf32>
    %308 = arith.mulf %292, %300 : vector<8x20xf32>
    %309 = arith.addf %307, %308 : vector<8x20xf32>
    %310 = math.tanh %309 : vector<8x20xf32>
    %311 = arith.mulf %306, %310 : vector<8x20xf32>
    %c24_84 = arith.constant 24 : index
    %c0_85 = arith.constant 0 : index
    %312 = vector.load %arg8[%c24_84, %c0_85] : memref<48x128xf32, #tpu.memory_space<vmem>>, vector<8x20xf32>
    tpu.vector_store %arg8[%c24_84, %c0_85], %311 {strides = array<i32>} : memref<48x128xf32, #tpu.memory_space<vmem>>, vector<8x20xf32>,
    %c32_86 = arith.constant 32 : index
    %c512_87 = arith.constant 512 : index
    %313 = vector.load %arg7[%c32_86, %c512_87] : memref<48x1024xf32, #tpu.memory_space<vmem>>, vector<8x512xf32>
    %cst_88 = arith.constant dense<0.000000e+00> : vector<8x512xf32>
    %314 = tpu.matmul %311, %196, %cst_88 {dimension_numbers = #tpu.dot_dimension_numbers<[1], [0], [0], [1], [0, 0, 1, 1], [], []>} : vector<8x20xf32>, vector<20x512xf32>, vector<8x512xf32> -> vector<8x512xf32>
    %315 = arith.addf %313, %314 : vector<8x512xf32>
    %316 = vector.extract_strided_slice %315 {offsets = [0, 0], sizes = [8, 20], strides = [1, 1]} : vector<8x512xf32> to vector<8x20xf32>
    %317 = arith.negf %316 : vector<8x20xf32>
    %318 = math.exp %317 : vector<8x20xf32>
    %cst_89 = arith.constant 1.000000e+00 : f32
    %319 = vector.broadcast %cst_89 : f32 to vector<8x20xf32>
    %320 = arith.addf %319, %318 : vector<8x20xf32>
    %321 = arith.divf %319, %320 : vector<8x20xf32>
    %322 = vector.extract_strided_slice %315 {offsets = [0, 128], sizes = [8, 20], strides = [1, 1]} : vector<8x512xf32> to vector<8x20xf32>
    %323 = arith.negf %322 : vector<8x20xf32>
    %324 = math.exp %323 : vector<8x20xf32>
    %cst_90 = arith.constant 1.000000e+00 : f32
    %325 = vector.broadcast %cst_90 : f32 to vector<8x20xf32>
    %326 = arith.addf %325, %324 : vector<8x20xf32>
    %327 = arith.divf %325, %326 : vector<8x20xf32>
    %328 = vector.extract_strided_slice %315 {offsets = [0, 256], sizes = [8, 20], strides = [1, 1]} : vector<8x512xf32> to vector<8x20xf32>
    %329 = math.tanh %328 : vector<8x20xf32>
    %330 = vector.extract_strided_slice %315 {offsets = [0, 384], sizes = [8, 20], strides = [1, 1]} : vector<8x512xf32> to vector<8x20xf32>
    %331 = arith.negf %330 : vector<8x20xf32>
    %332 = math.exp %331 : vector<8x20xf32>
    %cst_91 = arith.constant 1.000000e+00 : f32
    %333 = vector.broadcast %cst_91 : f32 to vector<8x20xf32>
    %334 = arith.addf %333, %332 : vector<8x20xf32>
    %335 = arith.divf %333, %334 : vector<8x20xf32>
    %336 = arith.mulf %327, %309 : vector<8x20xf32>
    %337 = arith.mulf %321, %329 : vector<8x20xf32>
    %338 = arith.addf %336, %337 : vector<8x20xf32>
    %339 = math.tanh %338 : vector<8x20xf32>
    %340 = arith.mulf %335, %339 : vector<8x20xf32>
    %c32_92 = arith.constant 32 : index
    %c0_93 = arith.constant 0 : index
    %341 = vector.load %arg8[%c32_92, %c0_93] : memref<48x128xf32, #tpu.memory_space<vmem>>, vector<8x20xf32>
    tpu.vector_store %arg8[%c32_92, %c0_93], %340 {strides = array<i32>} : memref<48x128xf32, #tpu.memory_space<vmem>>, vector<8x20xf32>,
    %c40_94 = arith.constant 40 : index
    %c512_95 = arith.constant 512 : index
    %342 = vector.load %arg7[%c40_94, %c512_95] : memref<48x1024xf32, #tpu.memory_space<vmem>>, vector<8x512xf32>
    %cst_96 = arith.constant dense<0.000000e+00> : vector<8x512xf32>
    %343 = tpu.matmul %340, %196, %cst_96 {dimension_numbers = #tpu.dot_dimension_numbers<[1], [0], [0], [1], [0, 0, 1, 1], [], []>} : vector<8x20xf32>, vector<20x512xf32>, vector<8x512xf32> -> vector<8x512xf32>
    %344 = arith.addf %342, %343 : vector<8x512xf32>
    %345 = vector.extract_strided_slice %344 {offsets = [0, 0], sizes = [8, 20], strides = [1, 1]} : vector<8x512xf32> to vector<8x20xf32>
    %346 = arith.negf %345 : vector<8x20xf32>
    %347 = math.exp %346 : vector<8x20xf32>
    %cst_97 = arith.constant 1.000000e+00 : f32
    %348 = vector.broadcast %cst_97 : f32 to vector<8x20xf32>
    %349 = arith.addf %348, %347 : vector<8x20xf32>
    %350 = arith.divf %348, %349 : vector<8x20xf32>
    %351 = vector.extract_strided_slice %344 {offsets = [0, 128], sizes = [8, 20], strides = [1, 1]} : vector<8x512xf32> to vector<8x20xf32>
    %352 = arith.negf %351 : vector<8x20xf32>
    %353 = math.exp %352 : vector<8x20xf32>
    %cst_98 = arith.constant 1.000000e+00 : f32
    %354 = vector.broadcast %cst_98 : f32 to vector<8x20xf32>
    %355 = arith.addf %354, %353 : vector<8x20xf32>
    %356 = arith.divf %354, %355 : vector<8x20xf32>
    %357 = vector.extract_strided_slice %344 {offsets = [0, 256], sizes = [8, 20], strides = [1, 1]} : vector<8x512xf32> to vector<8x20xf32>
    %358 = math.tanh %357 : vector<8x20xf32>
    %359 = vector.extract_strided_slice %344 {offsets = [0, 384], sizes = [8, 20], strides = [1, 1]} : vector<8x512xf32> to vector<8x20xf32>
    %360 = arith.negf %359 : vector<8x20xf32>
    %361 = math.exp %360 : vector<8x20xf32>
    %cst_99 = arith.constant 1.000000e+00 : f32
    %362 = vector.broadcast %cst_99 : f32 to vector<8x20xf32>
    %363 = arith.addf %362, %361 : vector<8x20xf32>
    %364 = arith.divf %362, %363 : vector<8x20xf32>
    %365 = arith.mulf %356, %338 : vector<8x20xf32>
    %366 = arith.mulf %350, %358 : vector<8x20xf32>
    %367 = arith.addf %365, %366 : vector<8x20xf32>
    %368 = math.tanh %367 : vector<8x20xf32>
    %369 = arith.mulf %364, %368 : vector<8x20xf32>
    %c40_100 = arith.constant 40 : index
    %c0_101 = arith.constant 0 : index
    %370 = vector.load %arg8[%c40_100, %c0_101] : memref<48x128xf32, #tpu.memory_space<vmem>>, vector<8x20xf32>
    tpu.vector_store %arg8[%c40_100, %c0_101], %369 {strides = array<i32>} : memref<48x128xf32, #tpu.memory_space<vmem>>, vector<8x20xf32>,
    %c0_102 = arith.constant 0 : index
    %c1280 = arith.constant 1280 : index
    %371 = vector.load %arg3[%c0_102, %c1280] : memref<20x1305xf32, #tpu.memory_space<vmem>>, vector<20x25xf32>
    %c0_103 = arith.constant 0 : index
    %c0_104 = arith.constant 0 : index
    %372 = vector.load %arg8[%c0_103, %c0_104] : memref<48x128xf32, #tpu.memory_space<vmem>>, vector<48x20xf32>
    %cst_105 = arith.constant dense<0.000000e+00> : vector<48x25xf32>
    %373 = tpu.matmul %372, %371, %cst_105 {dimension_numbers = #tpu.dot_dimension_numbers<[1], [0], [0], [1], [0, 0, 1, 1], [], []>} : vector<48x20xf32>, vector<20x25xf32>, vector<48x25xf32> -> vector<48x25xf32>
    %c12 = arith.constant 12 : index
    %c0_106 = arith.constant 0 : index
    %374 = vector.load %arg4[%c12, %c0_106] : memref<16x256xf32, #tpu.memory_space<vmem>>, vector<1x25xf32>
    %375 = vector.broadcast %374 : vector<1x25xf32> to vector<48x25xf32>
    %376 = arith.addf %373, %375 : vector<48x25xf32>
    %c0_107 = arith.constant 0 : index
    %c0_108 = arith.constant 0 : index
    %377 = vector.load %arg5[%c0_107, %c0_108] : memref<48x25xf32, #tpu.memory_space<vmem>>, vector<48x25xf32>
    tpu.vector_store %arg5[%c0_107, %c0_108], %376 {strides = array<i32>} : memref<48x25xf32, #tpu.memory_space<vmem>>, vector<48x25xf32>,
    tpu.wait_dma2 semaphore(%arg10 : memref<!tpu.dma_semaphore, #tpu.memory_space<semaphore_mem>>) src(%arg9 : memref<8x128xf32, #tpu.memory_space<vmem>>) dst(%arg6 : memref<8x128xf32, #tpu.memory_space<any>>)
    return
  }
}

</mosaic_0001>

<llo_original>
// kernel: tpu_custom_call.1
$region0: #{tpu_custom_call.1}
  #allocation0 [shape = 'u32[]', space=smem, size = 0x4, offset = 0x4, fixed_abs, tag = 'smem constant byte address 0x4 - core index']
  #allocation1 [shape = 'u32[144,128]{1,0:T(1,128)}', space=vmem, size = 0x12000, scoped, tag = 'internal scratch']
  #allocation2 [shape = 'f32[48,1024]{1,0:T(8,128)}', space=vmem, size = 0x30000, scoped, tag = 'scratch operand']
  #allocation3 [shape = 'f32[48,128]{1,0:T(8,128)}', space=vmem, size = 0x6000, scoped, tag = 'scratch operand']
  #allocation4 [shape = 'f32[8,128]{1,0:T(8,128)}', space=vmem, size = 0x1000, scoped, tag = 'scratch operand']
  #allocation5 [shape = 's32[1]{0}', space=sflag, size = 0x4, scoped, tag = 'scratch operand']
  #allocation10 [shape = 's32[]', space=sflag, size = 0x4, offset = 0, fixed_abs, tag = 'sflag constant byte address 0x0 - dummy sync flag']
  #allocation11 [shape = 's32[]', space=sflag, size = 0x4, offset = 0, fixed_abs, tag = 'sflag constant byte address 0x0 - dummy sync flag']
  #allocation12 [shape = 'u32[]', space=smem, size = 0x4, offset = 0x44, fixed_abs, tag = 'smem constant byte address 0x44 - assertion arg 0']
  #allocation13 [shape = 'u32[]', space=smem, size = 0x4, offset = 0x48, fixed_abs, tag = 'smem constant byte address 0x48 - assertion arg 1']
  %s0 = inlined_call_operand.vmem [shape: f32[48,26], index: 0, kind: input, shape index: {}]
  %s1 = inlined_call_operand.vmem [shape: f32[8,384], index: 1, kind: input, shape index: {}]
  %s2 = inlined_call_operand.hbm [shape: f32[26,1024], index: 2, kind: input, shape index: {}]
  %s3 = inlined_call_operand.hbm [shape: f32[20,1305], index: 3, kind: input, shape index: {}]
  %s4 = inlined_call_operand.vmem [shape: f32[16,256], index: 4, kind: input, shape index: {}]
  %s5 = inlined_call_operand.vmem [shape: f32[48,25], index: 5, kind: output, shape index: {0}]
  %s6 = inlined_call_operand.hbm [shape: f32[8,128], index: 6, kind: output, shape index: {1}]
  %7 = xla_tuple %s5, %s6
  %s8 = sld [smem:[#allocation0]]
  $region42: #{tpu_custom_call.1} parent=0
    _
  %s10 = ssub.s32 1, %s8
  %s11 = scalar_select 0, %s10, %s8
  $region1: #{tpu_custom_call.1} parent=0
    #allocation6 [shape = 'u8[131072]{0}', space=vmem, size = 0x20000, scoped, tag = 'input window, operand 2, single buffered']
    #allocation7 [shape = 's32[1]{0}', space=sflag, size = 0x4, scoped, tag = 'scoped memory for tpu_custom_call.1']
    #allocation8 [shape = 'u8[135168]{0}', space=vmem, size = 0x21000, scoped, tag = 'input window, operand 3, single buffered']
    #allocation9 [shape = 's32[1]{0}', space=sflag, size = 0x4, scoped, tag = 'scoped memory for tpu_custom_call.1']
    %12 = vsyncpa [#allocation7], 0
    %13 = vsyncpa [#allocation9], 0
    // Predicated region
    $region2: #{tpu_custom_call.1} parent=1 // pred_check
      _
    $region3: #{tpu_custom_call.1} parent=1 // pred_check_branch
      %15 = sbr.rel (0) target = $region5
    $region4: #{tpu_custom_call.1} parent=1 // pred_region
      _
    $region5: #{tpu_custom_call.1} parent=1 // pred_fallthru
      _
    // Predicated region
    $region6: #{tpu_custom_call.1} parent=1 // pred_check
      _
    $region7: #{tpu_custom_call.1} parent=1 // pred_check_branch
      %17 = sbr.rel (0) target = $region9
    $region8: #{tpu_custom_call.1} parent=1 // pred_region
      _
    $region9: #{tpu_custom_call.1} parent=1 // pred_fallthru
      _
    // Predicated region
    $region10: #{tpu_custom_call.1} parent=1 // pred_check
      _
    $region11: #{tpu_custom_call.1} parent=1 // pred_check_branch
      %19 = sbr.rel (0) target = $region13
    $region12: #{tpu_custom_call.1} parent=1 // pred_region
      %s21 = ssub.s32 4096, 4096
      %22 = vsyncadd [#allocation7], %s21
      %s23 = sshll.u32 [#allocation6], 4
      %s24 = int_to_ptr.vmem [resolvable:$true] %s23
      %29 = dma.hbm_to_vmem [thread:$0]  %s2, 4096, %s24, [#allocation7], 1024, 1024, 64
    $region13: #{tpu_custom_call.1} parent=1 // pred_fallthru
      _
    // Predicated region
    $region14: #{tpu_custom_call.1} parent=1 // pred_check
      _
    $region15: #{tpu_custom_call.1} parent=1 // pred_check_branch
      %31 = sbr.rel (0) target = $region17
    $region16: #{tpu_custom_call.1} parent=1 // pred_region
      %s33 = ssub.s32 4224, 4224
      %34 = vsyncadd [#allocation9], %s33
      %s35 = sshll.u32 [#allocation8], 4
      %s36 = int_to_ptr.vmem [resolvable:$true] %s35
      %41 = dma.hbm_to_vmem [thread:$0]  %s3, 4224, %s36, [#allocation9], 1408, 1408, 88
    $region17: #{tpu_custom_call.1} parent=1 // pred_fallthru
      _
    // Predicated region
    $region18: #{tpu_custom_call.1} parent=1 // pred_check
      _
    $region19: #{tpu_custom_call.1} parent=1 // pred_check_branch
      %43 = sbr.rel (0) target = $region21
    $region20: #{tpu_custom_call.1} parent=1 // pred_region
      _
    $region21: #{tpu_custom_call.1} parent=1 // pred_fallthru
      _
    // Predicated region
    $region22: #{tpu_custom_call.1} parent=1 // pred_check
      _
    $region23: #{tpu_custom_call.1} parent=1 // pred_check_branch
      %45 = sbr.rel (0) target = $region25
    $region24: #{tpu_custom_call.1} parent=1 // pred_region
      %46 = dma.done [#allocation7], 4096
    $region25: #{tpu_custom_call.1} parent=1 // pred_fallthru
      _
    // Predicated region
    $region26: #{tpu_custom_call.1} parent=1 // pred_check
      _
    $region27: #{tpu_custom_call.1} parent=1 // pred_check_branch
      %48 = sbr.rel (0) target = $region29
    $region28: #{tpu_custom_call.1} parent=1 // pred_region
      %49 = dma.done [#allocation9], 4224
    $region29: #{tpu_custom_call.1} parent=1 // pred_fallthru
      _
    %v50 = vld [vmem:[%s0] sm:$0xff]
    %v51 = vld [vmem:[%s0 + $0x8] sm:$0xff]
    %v52 = vld [vmem:[%s0 + $0x10] sm:$0xff]
    %v53 = vld [vmem:[%s0 + $0x18] sm:$0xff]
    %v54 = vld [vmem:[%s0 + $0x20] sm:$0xff]
    %v55 = vld [vmem:[%s0 + $0x28] sm:$0xff]
    %v56 = vld [vmem:[#allocation6] sm:$0xff]
    %v57 = vld [vmem:[#allocation6 + $0x8] sm:$0xff]
    %v58 = vld [vmem:[#allocation6 + $0x10] sm:$0xff]
    %v59 = vld [vmem:[#allocation6 + $0x18] sm:$0xff]
    %v60 = vld [vmem:[#allocation6 + $0x20] sm:$0xff]
    %v61 = vld [vmem:[#allocation6 + $0x28] sm:$0xff]
    %v62 = vld [vmem:[#allocation6 + $0x30] sm:$0xff]
    %v63 = vld [vmem:[#allocation6 + $0x38] sm:$0xff]
    %v64 = vld [vmem:[#allocation6 + $0x40] sm:$0xff]
    %v65 = vld [vmem:[#allocation6 + $0x48] sm:$0xff]
    %v66 = vld [vmem:[#allocation6 + $0x50] sm:$0xff]
    %v67 = vld [vmem:[#allocation6 + $0x58] sm:$0xff]
    %v68 = vld [vmem:[#allocation6 + $0x60] sm:$0xff]
    %v69 = vld [vmem:[#allocation6 + $0x68] sm:$0xff]
    %v70 = vld [vmem:[#allocation6 + $0x70] sm:$0xff]
    %v71 = vld [vmem:[#allocation6 + $0x78] sm:$0xff]
    %v72 = vld [vmem:[#allocation6 + $0x80] sm:$0xff]
    %v73 = vld [vmem:[#allocation6 + $0x88] sm:$0xff]
    %v74 = vld [vmem:[#allocation6 + $0x90] sm:$0xff]
    %v75 = vld [vmem:[#allocation6 + $0x98] sm:$0xff]
    %v76 = vld [vmem:[#allocation6 + $0xa0] sm:$0xff]
    %v77 = vld [vmem:[#allocation6 + $0xa8] sm:$0xff]
    %v78 = vld [vmem:[#allocation6 + $0xb0] sm:$0xff]
    %v79 = vld [vmem:[#allocation6 + $0xb8] sm:$0xff]
    %v80 = vld [vmem:[#allocation6 + $0xc0] sm:$0x3]
    %v81 = vld [vmem:[#allocation6 + $0xc8] sm:$0x3]
    %v82 = vld [vmem:[#allocation6 + $0xd0] sm:$0x3]
    %v83 = vld [vmem:[#allocation6 + $0xd8] sm:$0x3]
    %v84 = vld [vmem:[#allocation6 + $0xe0] sm:$0x3]
    %v85 = vld [vmem:[#allocation6 + $0xe8] sm:$0x3]
    %v86 = vld [vmem:[#allocation6 + $0xf0] sm:$0x3]
    %v87 = vld [vmem:[#allocation6 + $0xf8] sm:$0x3]
    %vm88 = vcmask 211968
    %v90 = vsel %vm88, %v50, 0
    %v93 = vsel %vm88, %v51, 0
    %v96 = vsel %vm88, %v52, 0
    %v99 = vsel %vm88, %v53, 0
    %v102 = vsel %vm88, %v54, 0
    %v105 = vsel %vm88, %v55, 0
    %vm107 = vcmask 1041408
    %v109 = vsel %vm107, %v80, 0
    %v112 = vsel %vm107, %v81, 0
    %v115 = vsel %vm107, %v82, 0
    %v118 = vsel %vm107, %v83, 0
    %v121 = vsel %vm107, %v84, 0
    %v124 = vsel %vm107, %v85, 0
    %v127 = vsel %vm107, %v86, 0
    %v130 = vsel %vm107, %v87, 0
    %132 = vmatprep.subr.mxu0 0.0
    %133 = vmatpush1.msra.mxu0 0.0
    %134 = vmatprep.subr.mxu0 0.0
    %135 = vmatpush1.msra.mxu0 0.0
    %136 = vmatprep.subr.mxu0 0.0
    %137 = vmatpush1.msra.mxu0 0.0
    %138 = vmatprep.subr.mxu0 0.0
    %139 = vmatpush1.msra.mxu0 0.0
    %140 = vmatprep.subr.mxu0 0.0
    %141 = vmatpush1.msra.mxu0 0.0
    %142 = vmatprep.subr.mxu0 0.0
    %143 = vmatpush1.msra.mxu0 0.0
    %144 = vmatprep.subr.mxu0 0.0
    %145 = vmatpush1.msra.mxu0 0.0
    %146 = vmatprep.subr.mxu0 0.0
    %147 = vmatpush1.msra.mxu0 0.0
    %148 = vmatprep.subr.mxu0 0.0
    %149 = vmatpush1.msra.mxu0 0.0
    %150 = vmatprep.subr.mxu0 0.0
    %151 = vmatpush1.msra.mxu0 0.0
    %152 = vmatprep.subr.mxu0 0.0
    %153 = vmatpush1.msra.mxu0 0.0
    %154 = vmatprep.subr.mxu0 0.0
    %155 = vmatpush1.msra.mxu0 0.0
    %156 = vmatprep.subr.mxu0 %v112
    %157 = vmatpush1.msra.mxu0 %v109
    %158 = vmatprep.subr.mxu0 %v73
    %159 = vmatpush1.msra.mxu0 %v72
    %160 = vmatprep.subr.mxu0 %v65
    %161 = vmatpush1.msra.mxu0 %v64
    %162 = vmatprep.subr.mxu0 %v57
    %163 = vmatpush1.msra.mxu0 %v56
    %164 = vmatprep.subr.mxu0 0.0
    %165 = vmatpush2.msra.mxu0 0.0
    %166 = vmatprep.subr.mxu0 0.0
    %167 = vmatpush2.msra.mxu0 0.0
    %168 = vmatprep.subr.mxu0 0.0
    %169 = vmatpush2.msra.mxu0 0.0
    %170 = vmatprep.subr.mxu0 0.0
    %171 = vmatpush2.msra.mxu0 0.0
    %172 = vmatprep.subr.mxu0 0.0
    %173 = vmatpush2.msra.mxu0 0.0
    %174 = vmatprep.subr.mxu0 0.0
    %175 = vmatpush2.msra.mxu0 0.0
    %176 = vmatprep.subr.mxu0 0.0
    %177 = vmatpush2.msra.mxu0 0.0
    %178 = vmatprep.subr.mxu0 0.0
    %179 = vmatpush2.msra.mxu0 0.0
    %180 = vmatprep.subr.mxu0 0.0
    %181 = vmatpush2.msra.mxu0 0.0
    %182 = vmatprep.subr.mxu0 0.0
    %183 = vmatpush2.msra.mxu0 0.0
    %184 = vmatprep.subr.mxu0 0.0
    %185 = vmatpush2.msra.mxu0 0.0
    %186 = vmatprep.subr.mxu0 0.0
    %187 = vmatpush2.msra.mxu0 0.0
    %188 = vmatprep.subr.mxu0 0.0
    %189 = vmatpush2.msra.mxu0 0.0
    %190 = vmatprep.subr.mxu0 0.0
    %191 = vmatpush2.msra.mxu0 0.0
    %192 = vmatprep.subr.mxu0 0.0
    %193 = vmatpush2.msra.mxu0 0.0
    %194 = vmatprep.subr.mxu0 0.0
    %195 = vmatpush2.msra.mxu0 0.0
    %196 = vmatprep.mubr.f32.mxu0 0.0
    %197 = vmatmul.mubr.f32.gmra.mxu0 %v90
    %v198 = vpop.f32.mrf.mxu0
    %v199 = vadd.f32 0.0, %v198
    %v200 = vpop.f32.mrf.mxu0
    %v201 = vadd.f32 0.0, %v200
    %202 = vmatprep.mubr.f32.mxu0 0.0
    %203 = vmatmul.mubr.f32.gmra.mxu0 %v93
    %v204 = vpop.f32.mrf.mxu0
    %v205 = vadd.f32 0.0, %v204
    %v206 = vpop.f32.mrf.mxu0
    %v207 = vadd.f32 0.0, %v206
    %208 = vmatprep.mubr.f32.mxu0 0.0
    %209 = vmatmul.mubr.f32.gmra.mxu0 %v96
    %v210 = vpop.f32.mrf.mxu0
    %v211 = vadd.f32 0.0, %v210
    %v212 = vpop.f32.mrf.mxu0
    %v213 = vadd.f32 0.0, %v212
    %214 = vmatprep.mubr.f32.mxu0 0.0
    %215 = vmatmul.mubr.f32.gmra.mxu0 %v99
    %v216 = vpop.f32.mrf.mxu0
    %v217 = vadd.f32 0.0, %v216
    %v218 = vpop.f32.mrf.mxu0
    %v219 = vadd.f32 0.0, %v218
    %220 = vmatprep.mubr.f32.mxu0 0.0
    %221 = vmatmul.mubr.f32.gmra.mxu0 %v102
    %v222 = vpop.f32.mrf.mxu0
    %v223 = vadd.f32 0.0, %v222
    %v224 = vpop.f32.mrf.mxu0
    %v225 = vadd.f32 0.0, %v224
    %226 = vmatprep.mubr.f32.mxu0 0.0
    %227 = vmatmul.mubr.f32.gmra.mxu0 %v105
    %v228 = vpop.f32.mrf.mxu0
    %v229 = vadd.f32 0.0, %v228
    %v230 = vpop.f32.mrf.mxu0
    %v231 = vadd.f32 0.0, %v230
    %232 = vdwg.mxu0
    %233 = vmatprep.subr.mxu0 0.0
    %234 = vmatpush1.msra.mxu0 0.0
    %235 = vmatprep.subr.mxu0 0.0
    %236 = vmatpush1.msra.mxu0 0.0
    %237 = vmatprep.subr.mxu0 0.0
    %238 = vmatpush1.msra.mxu0 0.0
    %239 = vmatprep.subr.mxu0 0.0
    %240 = vmatpush1.msra.mxu0 0.0
    %241 = vmatprep.subr.mxu0 0.0
    %242 = vmatpush1.msra.mxu0 0.0
    %243 = vmatprep.subr.mxu0 0.0
    %244 = vmatpush1.msra.mxu0 0.0
    %245 = vmatprep.subr.mxu0 0.0
    %246 = vmatpush1.msra.mxu0 0.0
    %247 = vmatprep.subr.mxu0 0.0
    %248 = vmatpush1.msra.mxu0 0.0
    %249 = vmatprep.subr.mxu0 0.0
    %250 = vmatpush1.msra.mxu0 0.0
    %251 = vmatprep.subr.mxu0 0.0
    %252 = vmatpush1.msra.mxu0 0.0
    %253 = vmatprep.subr.mxu0 0.0
    %254 = vmatpush1.msra.mxu0 0.0
    %255 = vmatprep.subr.mxu0 0.0
    %256 = vmatpush1.msra.mxu0 0.0
    %257 = vmatprep.subr.mxu0 %v118
    %258 = vmatpush1.msra.mxu0 %v115
    %259 = vmatprep.subr.mxu0 %v75
    %260 = vmatpush1.msra.mxu0 %v74
    %261 = vmatprep.subr.mxu0 %v67
    %262 = vmatpush1.msra.mxu0 %v66
    %263 = vmatprep.subr.mxu0 %v59
    %264 = vmatpush1.msra.mxu0 %v58
    %265 = vmatprep.subr.mxu0 0.0
    %266 = vmatpush2.msra.mxu0 0.0
    %267 = vmatprep.subr.mxu0 0.0
    %268 = vmatpush2.msra.mxu0 0.0
    %269 = vmatprep.subr.mxu0 0.0
    %270 = vmatpush2.msra.mxu0 0.0
    %271 = vmatprep.subr.mxu0 0.0
    %272 = vmatpush2.msra.mxu0 0.0
    %273 = vmatprep.subr.mxu0 0.0
    %274 = vmatpush2.msra.mxu0 0.0
    %275 = vmatprep.subr.mxu0 0.0
    %276 = vmatpush2.msra.mxu0 0.0
    %277 = vmatprep.subr.mxu0 0.0
    %278 = vmatpush2.msra.mxu0 0.0
    %279 = vmatprep.subr.mxu0 0.0
    %280 = vmatpush2.msra.mxu0 0.0
    %281 = vmatprep.subr.mxu0 0.0
    %282 = vmatpush2.msra.mxu0 0.0
    %283 = vmatprep.subr.mxu0 0.0
    %284 = vmatpush2.msra.mxu0 0.0
    %285 = vmatprep.subr.mxu0 0.0
    %286 = vmatpush2.msra.mxu0 0.0
    %287 = vmatprep.subr.mxu0 0.0
    %288 = vmatpush2.msra.mxu0 0.0
    %289 = vmatprep.subr.mxu0 0.0
    %290 = vmatpush2.msra.mxu0 0.0
    %291 = vmatprep.subr.mxu0 0.0
    %292 = vmatpush2.msra.mxu0 0.0
    %293 = vmatprep.subr.mxu0 0.0
    %294 = vmatpush2.msra.mxu0 0.0
    %295 = vmatprep.subr.mxu0 0.0
    %296 = vmatpush2.msra.mxu0 0.0
    %297 = vmatprep.mubr.f32.mxu0 0.0
    %298 = vmatmul.mubr.f32.gmra.mxu0 %v90
    %v299 = vpop.f32.mrf.mxu0
    %v300 = vadd.f32 0.0, %v299
    %v301 = vpop.f32.mrf.mxu0
    %v302 = vadd.f32 0.0, %v301
    %303 = vmatprep.mubr.f32.mxu0 0.0
    %304 = vmatmul.mubr.f32.gmra.mxu0 %v93
    %v305 = vpop.f32.mrf.mxu0
    %v306 = vadd.f32 0.0, %v305
    %v307 = vpop.f32.mrf.mxu0
    %v308 = vadd.f32 0.0, %v307
    %309 = vmatprep.mubr.f32.mxu0 0.0
    %310 = vmatmul.mubr.f32.gmra.mxu0 %v96
    %v311 = vpop.f32.mrf.mxu0
    %v312 = vadd.f32 0.0, %v311
    %v313 = vpop.f32.mrf.mxu0
    %v314 = vadd.f32 0.0, %v313
    %315 = vmatprep.mubr.f32.mxu0 0.0
    %316 = vmatmul.mubr.f32.gmra.mxu0 %v99
    %v317 = vpop.f32.mrf.mxu0
    %v318 = vadd.f32 0.0, %v317
    %v319 = vpop.f32.mrf.mxu0
    %v320 = vadd.f32 0.0, %v319
    %321 = vmatprep.mubr.f32.mxu0 0.0
    %322 = vmatmul.mubr.f32.gmra.mxu0 %v102
    %v323 = vpop.f32.mrf.mxu0
    %v324 = vadd.f32 0.0, %v323
    %v325 = vpop.f32.mrf.mxu0
    %v326 = vadd.f32 0.0, %v325
    %327 = vmatprep.mubr.f32.mxu0 0.0
    %328 = vmatmul.mubr.f32.gmra.mxu0 %v105
    %v329 = vpop.f32.mrf.mxu0
    %v330 = vadd.f32 0.0, %v329
    %v331 = vpop.f32.mrf.mxu0
    %v332 = vadd.f32 0.0, %v331
    %333 = vdwg.mxu0
    %334 = vmatprep.subr.mxu0 0.0
    %335 = vmatpush1.msra.mxu0 0.0
    %336 = vmatprep.subr.mxu0 0.0
    %337 = vmatpush1.msra.mxu0 0.0
    %338 = vmatprep.subr.mxu0 0.0
    %339 = vmatpush1.msra.mxu0 0.0
    %340 = vmatprep.subr.mxu0 0.0
    %341 = vmatpush1.msra.mxu0 0.0
    %342 = vmatprep.subr.mxu0 0.0
    %343 = vmatpush1.msra.mxu0 0.0
    %344 = vmatprep.subr.mxu0 0.0
    %345 = vmatpush1.msra.mxu0 0.0
    %346 = vmatprep.subr.mxu0 0.0
    %347 = vmatpush1.msra.mxu0 0.0
    %348 = vmatprep.subr.mxu0 0.0
    %349 = vmatpush1.msra.mxu0 0.0
    %350 = vmatprep.subr.mxu0 0.0
    %351 = vmatpush1.msra.mxu0 0.0
    %352 = vmatprep.subr.mxu0 0.0
    %353 = vmatpush1.msra.mxu0 0.0
    %354 = vmatprep.subr.mxu0 0.0
    %355 = vmatpush1.msra.mxu0 0.0
    %356 = vmatprep.subr.mxu0 0.0
    %357 = vmatpush1.msra.mxu0 0.0
    %358 = vmatprep.subr.mxu0 %v124
    %359 = vmatpush1.msra.mxu0 %v121
    %360 = vmatprep.subr.mxu0 %v77
    %361 = vmatpush1.msra.mxu0 %v76
    %362 = vmatprep.subr.mxu0 %v69
    %363 = vmatpush1.msra.mxu0 %v68
    %364 = vmatprep.subr.mxu0 %v61
    %365 = vmatpush1.msra.mxu0 %v60
    %366 = vmatprep.subr.mxu0 0.0
    %367 = vmatpush2.msra.mxu0 0.0
    %368 = vmatprep.subr.mxu0 0.0
    %369 = vmatpush2.msra.mxu0 0.0
    %370 = vmatprep.subr.mxu0 0.0
    %371 = vmatpush2.msra.mxu0 0.0
    %372 = vmatprep.subr.mxu0 0.0
    %373 = vmatpush2.msra.mxu0 0.0
    %374 = vmatprep.subr.mxu0 0.0
    %375 = vmatpush2.msra.mxu0 0.0
    %376 = vmatprep.subr.mxu0 0.0
    %377 = vmatpush2.msra.mxu0 0.0
    %378 = vmatprep.subr.mxu0 0.0
    %379 = vmatpush2.msra.mxu0 0.0
    %380 = vmatprep.subr.mxu0 0.0
    %381 = vmatpush2.msra.mxu0 0.0
    %382 = vmatprep.subr.mxu0 0.0
    %383 = vmatpush2.msra.mxu0 0.0
    %384 = vmatprep.subr.mxu0 0.0
    %385 = vmatpush2.msra.mxu0 0.0
    %386 = vmatprep.subr.mxu0 0.0
    %387 = vmatpush2.msra.mxu0 0.0
    %388 = vmatprep.subr.mxu0 0.0
    %389 = vmatpush2.msra.mxu0 0.0
    %390 = vmatprep.subr.mxu0 0.0
    %391 = vmatpush2.msra.mxu0 0.0
    %392 = vmatprep.subr.mxu0 0.0
    %393 = vmatpush2.msra.mxu0 0.0
    %394 = vmatprep.subr.mxu0 0.0
    %395 = vmatpush2.msra.mxu0 0.0
    %396 = vmatprep.subr.mxu0 0.0
    %397 = vmatpush2.msra.mxu0 0.0
    %398 = vmatprep.mubr.f32.mxu0 0.0
    %399 = vmatmul.mubr.f32.gmra.mxu0 %v90
    %v400 = vpop.f32.mrf.mxu0
    %v401 = vadd.f32 0.0, %v400
    %v402 = vpop.f32.mrf.mxu0
    %v403 = vadd.f32 0.0, %v402
    %404 = vmatprep.mubr.f32.mxu0 0.0
    %405 = vmatmul.mubr.f32.gmra.mxu0 %v93
    %v406 = vpop.f32.mrf.mxu0
    %v407 = vadd.f32 0.0, %v406
    %v408 = vpop.f32.mrf.mxu0
    %v409 = vadd.f32 0.0, %v408
    %410 = vmatprep.mubr.f32.mxu0 0.0
    %411 = vmatmul.mubr.f32.gmra.mxu0 %v96
    %v412 = vpop.f32.mrf.mxu0
    %v413 = vadd.f32 0.0, %v412
    %v414 = vpop.f32.mrf.mxu0
    %v415 = vadd.f32 0.0, %v414
    %416 = vmatprep.mubr.f32.mxu0 0.0
    %417 = vmatmul.mubr.f32.gmra.mxu0 %v99
    %v418 = vpop.f32.mrf.mxu0
    %v419 = vadd.f32 0.0, %v418
    %v420 = vpop.f32.mrf.mxu0
    %v421 = vadd.f32 0.0, %v420
    %422 = vmatprep.mubr.f32.mxu0 0.0
    %423 = vmatmul.mubr.f32.gmra.mxu0 %v102
    %v424 = vpop.f32.mrf.mxu0
    %v425 = vadd.f32 0.0, %v424
    %v426 = vpop.f32.mrf.mxu0
    %v427 = vadd.f32 0.0, %v426
    %428 = vmatprep.mubr.f32.mxu0 0.0
    %429 = vmatmul.mubr.f32.gmra.mxu0 %v105
    %v430 = vpop.f32.mrf.mxu0
    %v431 = vadd.f32 0.0, %v430
    %v432 = vpop.f32.mrf.mxu0
    %v433 = vadd.f32 0.0, %v432
    %434 = vdwg.mxu0
    %435 = vmatprep.subr.mxu0 0.0
    %436 = vmatpush1.msra.mxu0 0.0
    %437 = vmatprep.subr.mxu0 0.0
    %438 = vmatpush1.msra.mxu0 0.0
    %439 = vmatprep.subr.mxu0 0.0
    %440 = vmatpush1.msra.mxu0 0.0
    %441 = vmatprep.subr.mxu0 0.0
    %442 = vmatpush1.msra.mxu0 0.0
    %443 = vmatprep.subr.mxu0 0.0
    %444 = vmatpush1.msra.mxu0 0.0
    %445 = vmatprep.subr.mxu0 0.0
    %446 = vmatpush1.msra.mxu0 0.0
    %447 = vmatprep.subr.mxu0 0.0
    %448 = vmatpush1.msra.mxu0 0.0
    %449 = vmatprep.subr.mxu0 0.0
    %450 = vmatpush1.msra.mxu0 0.0
    %451 = vmatprep.subr.mxu0 0.0
    %452 = vmatpush1.msra.mxu0 0.0
    %453 = vmatprep.subr.mxu0 0.0
    %454 = vmatpush1.msra.mxu0 0.0
    %455 = vmatprep.subr.mxu0 0.0
    %456 = vmatpush1.msra.mxu0 0.0
    %457 = vmatprep.subr.mxu0 0.0
    %458 = vmatpush1.msra.mxu0 0.0
    %459 = vmatprep.subr.mxu0 %v130
    %460 = vmatpush1.msra.mxu0 %v127
    %461 = vmatprep.subr.mxu0 %v79
    %462 = vmatpush1.msra.mxu0 %v78
    %463 = vmatprep.subr.mxu0 %v71
    %464 = vmatpush1.msra.mxu0 %v70
    %465 = vmatprep.subr.mxu0 %v63
    %466 = vmatpush1.msra.mxu0 %v62
    %467 = vmatprep.subr.mxu0 0.0
    %468 = vmatpush2.msra.mxu0 0.0
    %469 = vmatprep.subr.mxu0 0.0
    %470 = vmatpush2.msra.mxu0 0.0
    %471 = vmatprep.subr.mxu0 0.0
    %472 = vmatpush2.msra.mxu0 0.0
    %473 = vmatprep.subr.mxu0 0.0
    %474 = vmatpush2.msra.mxu0 0.0
    %475 = vmatprep.subr.mxu0 0.0
    %476 = vmatpush2.msra.mxu0 0.0
    %477 = vmatprep.subr.mxu0 0.0
    %478 = vmatpush2.msra.mxu0 0.0
    %479 = vmatprep.subr.mxu0 0.0
    %480 = vmatpush2.msra.mxu0 0.0
    %481 = vmatprep.subr.mxu0 0.0
    %482 = vmatpush2.msra.mxu0 0.0
    %483 = vmatprep.subr.mxu0 0.0
    %484 = vmatpush2.msra.mxu0 0.0
    %485 = vmatprep.subr.mxu0 0.0
    %486 = vmatpush2.msra.mxu0 0.0
    %487 = vmatprep.subr.mxu0 0.0
    %488 = vmatpush2.msra.mxu0 0.0
    %489 = vmatprep.subr.mxu0 0.0
    %490 = vmatpush2.msra.mxu0 0.0
    %491 = vmatprep.subr.mxu0 0.0
    %492 = vmatpush2.msra.mxu0 0.0
    %493 = vmatprep.subr.mxu0 0.0
    %494 = vmatpush2.msra.mxu0 0.0
    %495 = vmatprep.subr.mxu0 0.0
    %496 = vmatpush2.msra.mxu0 0.0
    %497 = vmatprep.subr.mxu0 0.0
    %498 = vmatpush2.msra.mxu0 0.0
    %499 = vmatprep.mubr.f32.mxu0 0.0
    %500 = vmatmul.mubr.f32.gmra.mxu0 %v90
    %v501 = vpop.f32.mrf.mxu0
    %v502 = vadd.f32 0.0, %v501
    %v503 = vpop.f32.mrf.mxu0
    %v504 = vadd.f32 0.0, %v503
    %505 = vmatprep.mubr.f32.mxu0 0.0
    %506 = vmatmul.mubr.f32.gmra.mxu0 %v93
    %v507 = vpop.f32.mrf.mxu0
    %v508 = vadd.f32 0.0, %v507
    %v509 = vpop.f32.mrf.mxu0
    %v510 = vadd.f32 0.0, %v509
    %511 = vmatprep.mubr.f32.mxu0 0.0
    %512 = vmatmul.mubr.f32.gmra.mxu0 %v96
    %v513 = vpop.f32.mrf.mxu0
    %v514 = vadd.f32 0.0, %v513
    %v515 = vpop.f32.mrf.mxu0
    %v516 = vadd.f32 0.0, %v515
    %517 = vmatprep.mubr.f32.mxu0 0.0
    %518 = vmatmul.mubr.f32.gmra.mxu0 %v99
    %v519 = vpop.f32.mrf.mxu0
    %v520 = vadd.f32 0.0, %v519
    %v521 = vpop.f32.mrf.mxu0
    %v522 = vadd.f32 0.0, %v521
    %523 = vmatprep.mubr.f32.mxu0 0.0
    %524 = vmatmul.mubr.f32.gmra.mxu0 %v102
    %v525 = vpop.f32.mrf.mxu0
    %v526 = vadd.f32 0.0, %v525
    %v527 = vpop.f32.mrf.mxu0
    %v528 = vadd.f32 0.0, %v527
    %529 = vmatprep.mubr.f32.mxu0 0.0
    %530 = vmatmul.mubr.f32.gmra.mxu0 %v105
    %v531 = vpop.f32.mrf.mxu0
    %v532 = vadd.f32 0.0, %v531
    %v533 = vpop.f32.mrf.mxu0
    %v534 = vadd.f32 0.0, %v533
    %535 = vdwg.mxu0
    %536 = vst [vmem:[#allocation2] sm:$0xff] %v199
    %537 = vst [vmem:[#allocation2 + $0x8] sm:$0xff] %v201
    %538 = vst [vmem:[#allocation2 + $0x10] sm:$0xff] %v300
    %539 = vst [vmem:[#allocation2 + $0x18] sm:$0xff] %v302
    %540 = vst [vmem:[#allocation2 + $0x20] sm:$0xff] %v401
    %541 = vst [vmem:[#allocation2 + $0x28] sm:$0xff] %v403
    %542 = vst [vmem:[#allocation2 + $0x30] sm:$0xff] %v502
    %543 = vst [vmem:[#allocation2 + $0x38] sm:$0xff] %v504
    %544 = vst [vmem:[#allocation2 + $0x40] sm:$0xff] %v205
    %545 = vst [vmem:[#allocation2 + $0x48] sm:$0xff] %v207
    %546 = vst [vmem:[#allocation2 + $0x50] sm:$0xff] %v306
    %547 = vst [vmem:[#allocation2 + $0x58] sm:$0xff] %v308
    %548 = vst [vmem:[#allocation2 + $0x60] sm:$0xff] %v407
    %549 = vst [vmem:[#allocation2 + $0x68] sm:$0xff] %v409
    %550 = vst [vmem:[#allocation2 + $0x70] sm:$0xff] %v508
    %551 = vst [vmem:[#allocation2 + $0x78] sm:$0xff] %v510
    %552 = vst [vmem:[#allocation2 + $0x80] sm:$0xff] %v211
    %553 = vst [vmem:[#allocation2 + $0x88] sm:$0xff] %v213
    %554 = vst [vmem:[#allocation2 + $0x90] sm:$0xff] %v312
    %555 = vst [vmem:[#allocation2 + $0x98] sm:$0xff] %v314
    %556 = vst [vmem:[#allocation2 + $0xa0] sm:$0xff] %v413
    %557 = vst [vmem:[#allocation2 + $0xa8] sm:$0xff] %v415
    %558 = vst [vmem:[#allocation2 + $0xb0] sm:$0xff] %v514
    %559 = vst [vmem:[#allocation2 + $0xb8] sm:$0xff] %v516
    %560 = vst [vmem:[#allocation2 + $0xc0] sm:$0xff] %v217
    %561 = vst [vmem:[#allocation2 + $0xc8] sm:$0xff] %v219
    %562 = vst [vmem:[#allocation2 + $0xd0] sm:$0xff] %v318
    %563 = vst [vmem:[#allocation2 + $0xd8] sm:$0xff] %v320
    %564 = vst [vmem:[#allocation2 + $0xe0] sm:$0xff] %v419
    %565 = vst [vmem:[#allocation2 + $0xe8] sm:$0xff] %v421
    %566 = vst [vmem:[#allocation2 + $0xf0] sm:$0xff] %v520
    %567 = vst [vmem:[#allocation2 + $0xf8] sm:$0xff] %v522
    %568 = vst [vmem:[#allocation2 + $0x100] sm:$0xff] %v223
    %569 = vst [vmem:[#allocation2 + $0x108] sm:$0xff] %v225
    %570 = vst [vmem:[#allocation2 + $0x110] sm:$0xff] %v324
    %571 = vst [vmem:[#allocation2 + $0x118] sm:$0xff] %v326
    %572 = vst [vmem:[#allocation2 + $0x120] sm:$0xff] %v425
    %573 = vst [vmem:[#allocation2 + $0x128] sm:$0xff] %v427
    %574 = vst [vmem:[#allocation2 + $0x130] sm:$0xff] %v526
    %575 = vst [vmem:[#allocation2 + $0x138] sm:$0xff] %v528
    %576 = vst [vmem:[#allocation2 + $0x140] sm:$0xff] %v229
    %577 = vst [vmem:[#allocation2 + $0x148] sm:$0xff] %v231
    %578 = vst [vmem:[#allocation2 + $0x150] sm:$0xff] %v330
    %579 = vst [vmem:[#allocation2 + $0x158] sm:$0xff] %v332
    %580 = vst [vmem:[#allocation2 + $0x160] sm:$0xff] %v431
    %581 = vst [vmem:[#allocation2 + $0x168] sm:$0xff] %v433
    %582 = vst [vmem:[#allocation2 + $0x170] sm:$0xff] %v532
    %583 = vst [vmem:[#allocation2 + $0x178] sm:$0xff] %v534
    %v584 = vld [vmem:[#allocation8] sm:$0xff]
    %v585 = vld [vmem:[#allocation8 + $0x8] sm:$0xff]
    %v586 = vld [vmem:[#allocation8 + $0x10] sm:$0xff]
    %v587 = vld [vmem:[#allocation8 + $0x18] sm:$0xff]
    %v588 = vld [vmem:[#allocation8 + $0x58] sm:$0xff]
    %v589 = vld [vmem:[#allocation8 + $0x60] sm:$0xff]
    %v590 = vld [vmem:[#allocation8 + $0x68] sm:$0xff]
    %v591 = vld [vmem:[#allocation8 + $0x70] sm:$0xff]
    %v592 = vld [vmem:[#allocation8 + $0xb0] sm:$0xf]
    %v593 = vld [vmem:[#allocation8 + $0xb8] sm:$0xf]
    %v594 = vld [vmem:[#allocation8 + $0xc0] sm:$0xf]
    %v595 = vld [vmem:[#allocation8 + $0xc8] sm:$0xf]
    %v596 = vld [vmem:[%s1] sm:$0xff]
    %v597 = vld [vmem:[%s1 + $0x8] sm:$0xff]
    %v598 = vld [vmem:[#allocation2] sm:$0xff]
    %v599 = vld [vmem:[#allocation2 + $0x8] sm:$0xff]
    %v600 = vld [vmem:[#allocation2 + $0x10] sm:$0xff]
    %v601 = vld [vmem:[#allocation2 + $0x18] sm:$0xff]
    %vm602 = vcmask 162816
    %v604 = vsel %vm602, %v596, 0
    %vm606 = vcmask 1043456
    %v608 = vsel %vm606, %v592, 0
    %v611 = vsel %vm606, %v593, 0
    %v614 = vsel %vm606, %v594, 0
    %v617 = vsel %vm606, %v595, 0
    %619 = vmatprep.subr.mxu0 0.0
    %620 = vmatpush1.msra.mxu0 0.0
    %621 = vmatprep.subr.mxu0 0.0
    %622 = vmatpush1.msra.mxu0 0.0
    %623 = vmatprep.subr.mxu0 0.0
    %624 = vmatpush1.msra.mxu0 0.0
    %625 = vmatprep.subr.mxu0 0.0
    %626 = vmatpush1.msra.mxu0 0.0
    %627 = vmatprep.subr.mxu0 0.0
    %628 = vmatpush1.msra.mxu0 0.0
    %629 = vmatprep.subr.mxu0 0.0
    %630 = vmatpush1.msra.mxu0 0.0
    %631 = vmatprep.subr.mxu0 0.0
    %632 = vmatpush1.msra.mxu0 0.0
    %633 = vmatprep.subr.mxu0 0.0
    %634 = vmatpush1.msra.mxu0 0.0
    %635 = vmatprep.subr.mxu0 0.0
    %636 = vmatpush1.msra.mxu0 0.0
    %637 = vmatprep.subr.mxu0 0.0
    %638 = vmatpush1.msra.mxu0 0.0
    %639 = vmatprep.subr.mxu0 0.0
    %640 = vmatpush1.msra.mxu0 0.0
    %641 = vmatprep.subr.mxu0 0.0
    %642 = vmatpush1.msra.mxu0 0.0
    %643 = vmatprep.subr.mxu0 0.0
    %644 = vmatpush1.msra.mxu0 0.0
    %645 = vmatprep.subr.mxu0 %v611
    %646 = vmatpush1.msra.mxu0 %v608
    %647 = vmatprep.subr.mxu0 %v589
    %648 = vmatpush1.msra.mxu0 %v588
    %649 = vmatprep.subr.mxu0 %v585
    %650 = vmatpush1.msra.mxu0 %v584
    %651 = vmatprep.subr.mxu0 0.0
    %652 = vmatpush2.msra.mxu0 0.0
    %653 = vmatprep.subr.mxu0 0.0
    %654 = vmatpush2.msra.mxu0 0.0
    %655 = vmatprep.subr.mxu0 0.0
    %656 = vmatpush2.msra.mxu0 0.0
    %657 = vmatprep.subr.mxu0 0.0
    %658 = vmatpush2.msra.mxu0 0.0
    %659 = vmatprep.subr.mxu0 0.0
    %660 = vmatpush2.msra.mxu0 0.0
    %661 = vmatprep.subr.mxu0 0.0
    %662 = vmatpush2.msra.mxu0 0.0
    %663 = vmatprep.subr.mxu0 0.0
    %664 = vmatpush2.msra.mxu0 0.0
    %665 = vmatprep.subr.mxu0 0.0
    %666 = vmatpush2.msra.mxu0 0.0
    %667 = vmatprep.subr.mxu0 0.0
    %668 = vmatpush2.msra.mxu0 0.0
    %669 = vmatprep.subr.mxu0 0.0
    %670 = vmatpush2.msra.mxu0 0.0
    %671 = vmatprep.subr.mxu0 0.0
    %672 = vmatpush2.msra.mxu0 0.0
    %673 = vmatprep.subr.mxu0 0.0
    %674 = vmatpush2.msra.mxu0 0.0
    %675 = vmatprep.subr.mxu0 0.0
    %676 = vmatpush2.msra.mxu0 0.0
    %677 = vmatprep.subr.mxu0 0.0
    %678 = vmatpush2.msra.mxu0 0.0
    %679 = vmatprep.subr.mxu0 0.0
    %680 = vmatpush2.msra.mxu0 0.0
    %681 = vmatprep.subr.mxu0 0.0
    %682 = vmatpush2.msra.mxu0 0.0
    %683 = vmatprep.mubr.f32.mxu0 0.0
    %684 = vmatmul.mubr.f32.gmra.mxu0 %v604
    %v685 = vpop.f32.mrf.mxu0
    %v686 = vadd.f32 0.0, %v685
    %v687 = vpop.f32.mrf.mxu0
    %v688 = vadd.f32 0.0, %v687
    %689 = vdwg.mxu0
    %690 = vmatprep.subr.mxu0 0.0
    %691 = vmatpush1.msra.mxu0 0.0
    %692 = vmatprep.subr.mxu0 0.0
    %693 = vmatpush1.msra.mxu0 0.0
    %694 = vmatprep.subr.mxu0 0.0
    %695 = vmatpush1.msra.mxu0 0.0
    %696 = vmatprep.subr.mxu0 0.0
    %697 = vmatpush1.msra.mxu0 0.0
    %698 = vmatprep.subr.mxu0 0.0
    %699 = vmatpush1.msra.mxu0 0.0
    %700 = vmatprep.subr.mxu0 0.0
    %701 = vmatpush1.msra.mxu0 0.0
    %702 = vmatprep.subr.mxu0 0.0
    %703 = vmatpush1.msra.mxu0 0.0
    %704 = vmatprep.subr.mxu0 0.0
    %705 = vmatpush1.msra.mxu0 0.0
    %706 = vmatprep.subr.mxu0 0.0
    %707 = vmatpush1.msra.mxu0 0.0
    %708 = vmatprep.subr.mxu0 0.0
    %709 = vmatpush1.msra.mxu0 0.0
    %710 = vmatprep.subr.mxu0 0.0
    %711 = vmatpush1.msra.mxu0 0.0
    %712 = vmatprep.subr.mxu0 0.0
    %713 = vmatpush1.msra.mxu0 0.0
    %714 = vmatprep.subr.mxu0 0.0
    %715 = vmatpush1.msra.mxu0 0.0
    %716 = vmatprep.subr.mxu0 %v617
    %717 = vmatpush1.msra.mxu0 %v614
    %718 = vmatprep.subr.mxu0 %v591
    %719 = vmatpush1.msra.mxu0 %v590
    %720 = vmatprep.subr.mxu0 %v587
    %721 = vmatpush1.msra.mxu0 %v586
    %722 = vmatprep.subr.mxu0 0.0
    %723 = vmatpush2.msra.mxu0 0.0
    %724 = vmatprep.subr.mxu0 0.0
    %725 = vmatpush2.msra.mxu0 0.0
    %726 = vmatprep.subr.mxu0 0.0
    %727 = vmatpush2.msra.mxu0 0.0
    %728 = vmatprep.subr.mxu0 0.0
    %729 = vmatpush2.msra.mxu0 0.0
    %730 = vmatprep.subr.mxu0 0.0
    %731 = vmatpush2.msra.mxu0 0.0
    %732 = vmatprep.subr.mxu0 0.0
    %733 = vmatpush2.msra.mxu0 0.0
    %734 = vmatprep.subr.mxu0 0.0
    %735 = vmatpush2.msra.mxu0 0.0
    %736 = vmatprep.subr.mxu0 0.0
    %737 = vmatpush2.msra.mxu0 0.0
    %738 = vmatprep.subr.mxu0 0.0
    %739 = vmatpush2.msra.mxu0 0.0
    %740 = vmatprep.subr.mxu0 0.0
    %741 = vmatpush2.msra.mxu0 0.0
    %742 = vmatprep.subr.mxu0 0.0
    %743 = vmatpush2.msra.mxu0 0.0
    %744 = vmatprep.subr.mxu0 0.0
    %745 = vmatpush2.msra.mxu0 0.0
    %746 = vmatprep.subr.mxu0 0.0
    %747 = vmatpush2.msra.mxu0 0.0
    %748 = vmatprep.subr.mxu0 0.0
    %749 = vmatpush2.msra.mxu0 0.0
    %750 = vmatprep.subr.mxu0 0.0
    %751 = vmatpush2.msra.mxu0 0.0
    %752 = vmatprep.subr.mxu0 0.0
    %753 = vmatpush2.msra.mxu0 0.0
    %754 = vmatprep.mubr.f32.mxu0 0.0
    %755 = vmatmul.mubr.f32.gmra.mxu0 %v604
    %v756 = vpop.f32.mrf.mxu0
    %v757 = vadd.f32 0.0, %v756
    %v758 = vpop.f32.mrf.mxu0
    %v759 = vadd.f32 0.0, %v758
    %760 = vdwg.mxu0
    %v761 = vadd.f32 %v598, %v686
    %v762 = vadd.f32 %v599, %v688
    %v763 = vadd.f32 %v600, %v757
    %v764 = vadd.f32 %v601, %v759
    %v765 = vxor.u32 %v761, 2147483648
    %v766 = vmul.f32 %v765, 1.442695
    %v767 = vpow.pop %v766
    %v768 = vadd.f32 %v767, 1.0
    %v769 = vrcp.pop %v768
    %v770 = vmul.f32 1.0, %v769
    %v771 = vxor.u32 %v762, 2147483648
    %v772 = vmul.f32 %v771, 1.442695
    %v773 = vpow.pop %v772
    %v774 = vadd.f32 %v773, 1.0
    %v775 = vrcp.pop %v774
    %v776 = vmul.f32 1.0, %v775
    %v777 = vtanh.pop %v763
    %v778 = vxor.u32 %v764, 2147483648
    %v779 = vmul.f32 %v778, 1.442695
    %v780 = vpow.pop %v779
    %v781 = vadd.f32 %v780, 1.0
    %v782 = vrcp.pop %v781
    %v783 = vmul.f32 1.0, %v782
    %v784 = vmul.f32 %v776, %v597
    %v785 = vmul.f32 %v770, %v777
    %v786 = vadd.f32 %v784, %v785
    %v787 = vtanh.pop %v786
    %v788 = vmul.f32 %v783, %v787
    %v789 = vld [vmem:[#allocation2 + $0x40] sm:$0xff]
    %v790 = vld [vmem:[#allocation2 + $0x48] sm:$0xff]
    %v791 = vld [vmem:[#allocation2 + $0x50] sm:$0xff]
    %v792 = vld [vmem:[#allocation2 + $0x58] sm:$0xff]
    %v794 = vsel %vm602, %v788, 0
    %796 = vmatprep.subr.mxu0 0.0
    %797 = vmatpush1.msra.mxu0 0.0
    %798 = vmatprep.subr.mxu0 0.0
    %799 = vmatpush1.msra.mxu0 0.0
    %800 = vmatprep.subr.mxu0 0.0
    %801 = vmatpush1.msra.mxu0 0.0
    %802 = vmatprep.subr.mxu0 0.0
    %803 = vmatpush1.msra.mxu0 0.0
    %804 = vmatprep.subr.mxu0 0.0
    %805 = vmatpush1.msra.mxu0 0.0
    %806 = vmatprep.subr.mxu0 0.0
    %807 = vmatpush1.msra.mxu0 0.0
    %808 = vmatprep.subr.mxu0 0.0
    %809 = vmatpush1.msra.mxu0 0.0
    %810 = vmatprep.subr.mxu0 0.0
    %811 = vmatpush1.msra.mxu0 0.0
    %812 = vmatprep.subr.mxu0 0.0
    %813 = vmatpush1.msra.mxu0 0.0
    %814 = vmatprep.subr.mxu0 0.0
    %815 = vmatpush1.msra.mxu0 0.0
    %816 = vmatprep.subr.mxu0 0.0
    %817 = vmatpush1.msra.mxu0 0.0
    %818 = vmatprep.subr.mxu0 0.0
    %819 = vmatpush1.msra.mxu0 0.0
    %820 = vmatprep.subr.mxu0 0.0
    %821 = vmatpush1.msra.mxu0 0.0
    %822 = vmatprep.subr.mxu0 %v611
    %823 = vmatpush1.msra.mxu0 %v608
    %824 = vmatprep.subr.mxu0 %v589
    %825 = vmatpush1.msra.mxu0 %v588
    %826 = vmatprep.subr.mxu0 %v585
    %827 = vmatpush1.msra.mxu0 %v584
    %828 = vmatprep.subr.mxu0 0.0
    %829 = vmatpush2.msra.mxu0 0.0
    %830 = vmatprep.subr.mxu0 0.0
    %831 = vmatpush2.msra.mxu0 0.0
    %832 = vmatprep.subr.mxu0 0.0
    %833 = vmatpush2.msra.mxu0 0.0
    %834 = vmatprep.subr.mxu0 0.0
    %835 = vmatpush2.msra.mxu0 0.0
    %836 = vmatprep.subr.mxu0 0.0
    %837 = vmatpush2.msra.mxu0 0.0
    %838 = vmatprep.subr.mxu0 0.0
    %839 = vmatpush2.msra.mxu0 0.0
    %840 = vmatprep.subr.mxu0 0.0
    %841 = vmatpush2.msra.mxu0 0.0
    %842 = vmatprep.subr.mxu0 0.0
    %843 = vmatpush2.msra.mxu0 0.0
    %844 = vmatprep.subr.mxu0 0.0
    %845 = vmatpush2.msra.mxu0 0.0
    %846 = vmatprep.subr.mxu0 0.0
    %847 = vmatpush2.msra.mxu0 0.0
    %848 = vmatprep.subr.mxu0 0.0
    %849 = vmatpush2.msra.mxu0 0.0
    %850 = vmatprep.subr.mxu0 0.0
    %851 = vmatpush2.msra.mxu0 0.0
    %852 = vmatprep.subr.mxu0 0.0
    %853 = vmatpush2.msra.mxu0 0.0
    %854 = vmatprep.subr.mxu0 0.0
    %855 = vmatpush2.msra.mxu0 0.0
    %856 = vmatprep.subr.mxu0 0.0
    %857 = vmatpush2.msra.mxu0 0.0
    %858 = vmatprep.subr.mxu0 0.0
    %859 = vmatpush2.msra.mxu0 0.0
    %860 = vmatprep.mubr.f32.mxu0 0.0
    %861 = vmatmul.mubr.f32.gmra.mxu0 %v794
    %v862 = vpop.f32.mrf.mxu0
    %v863 = vadd.f32 0.0, %v862
    %v864 = vpop.f32.mrf.mxu0
    %v865 = vadd.f32 0.0, %v864
    %866 = vdwg.mxu0
    %867 = vmatprep.subr.mxu0 0.0
    %868 = vmatpush1.msra.mxu0 0.0
    %869 = vmatprep.subr.mxu0 0.0
    %870 = vmatpush1.msra.mxu0 0.0
    %871 = vmatprep.subr.mxu0 0.0
    %872 = vmatpush1.msra.mxu0 0.0
    %873 = vmatprep.subr.mxu0 0.0
    %874 = vmatpush1.msra.mxu0 0.0
    %875 = vmatprep.subr.mxu0 0.0
    %876 = vmatpush1.msra.mxu0 0.0
    %877 = vmatprep.subr.mxu0 0.0
    %878 = vmatpush1.msra.mxu0 0.0
    %879 = vmatprep.subr.mxu0 0.0
    %880 = vmatpush1.msra.mxu0 0.0
    %881 = vmatprep.subr.mxu0 0.0
    %882 = vmatpush1.msra.mxu0 0.0
    %883 = vmatprep.subr.mxu0 0.0
    %884 = vmatpush1.msra.mxu0 0.0
    %885 = vmatprep.subr.mxu0 0.0
    %886 = vmatpush1.msra.mxu0 0.0
    %887 = vmatprep.subr.mxu0 0.0
    %888 = vmatpush1.msra.mxu0 0.0
    %889 = vmatprep.subr.mxu0 0.0
    %890 = vmatpush1.msra.mxu0 0.0
    %891 = vmatprep.subr.mxu0 0.0
    %892 = vmatpush1.msra.mxu0 0.0
    %893 = vmatprep.subr.mxu0 %v617
    %894 = vmatpush1.msra.mxu0 %v614
    %895 = vmatprep.subr.mxu0 %v591
    %896 = vmatpush1.msra.mxu0 %v590
    %897 = vmatprep.subr.mxu0 %v587
    %898 = vmatpush1.msra.mxu0 %v586
    %899 = vmatprep.subr.mxu0 0.0
    %900 = vmatpush2.msra.mxu0 0.0
    %901 = vmatprep.subr.mxu0 0.0
    %902 = vmatpush2.msra.mxu0 0.0
    %903 = vmatprep.subr.mxu0 0.0
    %904 = vmatpush2.msra.mxu0 0.0
    %905 = vmatprep.subr.mxu0 0.0
    %906 = vmatpush2.msra.mxu0 0.0
    %907 = vmatprep.subr.mxu0 0.0
    %908 = vmatpush2.msra.mxu0 0.0
    %909 = vmatprep.subr.mxu0 0.0
    %910 = vmatpush2.msra.mxu0 0.0
    %911 = vmatprep.subr.mxu0 0.0
    %912 = vmatpush2.msra.mxu0 0.0
    %913 = vmatprep.subr.mxu0 0.0
    %914 = vmatpush2.msra.mxu0 0.0
    %915 = vmatprep.subr.mxu0 0.0
    %916 = vmatpush2.msra.mxu0 0.0
    %917 = vmatprep.subr.mxu0 0.0
    %918 = vmatpush2.msra.mxu0 0.0
    %919 = vmatprep.subr.mxu0 0.0
    %920 = vmatpush2.msra.mxu0 0.0
    %921 = vmatprep.subr.mxu0 0.0
    %922 = vmatpush2.msra.mxu0 0.0
    %923 = vmatprep.subr.mxu0 0.0
    %924 = vmatpush2.msra.mxu0 0.0
    %925 = vmatprep.subr.mxu0 0.0
    %926 = vmatpush2.msra.mxu0 0.0
    %927 = vmatprep.subr.mxu0 0.0
    %928 = vmatpush2.msra.mxu0 0.0
    %929 = vmatprep.subr.mxu0 0.0
    %930 = vmatpush2.msra.mxu0 0.0
    %931 = vmatprep.mubr.f32.mxu0 0.0
    %932 = vmatmul.mubr.f32.gmra.mxu0 %v794
    %v933 = vpop.f32.mrf.mxu0
    %v934 = vadd.f32 0.0, %v933
    %v935 = vpop.f32.mrf.mxu0
    %v936 = vadd.f32 0.0, %v935
    %937 = vdwg.mxu0
    %v938 = vadd.f32 %v789, %v863
    %v939 = vadd.f32 %v790, %v865
    %v940 = vadd.f32 %v791, %v934
    %v941 = vadd.f32 %v792, %v936
    %v942 = vxor.u32 %v938, 2147483648
    %v943 = vmul.f32 %v942, 1.442695
    %v944 = vpow.pop %v943
    %v945 = vadd.f32 %v944, 1.0
    %v946 = vrcp.pop %v945
    %v947 = vmul.f32 1.0, %v946
    %v948 = vxor.u32 %v939, 2147483648
    %v949 = vmul.f32 %v948, 1.442695
    %v950 = vpow.pop %v949
    %v951 = vadd.f32 %v950, 1.0
    %v952 = vrcp.pop %v951
    %v953 = vmul.f32 1.0, %v952
    %v954 = vtanh.pop %v940
    %v955 = vxor.u32 %v941, 2147483648
    %v956 = vmul.f32 %v955, 1.442695
    %v957 = vpow.pop %v956
    %v958 = vadd.f32 %v957, 1.0
    %v959 = vrcp.pop %v958
    %v960 = vmul.f32 1.0, %v959
    %v961 = vmul.f32 %v953, %v786
    %v962 = vmul.f32 %v947, %v954
    %v963 = vadd.f32 %v961, %v962
    %v964 = vtanh.pop %v963
    %v965 = vmul.f32 %v960, %v964
    %v966 = vld [vmem:[#allocation2 + $0x80] sm:$0xff]
    %v967 = vld [vmem:[#allocation2 + $0x88] sm:$0xff]
    %v968 = vld [vmem:[#allocation2 + $0x90] sm:$0xff]
    %v969 = vld [vmem:[#allocation2 + $0x98] sm:$0xff]
    %v971 = vsel %vm602, %v965, 0
    %973 = vmatprep.subr.mxu0 0.0
    %974 = vmatpush1.msra.mxu0 0.0
    %975 = vmatprep.subr.mxu0 0.0
    %976 = vmatpush1.msra.mxu0 0.0
    %977 = vmatprep.subr.mxu0 0.0
    %978 = vmatpush1.msra.mxu0 0.0
    %979 = vmatprep.subr.mxu0 0.0
    %980 = vmatpush1.msra.mxu0 0.0
    %981 = vmatprep.subr.mxu0 0.0
    %982 = vmatpush1.msra.mxu0 0.0
    %983 = vmatprep.subr.mxu0 0.0
    %984 = vmatpush1.msra.mxu0 0.0
    %985 = vmatprep.subr.mxu0 0.0
    %986 = vmatpush1.msra.mxu0 0.0
    %987 = vmatprep.subr.mxu0 0.0
    %988 = vmatpush1.msra.mxu0 0.0
    %989 = vmatprep.subr.mxu0 0.0
    %990 = vmatpush1.msra.mxu0 0.0
    %991 = vmatprep.subr.mxu0 0.0
    %992 = vmatpush1.msra.mxu0 0.0
    %993 = vmatprep.subr.mxu0 0.0
    %994 = vmatpush1.msra.mxu0 0.0
    %995 = vmatprep.subr.mxu0 0.0
    %996 = vmatpush1.msra.mxu0 0.0
    %997 = vmatprep.subr.mxu0 0.0
    %998 = vmatpush1.msra.mxu0 0.0
    %999 = vmatprep.subr.mxu0 %v611
    %1000 = vmatpush1.msra.mxu0 %v608
    %1001 = vmatprep.subr.mxu0 %v589
    %1002 = vmatpush1.msra.mxu0 %v588
    %1003 = vmatprep.subr.mxu0 %v585
    %1004 = vmatpush1.msra.mxu0 %v584
    %1005 = vmatprep.subr.mxu0 0.0
    %1006 = vmatpush2.msra.mxu0 0.0
    %1007 = vmatprep.subr.mxu0 0.0
    %1008 = vmatpush2.msra.mxu0 0.0
    %1009 = vmatprep.subr.mxu0 0.0
    %1010 = vmatpush2.msra.mxu0 0.0
    %1011 = vmatprep.subr.mxu0 0.0
    %1012 = vmatpush2.msra.mxu0 0.0
    %1013 = vmatprep.subr.mxu0 0.0
    %1014 = vmatpush2.msra.mxu0 0.0
    %1015 = vmatprep.subr.mxu0 0.0
    %1016 = vmatpush2.msra.mxu0 0.0
    %1017 = vmatprep.subr.mxu0 0.0
    %1018 = vmatpush2.msra.mxu0 0.0
    %1019 = vmatprep.subr.mxu0 0.0
    %1020 = vmatpush2.msra.mxu0 0.0
    %1021 = vmatprep.subr.mxu0 0.0
    %1022 = vmatpush2.msra.mxu0 0.0
    %1023 = vmatprep.subr.mxu0 0.0
    %1024 = vmatpush2.msra.mxu0 0.0
    %1025 = vmatprep.subr.mxu0 0.0
    %1026 = vmatpush2.msra.mxu0 0.0
    %1027 = vmatprep.subr.mxu0 0.0
    %1028 = vmatpush2.msra.mxu0 0.0
    %1029 = vmatprep.subr.mxu0 0.0
    %1030 = vmatpush2.msra.mxu0 0.0
    %1031 = vmatprep.subr.mxu0 0.0
    %1032 = vmatpush2.msra.mxu0 0.0
    %1033 = vmatprep.subr.mxu0 0.0
    %1034 = vmatpush2.msra.mxu0 0.0
    %1035 = vmatprep.subr.mxu0 0.0
    %1036 = vmatpush2.msra.mxu0 0.0
    %1037 = vmatprep.mubr.f32.mxu0 0.0
    %1038 = vmatmul.mubr.f32.gmra.mxu0 %v971
    %v1039 = vpop.f32.mrf.mxu0
    %v1040 = vadd.f32 0.0, %v1039
    %v1041 = vpop.f32.mrf.mxu0
    %v1042 = vadd.f32 0.0, %v1041
    %1043 = vdwg.mxu0
    %1044 = vmatprep.subr.mxu0 0.0
    %1045 = vmatpush1.msra.mxu0 0.0
    %1046 = vmatprep.subr.mxu0 0.0
    %1047 = vmatpush1.msra.mxu0 0.0
    %1048 = vmatprep.subr.mxu0 0.0
    %1049 = vmatpush1.msra.mxu0 0.0
    %1050 = vmatprep.subr.mxu0 0.0
    %1051 = vmatpush1.msra.mxu0 0.0
    %1052 = vmatprep.subr.mxu0 0.0
    %1053 = vmatpush1.msra.mxu0 0.0
    %1054 = vmatprep.subr.mxu0 0.0
    %1055 = vmatpush1.msra.mxu0 0.0
    %1056 = vmatprep.subr.mxu0 0.0
    %1057 = vmatpush1.msra.mxu0 0.0
    %1058 = vmatprep.subr.mxu0 0.0
    %1059 = vmatpush1.msra.mxu0 0.0
    %1060 = vmatprep.subr.mxu0 0.0
    %1061 = vmatpush1.msra.mxu0 0.0
    %1062 = vmatprep.subr.mxu0 0.0
    %1063 = vmatpush1.msra.mxu0 0.0
    %1064 = vmatprep.subr.mxu0 0.0
    %1065 = vmatpush1.msra.mxu0 0.0
    %1066 = vmatprep.subr.mxu0 0.0
    %1067 = vmatpush1.msra.mxu0 0.0
    %1068 = vmatprep.subr.mxu0 0.0
    %1069 = vmatpush1.msra.mxu0 0.0
    %1070 = vmatprep.subr.mxu0 %v617
    %1071 = vmatpush1.msra.mxu0 %v614
    %1072 = vmatprep.subr.mxu0 %v591
    %1073 = vmatpush1.msra.mxu0 %v590
    %1074 = vmatprep.subr.mxu0 %v587
    %1075 = vmatpush1.msra.mxu0 %v586
    %1076 = vmatprep.subr.mxu0 0.0
    %1077 = vmatpush2.msra.mxu0 0.0
    %1078 = vmatprep.subr.mxu0 0.0
    %1079 = vmatpush2.msra.mxu0 0.0
    %1080 = vmatprep.subr.mxu0 0.0
    %1081 = vmatpush2.msra.mxu0 0.0
    %1082 = vmatprep.subr.mxu0 0.0
    %1083 = vmatpush2.msra.mxu0 0.0
    %1084 = vmatprep.subr.mxu0 0.0
    %1085 = vmatpush2.msra.mxu0 0.0
    %1086 = vmatprep.subr.mxu0 0.0
    %1087 = vmatpush2.msra.mxu0 0.0
    %1088 = vmatprep.subr.mxu0 0.0
    %1089 = vmatpush2.msra.mxu0 0.0
    %1090 = vmatprep.subr.mxu0 0.0
    %1091 = vmatpush2.msra.mxu0 0.0
    %1092 = vmatprep.subr.mxu0 0.0
    %1093 = vmatpush2.msra.mxu0 0.0
    %1094 = vmatprep.subr.mxu0 0.0
    %1095 = vmatpush2.msra.mxu0 0.0
    %1096 = vmatprep.subr.mxu0 0.0
    %1097 = vmatpush2.msra.mxu0 0.0
    %1098 = vmatprep.subr.mxu0 0.0
    %1099 = vmatpush2.msra.mxu0 0.0
    %1100 = vmatprep.subr.mxu0 0.0
    %1101 = vmatpush2.msra.mxu0 0.0
    %1102 = vmatprep.subr.mxu0 0.0
    %1103 = vmatpush2.msra.mxu0 0.0
    %1104 = vmatprep.subr.mxu0 0.0
    %1105 = vmatpush2.msra.mxu0 0.0
    %1106 = vmatprep.subr.mxu0 0.0
    %1107 = vmatpush2.msra.mxu0 0.0
    %1108 = vmatprep.mubr.f32.mxu0 0.0
    %1109 = vmatmul.mubr.f32.gmra.mxu0 %v971
    %v1110 = vpop.f32.mrf.mxu0
    %v1111 = vadd.f32 0.0, %v1110
    %v1112 = vpop.f32.mrf.mxu0
    %v1113 = vadd.f32 0.0, %v1112
    %1114 = vdwg.mxu0
    %v1115 = vadd.f32 %v966, %v1040
    %v1116 = vadd.f32 %v967, %v1042
    %v1117 = vadd.f32 %v968, %v1111
    %v1118 = vadd.f32 %v969, %v1113
    %v1119 = vxor.u32 %v1115, 2147483648
    %v1120 = vmul.f32 %v1119, 1.442695
    %v1121 = vpow.pop %v1120
    %v1122 = vadd.f32 %v1121, 1.0
    %v1123 = vrcp.pop %v1122
    %v1124 = vmul.f32 1.0, %v1123
    %v1125 = vxor.u32 %v1116, 2147483648
    %v1126 = vmul.f32 %v1125, 1.442695
    %v1127 = vpow.pop %v1126
    %v1128 = vadd.f32 %v1127, 1.0
    %v1129 = vrcp.pop %v1128
    %v1130 = vmul.f32 1.0, %v1129
    %v1131 = vtanh.pop %v1117
    %v1132 = vxor.u32 %v1118, 2147483648
    %v1133 = vmul.f32 %v1132, 1.442695
    %v1134 = vpow.pop %v1133
    %v1135 = vadd.f32 %v1134, 1.0
    %v1136 = vrcp.pop %v1135
    %v1137 = vmul.f32 1.0, %v1136
    %v1138 = vmul.f32 %v1130, %v963
    %v1139 = vmul.f32 %v1124, %v1131
    %v1140 = vadd.f32 %v1138, %v1139
    %v1141 = vtanh.pop %v1140
    %v1142 = vmul.f32 %v1137, %v1141
    %v1143 = vld [vmem:[#allocation2 + $0xc0] sm:$0xff]
    %v1144 = vld [vmem:[#allocation2 + $0xc8] sm:$0xff]
    %v1145 = vld [vmem:[#allocation2 + $0xd0] sm:$0xff]
    %v1146 = vld [vmem:[#allocation2 + $0xd8] sm:$0xff]
    %v1148 = vsel %vm602, %v1142, 0
    %1150 = vmatprep.subr.mxu0 0.0
    %1151 = vmatpush1.msra.mxu0 0.0
    %1152 = vmatprep.subr.mxu0 0.0
    %1153 = vmatpush1.msra.mxu0 0.0
    %1154 = vmatprep.subr.mxu0 0.0
    %1155 = vmatpush1.msra.mxu0 0.0
    %1156 = vmatprep.subr.mxu0 0.0
    %1157 = vmatpush1.msra.mxu0 0.0
    %1158 = vmatprep.subr.mxu0 0.0
    %1159 = vmatpush1.msra.mxu0 0.0
    %1160 = vmatprep.subr.mxu0 0.0
    %1161 = vmatpush1.msra.mxu0 0.0
    %1162 = vmatprep.subr.mxu0 0.0
    %1163 = vmatpush1.msra.mxu0 0.0
    %1164 = vmatprep.subr.mxu0 0.0
    %1165 = vmatpush1.msra.mxu0 0.0
    %1166 = vmatprep.subr.mxu0 0.0
    %1167 = vmatpush1.msra.mxu0 0.0
    %1168 = vmatprep.subr.mxu0 0.0
    %1169 = vmatpush1.msra.mxu0 0.0
    %1170 = vmatprep.subr.mxu0 0.0
    %1171 = vmatpush1.msra.mxu0 0.0
    %1172 = vmatprep.subr.mxu0 0.0
    %1173 = vmatpush1.msra.mxu0 0.0
    %1174 = vmatprep.subr.mxu0 0.0
    %1175 = vmatpush1.msra.mxu0 0.0
    %1176 = vmatprep.subr.mxu0 %v611
    %1177 = vmatpush1.msra.mxu0 %v608
    %1178 = vmatprep.subr.mxu0 %v589
    %1179 = vmatpush1.msra.mxu0 %v588
    %1180 = vmatprep.subr.mxu0 %v585
    %1181 = vmatpush1.msra.mxu0 %v584
    %1182 = vmatprep.subr.mxu0 0.0
    %1183 = vmatpush2.msra.mxu0 0.0
    %1184 = vmatprep.subr.mxu0 0.0
    %1185 = vmatpush2.msra.mxu0 0.0
    %1186 = vmatprep.subr.mxu0 0.0
    %1187 = vmatpush2.msra.mxu0 0.0
    %1188 = vmatprep.subr.mxu0 0.0
    %1189 = vmatpush2.msra.mxu0 0.0
    %1190 = vmatprep.subr.mxu0 0.0
    %1191 = vmatpush2.msra.mxu0 0.0
    %1192 = vmatprep.subr.mxu0 0.0
    %1193 = vmatpush2.msra.mxu0 0.0
    %1194 = vmatprep.subr.mxu0 0.0
    %1195 = vmatpush2.msra.mxu0 0.0
    %1196 = vmatprep.subr.mxu0 0.0
    %1197 = vmatpush2.msra.mxu0 0.0
    %1198 = vmatprep.subr.mxu0 0.0
    %1199 = vmatpush2.msra.mxu0 0.0
    %1200 = vmatprep.subr.mxu0 0.0
    %1201 = vmatpush2.msra.mxu0 0.0
    %1202 = vmatprep.subr.mxu0 0.0
    %1203 = vmatpush2.msra.mxu0 0.0
    %1204 = vmatprep.subr.mxu0 0.0
    %1205 = vmatpush2.msra.mxu0 0.0
    %1206 = vmatprep.subr.mxu0 0.0
    %1207 = vmatpush2.msra.mxu0 0.0
    %1208 = vmatprep.subr.mxu0 0.0
    %1209 = vmatpush2.msra.mxu0 0.0
    %1210 = vmatprep.subr.mxu0 0.0
    %1211 = vmatpush2.msra.mxu0 0.0
    %1212 = vmatprep.subr.mxu0 0.0
    %1213 = vmatpush2.msra.mxu0 0.0
    %1214 = vmatprep.mubr.f32.mxu0 0.0
    %1215 = vmatmul.mubr.f32.gmra.mxu0 %v1148
    %v1216 = vpop.f32.mrf.mxu0
    %v1217 = vadd.f32 0.0, %v1216
    %v1218 = vpop.f32.mrf.mxu0
    %v1219 = vadd.f32 0.0, %v1218
    %1220 = vdwg.mxu0
    %1221 = vmatprep.subr.mxu0 0.0
    %1222 = vmatpush1.msra.mxu0 0.0
    %1223 = vmatprep.subr.mxu0 0.0
    %1224 = vmatpush1.msra.mxu0 0.0
    %1225 = vmatprep.subr.mxu0 0.0
    %1226 = vmatpush1.msra.mxu0 0.0
    %1227 = vmatprep.subr.mxu0 0.0
    %1228 = vmatpush1.msra.mxu0 0.0
    %1229 = vmatprep.subr.mxu0 0.0
    %1230 = vmatpush1.msra.mxu0 0.0
    %1231 = vmatprep.subr.mxu0 0.0
    %1232 = vmatpush1.msra.mxu0 0.0
    %1233 = vmatprep.subr.mxu0 0.0
    %1234 = vmatpush1.msra.mxu0 0.0
    %1235 = vmatprep.subr.mxu0 0.0
    %1236 = vmatpush1.msra.mxu0 0.0
    %1237 = vmatprep.subr.mxu0 0.0
    %1238 = vmatpush1.msra.mxu0 0.0
    %1239 = vmatprep.subr.mxu0 0.0
    %1240 = vmatpush1.msra.mxu0 0.0
    %1241 = vmatprep.subr.mxu0 0.0
    %1242 = vmatpush1.msra.mxu0 0.0
    %1243 = vmatprep.subr.mxu0 0.0
    %1244 = vmatpush1.msra.mxu0 0.0
    %1245 = vmatprep.subr.mxu0 0.0
    %1246 = vmatpush1.msra.mxu0 0.0
    %1247 = vmatprep.subr.mxu0 %v617
    %1248 = vmatpush1.msra.mxu0 %v614
    %1249 = vmatprep.subr.mxu0 %v591
    %1250 = vmatpush1.msra.mxu0 %v590
    %1251 = vmatprep.subr.mxu0 %v587
    %1252 = vmatpush1.msra.mxu0 %v586
    %1253 = vmatprep.subr.mxu0 0.0
    %1254 = vmatpush2.msra.mxu0 0.0
    %1255 = vmatprep.subr.mxu0 0.0
    %1256 = vmatpush2.msra.mxu0 0.0
    %1257 = vmatprep.subr.mxu0 0.0
    %1258 = vmatpush2.msra.mxu0 0.0
    %1259 = vmatprep.subr.mxu0 0.0
    %1260 = vmatpush2.msra.mxu0 0.0
    %1261 = vmatprep.subr.mxu0 0.0
    %1262 = vmatpush2.msra.mxu0 0.0
    %1263 = vmatprep.subr.mxu0 0.0
    %1264 = vmatpush2.msra.mxu0 0.0
    %1265 = vmatprep.subr.mxu0 0.0
    %1266 = vmatpush2.msra.mxu0 0.0
    %1267 = vmatprep.subr.mxu0 0.0
    %1268 = vmatpush2.msra.mxu0 0.0
    %1269 = vmatprep.subr.mxu0 0.0
    %1270 = vmatpush2.msra.mxu0 0.0
    %1271 = vmatprep.subr.mxu0 0.0
    %1272 = vmatpush2.msra.mxu0 0.0
    %1273 = vmatprep.subr.mxu0 0.0
    %1274 = vmatpush2.msra.mxu0 0.0
    %1275 = vmatprep.subr.mxu0 0.0
    %1276 = vmatpush2.msra.mxu0 0.0
    %1277 = vmatprep.subr.mxu0 0.0
    %1278 = vmatpush2.msra.mxu0 0.0
    %1279 = vmatprep.subr.mxu0 0.0
    %1280 = vmatpush2.msra.mxu0 0.0
    %1281 = vmatprep.subr.mxu0 0.0
    %1282 = vmatpush2.msra.mxu0 0.0
    %1283 = vmatprep.subr.mxu0 0.0
    %1284 = vmatpush2.msra.mxu0 0.0
    %1285 = vmatprep.mubr.f32.mxu0 0.0
    %1286 = vmatmul.mubr.f32.gmra.mxu0 %v1148
    %v1287 = vpop.f32.mrf.mxu0
    %v1288 = vadd.f32 0.0, %v1287
    %v1289 = vpop.f32.mrf.mxu0
    %v1290 = vadd.f32 0.0, %v1289
    %1291 = vdwg.mxu0
    %v1292 = vadd.f32 %v1143, %v1217
    %v1293 = vadd.f32 %v1144, %v1219
    %v1294 = vadd.f32 %v1145, %v1288
    %v1295 = vadd.f32 %v1146, %v1290
    %v1296 = vxor.u32 %v1292, 2147483648
    %v1297 = vmul.f32 %v1296, 1.442695
    %v1298 = vpow.pop %v1297
    %v1299 = vadd.f32 %v1298, 1.0
    %v1300 = vrcp.pop %v1299
    %v1301 = vmul.f32 1.0, %v1300
    %v1302 = vxor.u32 %v1293, 2147483648
    %v1303 = vmul.f32 %v1302, 1.442695
    %v1304 = vpow.pop %v1303
    %v1305 = vadd.f32 %v1304, 1.0
    %v1306 = vrcp.pop %v1305
    %v1307 = vmul.f32 1.0, %v1306
    %v1308 = vtanh.pop %v1294
    %v1309 = vxor.u32 %v1295, 2147483648
    %v1310 = vmul.f32 %v1309, 1.442695
    %v1311 = vpow.pop %v1310
    %v1312 = vadd.f32 %v1311, 1.0
    %v1313 = vrcp.pop %v1312
    %v1314 = vmul.f32 1.0, %v1313
    %v1315 = vmul.f32 %v1307, %v1140
    %v1316 = vmul.f32 %v1301, %v1308
    %v1317 = vadd.f32 %v1315, %v1316
    %v1318 = vtanh.pop %v1317
    %v1319 = vmul.f32 %v1314, %v1318
    %v1320 = vld [vmem:[#allocation2 + $0x100] sm:$0xff]
    %v1321 = vld [vmem:[#allocation2 + $0x108] sm:$0xff]
    %v1322 = vld [vmem:[#allocation2 + $0x110] sm:$0xff]
    %v1323 = vld [vmem:[#allocation2 + $0x118] sm:$0xff]
    %v1325 = vsel %vm602, %v1319, 0
    %1327 = vmatprep.subr.mxu0 0.0
    %1328 = vmatpush1.msra.mxu0 0.0
    %1329 = vmatprep.subr.mxu0 0.0
    %1330 = vmatpush1.msra.mxu0 0.0
    %1331 = vmatprep.subr.mxu0 0.0
    %1332 = vmatpush1.msra.mxu0 0.0
    %1333 = vmatprep.subr.mxu0 0.0
    %1334 = vmatpush1.msra.mxu0 0.0
    %1335 = vmatprep.subr.mxu0 0.0
    %1336 = vmatpush1.msra.mxu0 0.0
    %1337 = vmatprep.subr.mxu0 0.0
    %1338 = vmatpush1.msra.mxu0 0.0
    %1339 = vmatprep.subr.mxu0 0.0
    %1340 = vmatpush1.msra.mxu0 0.0
    %1341 = vmatprep.subr.mxu0 0.0
    %1342 = vmatpush1.msra.mxu0 0.0
    %1343 = vmatprep.subr.mxu0 0.0
    %1344 = vmatpush1.msra.mxu0 0.0
    %1345 = vmatprep.subr.mxu0 0.0
    %1346 = vmatpush1.msra.mxu0 0.0
    %1347 = vmatprep.subr.mxu0 0.0
    %1348 = vmatpush1.msra.mxu0 0.0
    %1349 = vmatprep.subr.mxu0 0.0
    %1350 = vmatpush1.msra.mxu0 0.0
    %1351 = vmatprep.subr.mxu0 0.0
    %1352 = vmatpush1.msra.mxu0 0.0
    %1353 = vmatprep.subr.mxu0 %v611
    %1354 = vmatpush1.msra.mxu0 %v608
    %1355 = vmatprep.subr.mxu0 %v589
    %1356 = vmatpush1.msra.mxu0 %v588
    %1357 = vmatprep.subr.mxu0 %v585
    %1358 = vmatpush1.msra.mxu0 %v584
    %1359 = vmatprep.subr.mxu0 0.0
    %1360 = vmatpush2.msra.mxu0 0.0
    %1361 = vmatprep.subr.mxu0 0.0
    %1362 = vmatpush2.msra.mxu0 0.0
    %1363 = vmatprep.subr.mxu0 0.0
    %1364 = vmatpush2.msra.mxu0 0.0
    %1365 = vmatprep.subr.mxu0 0.0
    %1366 = vmatpush2.msra.mxu0 0.0
    %1367 = vmatprep.subr.mxu0 0.0
    %1368 = vmatpush2.msra.mxu0 0.0
    %1369 = vmatprep.subr.mxu0 0.0
    %1370 = vmatpush2.msra.mxu0 0.0
    %1371 = vmatprep.subr.mxu0 0.0
    %1372 = vmatpush2.msra.mxu0 0.0
    %1373 = vmatprep.subr.mxu0 0.0
    %1374 = vmatpush2.msra.mxu0 0.0
    %1375 = vmatprep.subr.mxu0 0.0
    %1376 = vmatpush2.msra.mxu0 0.0
    %1377 = vmatprep.subr.mxu0 0.0
    %1378 = vmatpush2.msra.mxu0 0.0
    %1379 = vmatprep.subr.mxu0 0.0
    %1380 = vmatpush2.msra.mxu0 0.0
    %1381 = vmatprep.subr.mxu0 0.0
    %1382 = vmatpush2.msra.mxu0 0.0
    %1383 = vmatprep.subr.mxu0 0.0
    %1384 = vmatpush2.msra.mxu0 0.0
    %1385 = vmatprep.subr.mxu0 0.0
    %1386 = vmatpush2.msra.mxu0 0.0
    %1387 = vmatprep.subr.mxu0 0.0
    %1388 = vmatpush2.msra.mxu0 0.0
    %1389 = vmatprep.subr.mxu0 0.0
    %1390 = vmatpush2.msra.mxu0 0.0
    %1391 = vmatprep.mubr.f32.mxu0 0.0
    %1392 = vmatmul.mubr.f32.gmra.mxu0 %v1325
    %v1393 = vpop.f32.mrf.mxu0
    %v1394 = vadd.f32 0.0, %v1393
    %v1395 = vpop.f32.mrf.mxu0
    %v1396 = vadd.f32 0.0, %v1395
    %1397 = vdwg.mxu0
    %1398 = vmatprep.subr.mxu0 0.0
    %1399 = vmatpush1.msra.mxu0 0.0
    %1400 = vmatprep.subr.mxu0 0.0
    %1401 = vmatpush1.msra.mxu0 0.0
    %1402 = vmatprep.subr.mxu0 0.0
    %1403 = vmatpush1.msra.mxu0 0.0
    %1404 = vmatprep.subr.mxu0 0.0
    %1405 = vmatpush1.msra.mxu0 0.0
    %1406 = vmatprep.subr.mxu0 0.0
    %1407 = vmatpush1.msra.mxu0 0.0
    %1408 = vmatprep.subr.mxu0 0.0
    %1409 = vmatpush1.msra.mxu0 0.0
    %1410 = vmatprep.subr.mxu0 0.0
    %1411 = vmatpush1.msra.mxu0 0.0
    %1412 = vmatprep.subr.mxu0 0.0
    %1413 = vmatpush1.msra.mxu0 0.0
    %1414 = vmatprep.subr.mxu0 0.0
    %1415 = vmatpush1.msra.mxu0 0.0
    %1416 = vmatprep.subr.mxu0 0.0
    %1417 = vmatpush1.msra.mxu0 0.0
    %1418 = vmatprep.subr.mxu0 0.0
    %1419 = vmatpush1.msra.mxu0 0.0
    %1420 = vmatprep.subr.mxu0 0.0
    %1421 = vmatpush1.msra.mxu0 0.0
    %1422 = vmatprep.subr.mxu0 0.0
    %1423 = vmatpush1.msra.mxu0 0.0
    %1424 = vmatprep.subr.mxu0 %v617
    %1425 = vmatpush1.msra.mxu0 %v614
    %1426 = vmatprep.subr.mxu0 %v591
    %1427 = vmatpush1.msra.mxu0 %v590
    %1428 = vmatprep.subr.mxu0 %v587
    %1429 = vmatpush1.msra.mxu0 %v586
    %1430 = vmatprep.subr.mxu0 0.0
    %1431 = vmatpush2.msra.mxu0 0.0
    %1432 = vmatprep.subr.mxu0 0.0
    %1433 = vmatpush2.msra.mxu0 0.0
    %1434 = vmatprep.subr.mxu0 0.0
    %1435 = vmatpush2.msra.mxu0 0.0
    %1436 = vmatprep.subr.mxu0 0.0
    %1437 = vmatpush2.msra.mxu0 0.0
    %1438 = vmatprep.subr.mxu0 0.0
    %1439 = vmatpush2.msra.mxu0 0.0
    %1440 = vmatprep.subr.mxu0 0.0
    %1441 = vmatpush2.msra.mxu0 0.0
    %1442 = vmatprep.subr.mxu0 0.0
    %1443 = vmatpush2.msra.mxu0 0.0
    %1444 = vmatprep.subr.mxu0 0.0
    %1445 = vmatpush2.msra.mxu0 0.0
    %1446 = vmatprep.subr.mxu0 0.0
    %1447 = vmatpush2.msra.mxu0 0.0
    %1448 = vmatprep.subr.mxu0 0.0
    %1449 = vmatpush2.msra.mxu0 0.0
    %1450 = vmatprep.subr.mxu0 0.0
    %1451 = vmatpush2.msra.mxu0 0.0
    %1452 = vmatprep.subr.mxu0 0.0
    %1453 = vmatpush2.msra.mxu0 0.0
    %1454 = vmatprep.subr.mxu0 0.0
    %1455 = vmatpush2.msra.mxu0 0.0
    %1456 = vmatprep.subr.mxu0 0.0
    %1457 = vmatpush2.msra.mxu0 0.0
    %1458 = vmatprep.subr.mxu0 0.0
    %1459 = vmatpush2.msra.mxu0 0.0
    %1460 = vmatprep.subr.mxu0 0.0
    %1461 = vmatpush2.msra.mxu0 0.0
    %1462 = vmatprep.mubr.f32.mxu0 0.0
    %1463 = vmatmul.mubr.f32.gmra.mxu0 %v1325
    %v1464 = vpop.f32.mrf.mxu0
    %v1465 = vadd.f32 0.0, %v1464
    %v1466 = vpop.f32.mrf.mxu0
    %v1467 = vadd.f32 0.0, %v1466
    %1468 = vdwg.mxu0
    %v1469 = vadd.f32 %v1320, %v1394
    %v1470 = vadd.f32 %v1321, %v1396
    %v1471 = vadd.f32 %v1322, %v1465
    %v1472 = vadd.f32 %v1323, %v1467
    %v1473 = vxor.u32 %v1469, 2147483648
    %v1474 = vmul.f32 %v1473, 1.442695
    %v1475 = vpow.pop %v1474
    %v1476 = vadd.f32 %v1475, 1.0
    %v1477 = vrcp.pop %v1476
    %v1478 = vmul.f32 1.0, %v1477
    %v1479 = vxor.u32 %v1470, 2147483648
    %v1480 = vmul.f32 %v1479, 1.442695
    %v1481 = vpow.pop %v1480
    %v1482 = vadd.f32 %v1481, 1.0
    %v1483 = vrcp.pop %v1482
    %v1484 = vmul.f32 1.0, %v1483
    %v1485 = vtanh.pop %v1471
    %v1486 = vxor.u32 %v1472, 2147483648
    %v1487 = vmul.f32 %v1486, 1.442695
    %v1488 = vpow.pop %v1487
    %v1489 = vadd.f32 %v1488, 1.0
    %v1490 = vrcp.pop %v1489
    %v1491 = vmul.f32 1.0, %v1490
    %v1492 = vmul.f32 %v1484, %v1317
    %v1493 = vmul.f32 %v1478, %v1485
    %v1494 = vadd.f32 %v1492, %v1493
    %v1495 = vtanh.pop %v1494
    %v1496 = vmul.f32 %v1491, %v1495
    %v1497 = vld [vmem:[#allocation2 + $0x140] sm:$0xff]
    %v1498 = vld [vmem:[#allocation2 + $0x148] sm:$0xff]
    %v1499 = vld [vmem:[#allocation2 + $0x150] sm:$0xff]
    %v1500 = vld [vmem:[#allocation2 + $0x158] sm:$0xff]
    %v1502 = vsel %vm602, %v1496, 0
    %1504 = vmatprep.subr.mxu0 0.0
    %1505 = vmatpush1.msra.mxu0 0.0
    %1506 = vmatprep.subr.mxu0 0.0
    %1507 = vmatpush1.msra.mxu0 0.0
    %1508 = vmatprep.subr.mxu0 0.0
    %1509 = vmatpush1.msra.mxu0 0.0
    %1510 = vmatprep.subr.mxu0 0.0
    %1511 = vmatpush1.msra.mxu0 0.0
    %1512 = vmatprep.subr.mxu0 0.0
    %1513 = vmatpush1.msra.mxu0 0.0
    %1514 = vmatprep.subr.mxu0 0.0
    %1515 = vmatpush1.msra.mxu0 0.0
    %1516 = vmatprep.subr.mxu0 0.0
    %1517 = vmatpush1.msra.mxu0 0.0
    %1518 = vmatprep.subr.mxu0 0.0
    %1519 = vmatpush1.msra.mxu0 0.0
    %1520 = vmatprep.subr.mxu0 0.0
    %1521 = vmatpush1.msra.mxu0 0.0
    %1522 = vmatprep.subr.mxu0 0.0
    %1523 = vmatpush1.msra.mxu0 0.0
    %1524 = vmatprep.subr.mxu0 0.0
    %1525 = vmatpush1.msra.mxu0 0.0
    %1526 = vmatprep.subr.mxu0 0.0
    %1527 = vmatpush1.msra.mxu0 0.0
    %1528 = vmatprep.subr.mxu0 0.0
    %1529 = vmatpush1.msra.mxu0 0.0
    %1530 = vmatprep.subr.mxu0 %v611
    %1531 = vmatpush1.msra.mxu0 %v608
    %1532 = vmatprep.subr.mxu0 %v589
    %1533 = vmatpush1.msra.mxu0 %v588
    %1534 = vmatprep.subr.mxu0 %v585
    %1535 = vmatpush1.msra.mxu0 %v584
    %1536 = vmatprep.subr.mxu0 0.0
    %1537 = vmatpush2.msra.mxu0 0.0
    %1538 = vmatprep.subr.mxu0 0.0
    %1539 = vmatpush2.msra.mxu0 0.0
    %1540 = vmatprep.subr.mxu0 0.0
    %1541 = vmatpush2.msra.mxu0 0.0
    %1542 = vmatprep.subr.mxu0 0.0
    %1543 = vmatpush2.msra.mxu0 0.0
    %1544 = vmatprep.subr.mxu0 0.0
    %1545 = vmatpush2.msra.mxu0 0.0
    %1546 = vmatprep.subr.mxu0 0.0
    %1547 = vmatpush2.msra.mxu0 0.0
    %1548 = vmatprep.subr.mxu0 0.0
    %1549 = vmatpush2.msra.mxu0 0.0
    %1550 = vmatprep.subr.mxu0 0.0
    %1551 = vmatpush2.msra.mxu0 0.0
    %1552 = vmatprep.subr.mxu0 0.0
    %1553 = vmatpush2.msra.mxu0 0.0
    %1554 = vmatprep.subr.mxu0 0.0
    %1555 = vmatpush2.msra.mxu0 0.0
    %1556 = vmatprep.subr.mxu0 0.0
    %1557 = vmatpush2.msra.mxu0 0.0
    %1558 = vmatprep.subr.mxu0 0.0
    %1559 = vmatpush2.msra.mxu0 0.0
    %1560 = vmatprep.subr.mxu0 0.0
    %1561 = vmatpush2.msra.mxu0 0.0
    %1562 = vmatprep.subr.mxu0 0.0
    %1563 = vmatpush2.msra.mxu0 0.0
    %1564 = vmatprep.subr.mxu0 0.0
    %1565 = vmatpush2.msra.mxu0 0.0
    %1566 = vmatprep.subr.mxu0 0.0
    %1567 = vmatpush2.msra.mxu0 0.0
    %1568 = vmatprep.mubr.f32.mxu0 0.0
    %1569 = vmatmul.mubr.f32.gmra.mxu0 %v1502
    %v1570 = vpop.f32.mrf.mxu0
    %v1571 = vadd.f32 0.0, %v1570
    %v1572 = vpop.f32.mrf.mxu0
    %v1573 = vadd.f32 0.0, %v1572
    %1574 = vdwg.mxu0
    %1575 = vmatprep.subr.mxu0 0.0
    %1576 = vmatpush1.msra.mxu0 0.0
    %1577 = vmatprep.subr.mxu0 0.0
    %1578 = vmatpush1.msra.mxu0 0.0
    %1579 = vmatprep.subr.mxu0 0.0
    %1580 = vmatpush1.msra.mxu0 0.0
    %1581 = vmatprep.subr.mxu0 0.0
    %1582 = vmatpush1.msra.mxu0 0.0
    %1583 = vmatprep.subr.mxu0 0.0
    %1584 = vmatpush1.msra.mxu0 0.0
    %1585 = vmatprep.subr.mxu0 0.0
    %1586 = vmatpush1.msra.mxu0 0.0
    %1587 = vmatprep.subr.mxu0 0.0
    %1588 = vmatpush1.msra.mxu0 0.0
    %1589 = vmatprep.subr.mxu0 0.0
    %1590 = vmatpush1.msra.mxu0 0.0
    %1591 = vmatprep.subr.mxu0 0.0
    %1592 = vmatpush1.msra.mxu0 0.0
    %1593 = vmatprep.subr.mxu0 0.0
    %1594 = vmatpush1.msra.mxu0 0.0
    %1595 = vmatprep.subr.mxu0 0.0
    %1596 = vmatpush1.msra.mxu0 0.0
    %1597 = vmatprep.subr.mxu0 0.0
    %1598 = vmatpush1.msra.mxu0 0.0
    %1599 = vmatprep.subr.mxu0 0.0
    %1600 = vmatpush1.msra.mxu0 0.0
    %1601 = vmatprep.subr.mxu0 %v617
    %1602 = vmatpush1.msra.mxu0 %v614
    %1603 = vmatprep.subr.mxu0 %v591
    %1604 = vmatpush1.msra.mxu0 %v590
    %1605 = vmatprep.subr.mxu0 %v587
    %1606 = vmatpush1.msra.mxu0 %v586
    %1607 = vmatprep.subr.mxu0 0.0
    %1608 = vmatpush2.msra.mxu0 0.0
    %1609 = vmatprep.subr.mxu0 0.0
    %1610 = vmatpush2.msra.mxu0 0.0
    %1611 = vmatprep.subr.mxu0 0.0
    %1612 = vmatpush2.msra.mxu0 0.0
    %1613 = vmatprep.subr.mxu0 0.0
    %1614 = vmatpush2.msra.mxu0 0.0
    %1615 = vmatprep.subr.mxu0 0.0
    %1616 = vmatpush2.msra.mxu0 0.0
    %1617 = vmatprep.subr.mxu0 0.0
    %1618 = vmatpush2.msra.mxu0 0.0
    %1619 = vmatprep.subr.mxu0 0.0
    %1620 = vmatpush2.msra.mxu0 0.0
    %1621 = vmatprep.subr.mxu0 0.0
    %1622 = vmatpush2.msra.mxu0 0.0
    %1623 = vmatprep.subr.mxu0 0.0
    %1624 = vmatpush2.msra.mxu0 0.0
    %1625 = vmatprep.subr.mxu0 0.0
    %1626 = vmatpush2.msra.mxu0 0.0
    %1627 = vmatprep.subr.mxu0 0.0
    %1628 = vmatpush2.msra.mxu0 0.0
    %1629 = vmatprep.subr.mxu0 0.0
    %1630 = vmatpush2.msra.mxu0 0.0
    %1631 = vmatprep.subr.mxu0 0.0
    %1632 = vmatpush2.msra.mxu0 0.0
    %1633 = vmatprep.subr.mxu0 0.0
    %1634 = vmatpush2.msra.mxu0 0.0
    %1635 = vmatprep.subr.mxu0 0.0
    %1636 = vmatpush2.msra.mxu0 0.0
    %1637 = vmatprep.subr.mxu0 0.0
    %1638 = vmatpush2.msra.mxu0 0.0
    %1639 = vmatprep.mubr.f32.mxu0 0.0
    %1640 = vmatmul.mubr.f32.gmra.mxu0 %v1502
    %v1641 = vpop.f32.mrf.mxu0
    %v1642 = vadd.f32 0.0, %v1641
    %v1643 = vpop.f32.mrf.mxu0
    %v1644 = vadd.f32 0.0, %v1643
    %1645 = vdwg.mxu0
    %v1646 = vadd.f32 %v1497, %v1571
    %v1647 = vadd.f32 %v1498, %v1573
    %v1648 = vadd.f32 %v1499, %v1642
    %v1649 = vadd.f32 %v1500, %v1644
    %v1650 = vxor.u32 %v1646, 2147483648
    %v1651 = vmul.f32 %v1650, 1.442695
    %v1652 = vpow.pop %v1651
    %v1653 = vadd.f32 %v1652, 1.0
    %v1654 = vrcp.pop %v1653
    %v1655 = vmul.f32 1.0, %v1654
    %v1656 = vxor.u32 %v1647, 2147483648
    %v1657 = vmul.f32 %v1656, 1.442695
    %v1658 = vpow.pop %v1657
    %v1659 = vadd.f32 %v1658, 1.0
    %v1660 = vrcp.pop %v1659
    %v1661 = vmul.f32 1.0, %v1660
    %v1662 = vtanh.pop %v1648
    %v1663 = vxor.u32 %v1649, 2147483648
    %v1664 = vmul.f32 %v1663, 1.442695
    %v1665 = vpow.pop %v1664
    %v1666 = vadd.f32 %v1665, 1.0
    %v1667 = vrcp.pop %v1666
    %v1668 = vmul.f32 1.0, %v1667
    %v1669 = vmul.f32 %v1661, %v1494
    %v1670 = vmul.f32 %v1655, %v1662
    %v1671 = vadd.f32 %v1669, %v1670
    %v1672 = vtanh.pop %v1671
    %v1673 = vmul.f32 %v1668, %v1672
    %v1674 = vld [vmem:[#allocation8 + $0x40] sm:$0xff]
    %v1675 = vld [vmem:[#allocation8 + $0x48] sm:$0xff]
    %v1676 = vld [vmem:[#allocation8 + $0x98] sm:$0xff]
    %v1677 = vld [vmem:[#allocation8 + $0xa0] sm:$0xff]
    %v1678 = vld [vmem:[#allocation8 + $0xf0] sm:$0xf]
    %v1679 = vld [vmem:[#allocation8 + $0xf8] sm:$0xf]
    %s1680 = scalar_lea.vmem %s4, 19
    %v1681 = vld [vmem:[%s1680] ss:$8 sm:$0x3]
    %v1683 = vlaneseq
    %v1684 = vshrl.u32 %v1683, 7
    %v1685 = vsub.s32 0, %v1684
    %v1686 = vrot.slane %v1681, %v1685
    %v1687 = vlaneseq
    %v1688 = vshrl.u32 %v1687, 7
    %v1689 = vsub.s32 1, %v1688
    %v1690 = vrot.slane %v1681, %v1689
    %v1694 = vsel %vm602, %v1673, 0
    %v1697 = vsel %vm606, %v1678, 0
    %v1700 = vsel %vm606, %v1679, 0
    %1702 = vmatprep.subr.mxu0 0.0
    %1703 = vmatpush1.msra.mxu0 0.0
    %1704 = vmatprep.subr.mxu0 0.0
    %1705 = vmatpush1.msra.mxu0 0.0
    %1706 = vmatprep.subr.mxu0 0.0
    %1707 = vmatpush1.msra.mxu0 0.0
    %1708 = vmatprep.subr.mxu0 0.0
    %1709 = vmatpush1.msra.mxu0 0.0
    %1710 = vmatprep.subr.mxu0 0.0
    %1711 = vmatpush1.msra.mxu0 0.0
    %1712 = vmatprep.subr.mxu0 0.0
    %1713 = vmatpush1.msra.mxu0 0.0
    %1714 = vmatprep.subr.mxu0 0.0
    %1715 = vmatpush1.msra.mxu0 0.0
    %1716 = vmatprep.subr.mxu0 0.0
    %1717 = vmatpush1.msra.mxu0 0.0
    %1718 = vmatprep.subr.mxu0 0.0
    %1719 = vmatpush1.msra.mxu0 0.0
    %1720 = vmatprep.subr.mxu0 0.0
    %1721 = vmatpush1.msra.mxu0 0.0
    %1722 = vmatprep.subr.mxu0 0.0
    %1723 = vmatpush1.msra.mxu0 0.0
    %1724 = vmatprep.subr.mxu0 0.0
    %1725 = vmatpush1.msra.mxu0 0.0
    %1726 = vmatprep.subr.mxu0 0.0
    %1727 = vmatpush1.msra.mxu0 0.0
    %1728 = vmatprep.subr.mxu0 %v1700
    %1729 = vmatpush1.msra.mxu0 %v1697
    %1730 = vmatprep.subr.mxu0 %v1677
    %1731 = vmatpush1.msra.mxu0 %v1676
    %1732 = vmatprep.subr.mxu0 %v1675
    %1733 = vmatpush1.msra.mxu0 %v1674
    %1734 = vmatprep.subr.mxu0 0.0
    %1735 = vmatpush2.msra.mxu0 0.0
    %1736 = vmatprep.subr.mxu0 0.0
    %1737 = vmatpush2.msra.mxu0 0.0
    %1738 = vmatprep.subr.mxu0 0.0
    %1739 = vmatpush2.msra.mxu0 0.0
    %1740 = vmatprep.subr.mxu0 0.0
    %1741 = vmatpush2.msra.mxu0 0.0
    %1742 = vmatprep.subr.mxu0 0.0
    %1743 = vmatpush2.msra.mxu0 0.0
    %1744 = vmatprep.subr.mxu0 0.0
    %1745 = vmatpush2.msra.mxu0 0.0
    %1746 = vmatprep.subr.mxu0 0.0
    %1747 = vmatpush2.msra.mxu0 0.0
    %1748 = vmatprep.subr.mxu0 0.0
    %1749 = vmatpush2.msra.mxu0 0.0
    %1750 = vmatprep.subr.mxu0 0.0
    %1751 = vmatpush2.msra.mxu0 0.0
    %1752 = vmatprep.subr.mxu0 0.0
    %1753 = vmatpush2.msra.mxu0 0.0
    %1754 = vmatprep.subr.mxu0 0.0
    %1755 = vmatpush2.msra.mxu0 0.0
    %1756 = vmatprep.subr.mxu0 0.0
    %1757 = vmatpush2.msra.mxu0 0.0
    %1758 = vmatprep.subr.mxu0 0.0
    %1759 = vmatpush2.msra.mxu0 0.0
    %1760 = vmatprep.subr.mxu0 0.0
    %1761 = vmatpush2.msra.mxu0 0.0
    %1762 = vmatprep.subr.mxu0 0.0
    %1763 = vmatpush2.msra.mxu0 0.0
    %1764 = vmatprep.subr.mxu0 0.0
    %1765 = vmatpush2.msra.mxu0 0.0
    %1766 = vmatprep.mubr.f32.mxu0 0.0
    %1767 = vmatmul.mubr.f32.gmra.mxu0 %v1694
    %v1768 = vpop.f32.mrf.mxu0
    %v1769 = vadd.f32 %v1686, %v1768
    %v1770 = vpop.f32.mrf.mxu0
    %v1771 = vadd.f32 %v1690, %v1770
    %1772 = vdwg.mxu0
    %v1773 = vmul.f32 %v1771, 0.5
    %v1774 = vmul.f32 %v1773, 1.442695
    %v1775 = vpow.pop %v1774
    %v1776 = vld [vmem:[%s1 + $0x10] sm:$0xff]
    %v1777 = vmul.f32 %v1776, %v1775
    %v1778 = vadd.f32 %v1777, %v1769
    %1780 = vrot.lane.b32.xlu0 %v1771, 10
    %v1781 = vpop.permute.xlu0 %1780
    %1784 = vrot.lane.b32.xlu0 %v1778, 20
    %v1785 = vpop.permute.xlu0 %1784
    %1787 = vrot.lane.b32.xlu0 %v1673, 30
    %v1788 = vpop.permute.xlu0 %1787
    %1791 = vrot.lane.b32.xlu0 %v1671, 50
    %v1792 = vpop.permute.xlu0 %1791
    %vm1794 = vcmask 80896
    %v1795 = vsel %vm1794, %v1769, %v1781
    %v1796 = vsel %vm602, %v1795, %v1785
    %vm1797 = vcmask 244736
    %v1798 = vsel %vm1797, %v1796, %v1788
    %vm1799 = vcmask 408576
    %v1800 = vsel %vm1799, %v1798, %v1792
    %vm1801 = vcmask 572416
    %v1802 = vsel %vm1801, %v1800, 0.0
    %1803 = vst [vmem:[#allocation4] sm:$0xff] %v1802
    // Predicated region
    $region30: #{tpu_custom_call.1} parent=1 // pred_check
      _
    $region31: #{tpu_custom_call.1} parent=1 // pred_check_branch
      %1805 = sbr.rel target = $region33
    $region32: #{tpu_custom_call.1} parent=1 // pred_region
      %1806 = sst [smem:[#allocation12]] [#allocation11]
      %1807 = sst [smem:[#allocation13]] [#allocation10]
    $region33: #{tpu_custom_call.1} parent=1 // pred_fallthru
      _
    %1809 = shalt.err (0)
    %s1811 = sshll.u32 [#allocation4], 4
    %s1812 = int_to_ptr.vmem [resolvable:$true] %s1811
    %1814 = dma.vmem_to_hbm [thread:$0]  %s1812, 128, %s6, [#allocation5]
    %v1815 = vld [vmem:[%s4] sm:$0xff]
    %v1816 = vld [vmem:[%s4 + $0x10] sm:$0x3]
    %v1817 = vld [vmem:[%s4 + $0x12] ss:$0 sm:$0xff]
    %v1818 = vsel %vm1794, %v1778, 0
    %v1821 = vsel %vm107, %v1816, 0
    %1823 = vmatprep.subr.mxu0 0.0
    %1824 = vmatpush1.msra.mxu0 0.0
    %1825 = vmatprep.subr.mxu0 0.0
    %1826 = vmatpush1.msra.mxu0 0.0
    %1827 = vmatprep.subr.mxu0 0.0
    %1828 = vmatpush1.msra.mxu0 0.0
    %1829 = vmatprep.subr.mxu0 0.0
    %1830 = vmatpush1.msra.mxu0 0.0
    %1831 = vmatprep.subr.mxu0 0.0
    %1832 = vmatpush1.msra.mxu0 0.0
    %1833 = vmatprep.subr.mxu0 0.0
    %1834 = vmatpush1.msra.mxu0 0.0
    %1835 = vmatprep.subr.mxu0 0.0
    %1836 = vmatpush1.msra.mxu0 0.0
    %1837 = vmatprep.subr.mxu0 0.0
    %1838 = vmatpush1.msra.mxu0 0.0
    %1839 = vmatprep.subr.mxu0 0.0
    %1840 = vmatpush1.msra.mxu0 0.0
    %1841 = vmatprep.subr.mxu0 0.0
    %1842 = vmatpush1.msra.mxu0 0.0
    %1843 = vmatprep.subr.mxu0 0.0
    %1844 = vmatpush1.msra.mxu0 0.0
    %1845 = vmatprep.subr.mxu0 0.0
    %1846 = vmatpush1.msra.mxu0 0.0
    %1847 = vmatprep.subr.mxu0 0.0
    %1848 = vmatpush1.msra.mxu0 0.0
    %1849 = vmatprep.subr.mxu0 0.0
    %1850 = vmatpush1.msra.mxu0 0.0
    %1851 = vmatprep.subr.mxu0 0.0
    %1852 = vmatpush1.msra.mxu0 %v1821
    %1853 = vmatprep.subr.mxu0 0.0
    %1854 = vmatpush1.msra.mxu0 %v1815
    %1855 = vmatprep.subr.mxu0 0.0
    %1856 = vmatpush2.msra.mxu0 0.0
    %1857 = vmatprep.subr.mxu0 0.0
    %1858 = vmatpush2.msra.mxu0 0.0
    %1859 = vmatprep.subr.mxu0 0.0
    %1860 = vmatpush2.msra.mxu0 0.0
    %1861 = vmatprep.subr.mxu0 0.0
    %1862 = vmatpush2.msra.mxu0 0.0
    %1863 = vmatprep.subr.mxu0 0.0
    %1864 = vmatpush2.msra.mxu0 0.0
    %1865 = vmatprep.subr.mxu0 0.0
    %1866 = vmatpush2.msra.mxu0 0.0
    %1867 = vmatprep.subr.mxu0 0.0
    %1868 = vmatpush2.msra.mxu0 0.0
    %1869 = vmatprep.subr.mxu0 0.0
    %1870 = vmatpush2.msra.mxu0 0.0
    %1871 = vmatprep.subr.mxu0 0.0
    %1872 = vmatpush2.msra.mxu0 0.0
    %1873 = vmatprep.subr.mxu0 0.0
    %1874 = vmatpush2.msra.mxu0 0.0
    %1875 = vmatprep.subr.mxu0 0.0
    %1876 = vmatpush2.msra.mxu0 0.0
    %1877 = vmatprep.subr.mxu0 0.0
    %1878 = vmatpush2.msra.mxu0 0.0
    %1879 = vmatprep.subr.mxu0 0.0
    %1880 = vmatpush2.msra.mxu0 0.0
    %1881 = vmatprep.subr.mxu0 0.0
    %1882 = vmatpush2.msra.mxu0 0.0
    %1883 = vmatprep.subr.mxu0 0.0
    %1884 = vmatpush2.msra.mxu0 0.0
    %1885 = vmatprep.subr.mxu0 0.0
    %1886 = vmatpush2.msra.mxu0 0.0
    %1887 = vmatprep.mubr.f32.mxu0 0.0
    %1888 = vmatmul.mubr.f32.gmra.mxu0 %v1818
    %v1889 = vpop.f32.mrf.mxu0
    %v1890 = vadd.f32 %v1817, %v1889
    %v1891 = vpop.f32.mrf.mxu0
    %1892 = vdwg.mxu0
    %v1893 = vld [vmem:[#allocation8 + $0x20] sm:$0xff]
    %v1894 = vld [vmem:[#allocation8 + $0x28] sm:$0xff]
    %v1895 = vld [vmem:[#allocation8 + $0x30] sm:$0xff]
    %v1896 = vld [vmem:[#allocation8 + $0x38] sm:$0xff]
    %v1897 = vld [vmem:[#allocation8 + $0x78] sm:$0xff]
    %v1898 = vld [vmem:[#allocation8 + $0x80] sm:$0xff]
    %v1899 = vld [vmem:[#allocation8 + $0x88] sm:$0xff]
    %v1900 = vld [vmem:[#allocation8 + $0x90] sm:$0xff]
    %v1901 = vld [vmem:[#allocation8 + $0xd0] sm:$0xf]
    %v1902 = vld [vmem:[#allocation8 + $0xd8] sm:$0xf]
    %v1903 = vld [vmem:[#allocation8 + $0xe0] sm:$0xf]
    %v1904 = vld [vmem:[#allocation8 + $0xe8] sm:$0xf]
    %v1905 = vld [vmem:[#allocation2 + $0x20] sm:$0xff]
    %v1906 = vld [vmem:[#allocation2 + $0x28] sm:$0xff]
    %v1907 = vld [vmem:[#allocation2 + $0x30] sm:$0xff]
    %v1908 = vld [vmem:[#allocation2 + $0x38] sm:$0xff]
    %v1910 = vsel %vm602, %v1890, 0
    %v1913 = vsel %vm606, %v1901, 0
    %v1916 = vsel %vm606, %v1902, 0
    %v1919 = vsel %vm606, %v1903, 0
    %v1922 = vsel %vm606, %v1904, 0
    %1924 = vmatprep.subr.mxu0 0.0
    %1925 = vmatpush1.msra.mxu0 0.0
    %1926 = vmatprep.subr.mxu0 0.0
    %1927 = vmatpush1.msra.mxu0 0.0
    %1928 = vmatprep.subr.mxu0 0.0
    %1929 = vmatpush1.msra.mxu0 0.0
    %1930 = vmatprep.subr.mxu0 0.0
    %1931 = vmatpush1.msra.mxu0 0.0
    %1932 = vmatprep.subr.mxu0 0.0
    %1933 = vmatpush1.msra.mxu0 0.0
    %1934 = vmatprep.subr.mxu0 0.0
    %1935 = vmatpush1.msra.mxu0 0.0
    %1936 = vmatprep.subr.mxu0 0.0
    %1937 = vmatpush1.msra.mxu0 0.0
    %1938 = vmatprep.subr.mxu0 0.0
    %1939 = vmatpush1.msra.mxu0 0.0
    %1940 = vmatprep.subr.mxu0 0.0
    %1941 = vmatpush1.msra.mxu0 0.0
    %1942 = vmatprep.subr.mxu0 0.0
    %1943 = vmatpush1.msra.mxu0 0.0
    %1944 = vmatprep.subr.mxu0 0.0
    %1945 = vmatpush1.msra.mxu0 0.0
    %1946 = vmatprep.subr.mxu0 0.0
    %1947 = vmatpush1.msra.mxu0 0.0
    %1948 = vmatprep.subr.mxu0 0.0
    %1949 = vmatpush1.msra.mxu0 0.0
    %1950 = vmatprep.subr.mxu0 %v1916
    %1951 = vmatpush1.msra.mxu0 %v1913
    %1952 = vmatprep.subr.mxu0 %v1898
    %1953 = vmatpush1.msra.mxu0 %v1897
    %1954 = vmatprep.subr.mxu0 %v1894
    %1955 = vmatpush1.msra.mxu0 %v1893
    %1956 = vmatprep.subr.mxu0 0.0
    %1957 = vmatpush2.msra.mxu0 0.0
    %1958 = vmatprep.subr.mxu0 0.0
    %1959 = vmatpush2.msra.mxu0 0.0
    %1960 = vmatprep.subr.mxu0 0.0
    %1961 = vmatpush2.msra.mxu0 0.0
    %1962 = vmatprep.subr.mxu0 0.0
    %1963 = vmatpush2.msra.mxu0 0.0
    %1964 = vmatprep.subr.mxu0 0.0
    %1965 = vmatpush2.msra.mxu0 0.0
    %1966 = vmatprep.subr.mxu0 0.0
    %1967 = vmatpush2.msra.mxu0 0.0
    %1968 = vmatprep.subr.mxu0 0.0
    %1969 = vmatpush2.msra.mxu0 0.0
    %1970 = vmatprep.subr.mxu0 0.0
    %1971 = vmatpush2.msra.mxu0 0.0
    %1972 = vmatprep.subr.mxu0 0.0
    %1973 = vmatpush2.msra.mxu0 0.0
    %1974 = vmatprep.subr.mxu0 0.0
    %1975 = vmatpush2.msra.mxu0 0.0
    %1976 = vmatprep.subr.mxu0 0.0
    %1977 = vmatpush2.msra.mxu0 0.0
    %1978 = vmatprep.subr.mxu0 0.0
    %1979 = vmatpush2.msra.mxu0 0.0
    %1980 = vmatprep.subr.mxu0 0.0
    %1981 = vmatpush2.msra.mxu0 0.0
    %1982 = vmatprep.subr.mxu0 0.0
    %1983 = vmatpush2.msra.mxu0 0.0
    %1984 = vmatprep.subr.mxu0 0.0
    %1985 = vmatpush2.msra.mxu0 0.0
    %1986 = vmatprep.subr.mxu0 0.0
    %1987 = vmatpush2.msra.mxu0 0.0
    %1988 = vmatprep.mubr.f32.mxu0 0.0
    %1989 = vmatmul.mubr.f32.gmra.mxu0 %v1910
    %v1990 = vpop.f32.mrf.mxu0
    %v1991 = vadd.f32 0.0, %v1990
    %v1992 = vpop.f32.mrf.mxu0
    %v1993 = vadd.f32 0.0, %v1992
    %1994 = vdwg.mxu0
    %1995 = vmatprep.subr.mxu0 0.0
    %1996 = vmatpush1.msra.mxu0 0.0
    %1997 = vmatprep.subr.mxu0 0.0
    %1998 = vmatpush1.msra.mxu0 0.0
    %1999 = vmatprep.subr.mxu0 0.0
    %2000 = vmatpush1.msra.mxu0 0.0
    %2001 = vmatprep.subr.mxu0 0.0
    %2002 = vmatpush1.msra.mxu0 0.0
    %2003 = vmatprep.subr.mxu0 0.0
    %2004 = vmatpush1.msra.mxu0 0.0
    %2005 = vmatprep.subr.mxu0 0.0
    %2006 = vmatpush1.msra.mxu0 0.0
    %2007 = vmatprep.subr.mxu0 0.0
    %2008 = vmatpush1.msra.mxu0 0.0
    %2009 = vmatprep.subr.mxu0 0.0
    %2010 = vmatpush1.msra.mxu0 0.0
    %2011 = vmatprep.subr.mxu0 0.0
    %2012 = vmatpush1.msra.mxu0 0.0
    %2013 = vmatprep.subr.mxu0 0.0
    %2014 = vmatpush1.msra.mxu0 0.0
    %2015 = vmatprep.subr.mxu0 0.0
    %2016 = vmatpush1.msra.mxu0 0.0
    %2017 = vmatprep.subr.mxu0 0.0
    %2018 = vmatpush1.msra.mxu0 0.0
    %2019 = vmatprep.subr.mxu0 0.0
    %2020 = vmatpush1.msra.mxu0 0.0
    %2021 = vmatprep.subr.mxu0 %v1922
    %2022 = vmatpush1.msra.mxu0 %v1919
    %2023 = vmatprep.subr.mxu0 %v1900
    %2024 = vmatpush1.msra.mxu0 %v1899
    %2025 = vmatprep.subr.mxu0 %v1896
    %2026 = vmatpush1.msra.mxu0 %v1895
    %2027 = vmatprep.subr.mxu0 0.0
    %2028 = vmatpush2.msra.mxu0 0.0
    %2029 = vmatprep.subr.mxu0 0.0
    %2030 = vmatpush2.msra.mxu0 0.0
    %2031 = vmatprep.subr.mxu0 0.0
    %2032 = vmatpush2.msra.mxu0 0.0
    %2033 = vmatprep.subr.mxu0 0.0
    %2034 = vmatpush2.msra.mxu0 0.0
    %2035 = vmatprep.subr.mxu0 0.0
    %2036 = vmatpush2.msra.mxu0 0.0
    %2037 = vmatprep.subr.mxu0 0.0
    %2038 = vmatpush2.msra.mxu0 0.0
    %2039 = vmatprep.subr.mxu0 0.0
    %2040 = vmatpush2.msra.mxu0 0.0
    %2041 = vmatprep.subr.mxu0 0.0
    %2042 = vmatpush2.msra.mxu0 0.0
    %2043 = vmatprep.subr.mxu0 0.0
    %2044 = vmatpush2.msra.mxu0 0.0
    %2045 = vmatprep.subr.mxu0 0.0
    %2046 = vmatpush2.msra.mxu0 0.0
    %2047 = vmatprep.subr.mxu0 0.0
    %2048 = vmatpush2.msra.mxu0 0.0
    %2049 = vmatprep.subr.mxu0 0.0
    %2050 = vmatpush2.msra.mxu0 0.0
    %2051 = vmatprep.subr.mxu0 0.0
    %2052 = vmatpush2.msra.mxu0 0.0
    %2053 = vmatprep.subr.mxu0 0.0
    %2054 = vmatpush2.msra.mxu0 0.0
    %2055 = vmatprep.subr.mxu0 0.0
    %2056 = vmatpush2.msra.mxu0 0.0
    %2057 = vmatprep.subr.mxu0 0.0
    %2058 = vmatpush2.msra.mxu0 0.0
    %2059 = vmatprep.mubr.f32.mxu0 0.0
    %2060 = vmatmul.mubr.f32.gmra.mxu0 %v1910
    %v2061 = vpop.f32.mrf.mxu0
    %v2062 = vadd.f32 0.0, %v2061
    %v2063 = vpop.f32.mrf.mxu0
    %v2064 = vadd.f32 0.0, %v2063
    %2065 = vdwg.mxu0
    %v2066 = vadd.f32 %v1905, %v1991
    %v2067 = vadd.f32 %v1906, %v1993
    %v2068 = vadd.f32 %v1907, %v2062
    %v2069 = vadd.f32 %v1908, %v2064
    %v2070 = vxor.u32 %v2066, 2147483648
    %v2071 = vmul.f32 %v2070, 1.442695
    %v2072 = vpow.pop %v2071
    %v2073 = vadd.f32 %v2072, 1.0
    %v2074 = vrcp.pop %v2073
    %v2075 = vmul.f32 1.0, %v2074
    %v2076 = vxor.u32 %v2067, 2147483648
    %v2077 = vmul.f32 %v2076, 1.442695
    %v2078 = vpow.pop %v2077
    %v2079 = vadd.f32 %v2078, 1.0
    %v2080 = vrcp.pop %v2079
    %v2081 = vmul.f32 1.0, %v2080
    %v2082 = vtanh.pop %v2068
    %v2083 = vxor.u32 %v2069, 2147483648
    %v2084 = vmul.f32 %v2083, 1.442695
    %v2085 = vpow.pop %v2084
    %v2086 = vadd.f32 %v2085, 1.0
    %v2087 = vrcp.pop %v2086
    %v2088 = vmul.f32 1.0, %v2087
    %v2089 = vmul.f32 %v2081, %v1890
    %v2090 = vmul.f32 %v2075, %v2082
    %v2091 = vadd.f32 %v2089, %v2090
    %v2092 = vtanh.pop %v2091
    %v2093 = vmul.f32 %v2088, %v2092
    %2094 = vst.msk [vmem:[#allocation3] sm:$0xff] %vm602, %v2093
    %v2095 = vld [vmem:[#allocation2 + $0x60] sm:$0xff]
    %v2096 = vld [vmem:[#allocation2 + $0x68] sm:$0xff]
    %v2097 = vld [vmem:[#allocation2 + $0x70] sm:$0xff]
    %v2098 = vld [vmem:[#allocation2 + $0x78] sm:$0xff]
    %v2100 = vsel %vm602, %v2093, 0
    %2102 = vmatprep.subr.mxu0 0.0
    %2103 = vmatpush1.msra.mxu0 0.0
    %2104 = vmatprep.subr.mxu0 0.0
    %2105 = vmatpush1.msra.mxu0 0.0
    %2106 = vmatprep.subr.mxu0 0.0
    %2107 = vmatpush1.msra.mxu0 0.0
    %2108 = vmatprep.subr.mxu0 0.0
    %2109 = vmatpush1.msra.mxu0 0.0
    %2110 = vmatprep.subr.mxu0 0.0
    %2111 = vmatpush1.msra.mxu0 0.0
    %2112 = vmatprep.subr.mxu0 0.0
    %2113 = vmatpush1.msra.mxu0 0.0
    %2114 = vmatprep.subr.mxu0 0.0
    %2115 = vmatpush1.msra.mxu0 0.0
    %2116 = vmatprep.subr.mxu0 0.0
    %2117 = vmatpush1.msra.mxu0 0.0
    %2118 = vmatprep.subr.mxu0 0.0
    %2119 = vmatpush1.msra.mxu0 0.0
    %2120 = vmatprep.subr.mxu0 0.0
    %2121 = vmatpush1.msra.mxu0 0.0
    %2122 = vmatprep.subr.mxu0 0.0
    %2123 = vmatpush1.msra.mxu0 0.0
    %2124 = vmatprep.subr.mxu0 0.0
    %2125 = vmatpush1.msra.mxu0 0.0
    %2126 = vmatprep.subr.mxu0 0.0
    %2127 = vmatpush1.msra.mxu0 0.0
    %2128 = vmatprep.subr.mxu0 %v1916
    %2129 = vmatpush1.msra.mxu0 %v1913
    %2130 = vmatprep.subr.mxu0 %v1898
    %2131 = vmatpush1.msra.mxu0 %v1897
    %2132 = vmatprep.subr.mxu0 %v1894
    %2133 = vmatpush1.msra.mxu0 %v1893
    %2134 = vmatprep.subr.mxu0 0.0
    %2135 = vmatpush2.msra.mxu0 0.0
    %2136 = vmatprep.subr.mxu0 0.0
    %2137 = vmatpush2.msra.mxu0 0.0
    %2138 = vmatprep.subr.mxu0 0.0
    %2139 = vmatpush2.msra.mxu0 0.0
    %2140 = vmatprep.subr.mxu0 0.0
    %2141 = vmatpush2.msra.mxu0 0.0
    %2142 = vmatprep.subr.mxu0 0.0
    %2143 = vmatpush2.msra.mxu0 0.0
    %2144 = vmatprep.subr.mxu0 0.0
    %2145 = vmatpush2.msra.mxu0 0.0
    %2146 = vmatprep.subr.mxu0 0.0
    %2147 = vmatpush2.msra.mxu0 0.0
    %2148 = vmatprep.subr.mxu0 0.0
    %2149 = vmatpush2.msra.mxu0 0.0
    %2150 = vmatprep.subr.mxu0 0.0
    %2151 = vmatpush2.msra.mxu0 0.0
    %2152 = vmatprep.subr.mxu0 0.0
    %2153 = vmatpush2.msra.mxu0 0.0
    %2154 = vmatprep.subr.mxu0 0.0
    %2155 = vmatpush2.msra.mxu0 0.0
    %2156 = vmatprep.subr.mxu0 0.0
    %2157 = vmatpush2.msra.mxu0 0.0
    %2158 = vmatprep.subr.mxu0 0.0
    %2159 = vmatpush2.msra.mxu0 0.0
    %2160 = vmatprep.subr.mxu0 0.0
    %2161 = vmatpush2.msra.mxu0 0.0
    %2162 = vmatprep.subr.mxu0 0.0
    %2163 = vmatpush2.msra.mxu0 0.0
    %2164 = vmatprep.subr.mxu0 0.0
    %2165 = vmatpush2.msra.mxu0 0.0
    %2166 = vmatprep.mubr.f32.mxu0 0.0
    %2167 = vmatmul.mubr.f32.gmra.mxu0 %v2100
    %v2168 = vpop.f32.mrf.mxu0
    %v2169 = vadd.f32 0.0, %v2168
    %v2170 = vpop.f32.mrf.mxu0
    %v2171 = vadd.f32 0.0, %v2170
    %2172 = vdwg.mxu0
    %2173 = vmatprep.subr.mxu0 0.0
    %2174 = vmatpush1.msra.mxu0 0.0
    %2175 = vmatprep.subr.mxu0 0.0
    %2176 = vmatpush1.msra.mxu0 0.0
    %2177 = vmatprep.subr.mxu0 0.0
    %2178 = vmatpush1.msra.mxu0 0.0
    %2179 = vmatprep.subr.mxu0 0.0
    %2180 = vmatpush1.msra.mxu0 0.0
    %2181 = vmatprep.subr.mxu0 0.0
    %2182 = vmatpush1.msra.mxu0 0.0
    %2183 = vmatprep.subr.mxu0 0.0
    %2184 = vmatpush1.msra.mxu0 0.0
    %2185 = vmatprep.subr.mxu0 0.0
    %2186 = vmatpush1.msra.mxu0 0.0
    %2187 = vmatprep.subr.mxu0 0.0
    %2188 = vmatpush1.msra.mxu0 0.0
    %2189 = vmatprep.subr.mxu0 0.0
    %2190 = vmatpush1.msra.mxu0 0.0
    %2191 = vmatprep.subr.mxu0 0.0
    %2192 = vmatpush1.msra.mxu0 0.0
    %2193 = vmatprep.subr.mxu0 0.0
    %2194 = vmatpush1.msra.mxu0 0.0
    %2195 = vmatprep.subr.mxu0 0.0
    %2196 = vmatpush1.msra.mxu0 0.0
    %2197 = vmatprep.subr.mxu0 0.0
    %2198 = vmatpush1.msra.mxu0 0.0
    %2199 = vmatprep.subr.mxu0 %v1922
    %2200 = vmatpush1.msra.mxu0 %v1919
    %2201 = vmatprep.subr.mxu0 %v1900
    %2202 = vmatpush1.msra.mxu0 %v1899
    %2203 = vmatprep.subr.mxu0 %v1896
    %2204 = vmatpush1.msra.mxu0 %v1895
    %2205 = vmatprep.subr.mxu0 0.0
    %2206 = vmatpush2.msra.mxu0 0.0
    %2207 = vmatprep.subr.mxu0 0.0
    %2208 = vmatpush2.msra.mxu0 0.0
    %2209 = vmatprep.subr.mxu0 0.0
    %2210 = vmatpush2.msra.mxu0 0.0
    %2211 = vmatprep.subr.mxu0 0.0
    %2212 = vmatpush2.msra.mxu0 0.0
    %2213 = vmatprep.subr.mxu0 0.0
    %2214 = vmatpush2.msra.mxu0 0.0
    %2215 = vmatprep.subr.mxu0 0.0
    %2216 = vmatpush2.msra.mxu0 0.0
    %2217 = vmatprep.subr.mxu0 0.0
    %2218 = vmatpush2.msra.mxu0 0.0
    %2219 = vmatprep.subr.mxu0 0.0
    %2220 = vmatpush2.msra.mxu0 0.0
    %2221 = vmatprep.subr.mxu0 0.0
    %2222 = vmatpush2.msra.mxu0 0.0
    %2223 = vmatprep.subr.mxu0 0.0
    %2224 = vmatpush2.msra.mxu0 0.0
    %2225 = vmatprep.subr.mxu0 0.0
    %2226 = vmatpush2.msra.mxu0 0.0
    %2227 = vmatprep.subr.mxu0 0.0
    %2228 = vmatpush2.msra.mxu0 0.0
    %2229 = vmatprep.subr.mxu0 0.0
    %2230 = vmatpush2.msra.mxu0 0.0
    %2231 = vmatprep.subr.mxu0 0.0
    %2232 = vmatpush2.msra.mxu0 0.0
    %2233 = vmatprep.subr.mxu0 0.0
    %2234 = vmatpush2.msra.mxu0 0.0
    %2235 = vmatprep.subr.mxu0 0.0
    %2236 = vmatpush2.msra.mxu0 0.0
    %2237 = vmatprep.mubr.f32.mxu0 0.0
    %2238 = vmatmul.mubr.f32.gmra.mxu0 %v2100
    %v2239 = vpop.f32.mrf.mxu0
    %v2240 = vadd.f32 0.0, %v2239
    %v2241 = vpop.f32.mrf.mxu0
    %v2242 = vadd.f32 0.0, %v2241
    %2243 = vdwg.mxu0
    %v2244 = vadd.f32 %v2095, %v2169
    %v2245 = vadd.f32 %v2096, %v2171
    %v2246 = vadd.f32 %v2097, %v2240
    %v2247 = vadd.f32 %v2098, %v2242
    %v2248 = vxor.u32 %v2244, 2147483648
    %v2249 = vmul.f32 %v2248, 1.442695
    %v2250 = vpow.pop %v2249
    %v2251 = vadd.f32 %v2250, 1.0
    %v2252 = vrcp.pop %v2251
    %v2253 = vmul.f32 1.0, %v2252
    %v2254 = vxor.u32 %v2245, 2147483648
    %v2255 = vmul.f32 %v2254, 1.442695
    %v2256 = vpow.pop %v2255
    %v2257 = vadd.f32 %v2256, 1.0
    %v2258 = vrcp.pop %v2257
    %v2259 = vmul.f32 1.0, %v2258
    %v2260 = vtanh.pop %v2246
    %v2261 = vxor.u32 %v2247, 2147483648
    %v2262 = vmul.f32 %v2261, 1.442695
    %v2263 = vpow.pop %v2262
    %v2264 = vadd.f32 %v2263, 1.0
    %v2265 = vrcp.pop %v2264
    %v2266 = vmul.f32 1.0, %v2265
    %v2267 = vmul.f32 %v2259, %v2091
    %v2268 = vmul.f32 %v2253, %v2260
    %v2269 = vadd.f32 %v2267, %v2268
    %v2270 = vtanh.pop %v2269
    %v2271 = vmul.f32 %v2266, %v2270
    %2272 = vst.msk [vmem:[#allocation3 + $0x8] sm:$0xff] %vm602, %v2271
    %v2273 = vld [vmem:[#allocation2 + $0xa0] sm:$0xff]
    %v2274 = vld [vmem:[#allocation2 + $0xa8] sm:$0xff]
    %v2275 = vld [vmem:[#allocation2 + $0xb0] sm:$0xff]
    %v2276 = vld [vmem:[#allocation2 + $0xb8] sm:$0xff]
    %v2278 = vsel %vm602, %v2271, 0
    %2280 = vmatprep.subr.mxu0 0.0
    %2281 = vmatpush1.msra.mxu0 0.0
    %2282 = vmatprep.subr.mxu0 0.0
    %2283 = vmatpush1.msra.mxu0 0.0
    %2284 = vmatprep.subr.mxu0 0.0
    %2285 = vmatpush1.msra.mxu0 0.0
    %2286 = vmatprep.subr.mxu0 0.0
    %2287 = vmatpush1.msra.mxu0 0.0
    %2288 = vmatprep.subr.mxu0 0.0
    %2289 = vmatpush1.msra.mxu0 0.0
    %2290 = vmatprep.subr.mxu0 0.0
    %2291 = vmatpush1.msra.mxu0 0.0
    %2292 = vmatprep.subr.mxu0 0.0
    %2293 = vmatpush1.msra.mxu0 0.0
    %2294 = vmatprep.subr.mxu0 0.0
    %2295 = vmatpush1.msra.mxu0 0.0
    %2296 = vmatprep.subr.mxu0 0.0
    %2297 = vmatpush1.msra.mxu0 0.0
    %2298 = vmatprep.subr.mxu0 0.0
    %2299 = vmatpush1.msra.mxu0 0.0
    %2300 = vmatprep.subr.mxu0 0.0
    %2301 = vmatpush1.msra.mxu0 0.0
    %2302 = vmatprep.subr.mxu0 0.0
    %2303 = vmatpush1.msra.mxu0 0.0
    %2304 = vmatprep.subr.mxu0 0.0
    %2305 = vmatpush1.msra.mxu0 0.0
    %2306 = vmatprep.subr.mxu0 %v1916
    %2307 = vmatpush1.msra.mxu0 %v1913
    %2308 = vmatprep.subr.mxu0 %v1898
    %2309 = vmatpush1.msra.mxu0 %v1897
    %2310 = vmatprep.subr.mxu0 %v1894
    %2311 = vmatpush1.msra.mxu0 %v1893
    %2312 = vmatprep.subr.mxu0 0.0
    %2313 = vmatpush2.msra.mxu0 0.0
    %2314 = vmatprep.subr.mxu0 0.0
    %2315 = vmatpush2.msra.mxu0 0.0
    %2316 = vmatprep.subr.mxu0 0.0
    %2317 = vmatpush2.msra.mxu0 0.0
    %2318 = vmatprep.subr.mxu0 0.0
    %2319 = vmatpush2.msra.mxu0 0.0
    %2320 = vmatprep.subr.mxu0 0.0
    %2321 = vmatpush2.msra.mxu0 0.0
    %2322 = vmatprep.subr.mxu0 0.0
    %2323 = vmatpush2.msra.mxu0 0.0
    %2324 = vmatprep.subr.mxu0 0.0
    %2325 = vmatpush2.msra.mxu0 0.0
    %2326 = vmatprep.subr.mxu0 0.0
    %2327 = vmatpush2.msra.mxu0 0.0
    %2328 = vmatprep.subr.mxu0 0.0
    %2329 = vmatpush2.msra.mxu0 0.0
    %2330 = vmatprep.subr.mxu0 0.0
    %2331 = vmatpush2.msra.mxu0 0.0
    %2332 = vmatprep.subr.mxu0 0.0
    %2333 = vmatpush2.msra.mxu0 0.0
    %2334 = vmatprep.subr.mxu0 0.0
    %2335 = vmatpush2.msra.mxu0 0.0
    %2336 = vmatprep.subr.mxu0 0.0
    %2337 = vmatpush2.msra.mxu0 0.0
    %2338 = vmatprep.subr.mxu0 0.0
    %2339 = vmatpush2.msra.mxu0 0.0
    %2340 = vmatprep.subr.mxu0 0.0
    %2341 = vmatpush2.msra.mxu0 0.0
    %2342 = vmatprep.subr.mxu0 0.0
    %2343 = vmatpush2.msra.mxu0 0.0
    %2344 = vmatprep.mubr.f32.mxu0 0.0
    %2345 = vmatmul.mubr.f32.gmra.mxu0 %v2278
    %v2346 = vpop.f32.mrf.mxu0
    %v2347 = vadd.f32 0.0, %v2346
    %v2348 = vpop.f32.mrf.mxu0
    %v2349 = vadd.f32 0.0, %v2348
    %2350 = vdwg.mxu0
    %2351 = vmatprep.subr.mxu0 0.0
    %2352 = vmatpush1.msra.mxu0 0.0
    %2353 = vmatprep.subr.mxu0 0.0
    %2354 = vmatpush1.msra.mxu0 0.0
    %2355 = vmatprep.subr.mxu0 0.0
    %2356 = vmatpush1.msra.mxu0 0.0
    %2357 = vmatprep.subr.mxu0 0.0
    %2358 = vmatpush1.msra.mxu0 0.0
    %2359 = vmatprep.subr.mxu0 0.0
    %2360 = vmatpush1.msra.mxu0 0.0
    %2361 = vmatprep.subr.mxu0 0.0
    %2362 = vmatpush1.msra.mxu0 0.0
    %2363 = vmatprep.subr.mxu0 0.0
    %2364 = vmatpush1.msra.mxu0 0.0
    %2365 = vmatprep.subr.mxu0 0.0
    %2366 = vmatpush1.msra.mxu0 0.0
    %2367 = vmatprep.subr.mxu0 0.0
    %2368 = vmatpush1.msra.mxu0 0.0
    %2369 = vmatprep.subr.mxu0 0.0
    %2370 = vmatpush1.msra.mxu0 0.0
    %2371 = vmatprep.subr.mxu0 0.0
    %2372 = vmatpush1.msra.mxu0 0.0
    %2373 = vmatprep.subr.mxu0 0.0
    %2374 = vmatpush1.msra.mxu0 0.0
    %2375 = vmatprep.subr.mxu0 0.0
    %2376 = vmatpush1.msra.mxu0 0.0
    %2377 = vmatprep.subr.mxu0 %v1922
    %2378 = vmatpush1.msra.mxu0 %v1919
    %2379 = vmatprep.subr.mxu0 %v1900
    %2380 = vmatpush1.msra.mxu0 %v1899
    %2381 = vmatprep.subr.mxu0 %v1896
    %2382 = vmatpush1.msra.mxu0 %v1895
    %2383 = vmatprep.subr.mxu0 0.0
    %2384 = vmatpush2.msra.mxu0 0.0
    %2385 = vmatprep.subr.mxu0 0.0
    %2386 = vmatpush2.msra.mxu0 0.0
    %2387 = vmatprep.subr.mxu0 0.0
    %2388 = vmatpush2.msra.mxu0 0.0
    %2389 = vmatprep.subr.mxu0 0.0
    %2390 = vmatpush2.msra.mxu0 0.0
    %2391 = vmatprep.subr.mxu0 0.0
    %2392 = vmatpush2.msra.mxu0 0.0
    %2393 = vmatprep.subr.mxu0 0.0
    %2394 = vmatpush2.msra.mxu0 0.0
    %2395 = vmatprep.subr.mxu0 0.0
    %2396 = vmatpush2.msra.mxu0 0.0
    %2397 = vmatprep.subr.mxu0 0.0
    %2398 = vmatpush2.msra.mxu0 0.0
    %2399 = vmatprep.subr.mxu0 0.0
    %2400 = vmatpush2.msra.mxu0 0.0
    %2401 = vmatprep.subr.mxu0 0.0
    %2402 = vmatpush2.msra.mxu0 0.0
    %2403 = vmatprep.subr.mxu0 0.0
    %2404 = vmatpush2.msra.mxu0 0.0
    %2405 = vmatprep.subr.mxu0 0.0
    %2406 = vmatpush2.msra.mxu0 0.0
    %2407 = vmatprep.subr.mxu0 0.0
    %2408 = vmatpush2.msra.mxu0 0.0
    %2409 = vmatprep.subr.mxu0 0.0
    %2410 = vmatpush2.msra.mxu0 0.0
    %2411 = vmatprep.subr.mxu0 0.0
    %2412 = vmatpush2.msra.mxu0 0.0
    %2413 = vmatprep.subr.mxu0 0.0
    %2414 = vmatpush2.msra.mxu0 0.0
    %2415 = vmatprep.mubr.f32.mxu0 0.0
    %2416 = vmatmul.mubr.f32.gmra.mxu0 %v2278
    %v2417 = vpop.f32.mrf.mxu0
    %v2418 = vadd.f32 0.0, %v2417
    %v2419 = vpop.f32.mrf.mxu0
    %v2420 = vadd.f32 0.0, %v2419
    %2421 = vdwg.mxu0
    %v2422 = vadd.f32 %v2273, %v2347
    %v2423 = vadd.f32 %v2274, %v2349
    %v2424 = vadd.f32 %v2275, %v2418
    %v2425 = vadd.f32 %v2276, %v2420
    %v2426 = vxor.u32 %v2422, 2147483648
    %v2427 = vmul.f32 %v2426, 1.442695
    %v2428 = vpow.pop %v2427
    %v2429 = vadd.f32 %v2428, 1.0
    %v2430 = vrcp.pop %v2429
    %v2431 = vmul.f32 1.0, %v2430
    %v2432 = vxor.u32 %v2423, 2147483648
    %v2433 = vmul.f32 %v2432, 1.442695
    %v2434 = vpow.pop %v2433
    %v2435 = vadd.f32 %v2434, 1.0
    %v2436 = vrcp.pop %v2435
    %v2437 = vmul.f32 1.0, %v2436
    %v2438 = vtanh.pop %v2424
    %v2439 = vxor.u32 %v2425, 2147483648
    %v2440 = vmul.f32 %v2439, 1.442695
    %v2441 = vpow.pop %v2440
    %v2442 = vadd.f32 %v2441, 1.0
    %v2443 = vrcp.pop %v2442
    %v2444 = vmul.f32 1.0, %v2443
    %v2445 = vmul.f32 %v2437, %v2269
    %v2446 = vmul.f32 %v2431, %v2438
    %v2447 = vadd.f32 %v2445, %v2446
    %v2448 = vtanh.pop %v2447
    %v2449 = vmul.f32 %v2444, %v2448
    %2450 = vst.msk [vmem:[#allocation3 + $0x10] sm:$0xff] %vm602, %v2449
    %v2451 = vld [vmem:[#allocation2 + $0xe0] sm:$0xff]
    %v2452 = vld [vmem:[#allocation2 + $0xe8] sm:$0xff]
    %v2453 = vld [vmem:[#allocation2 + $0xf0] sm:$0xff]
    %v2454 = vld [vmem:[#allocation2 + $0xf8] sm:$0xff]
    %v2456 = vsel %vm602, %v2449, 0
    %2458 = vmatprep.subr.mxu0 0.0
    %2459 = vmatpush1.msra.mxu0 0.0
    %2460 = vmatprep.subr.mxu0 0.0
    %2461 = vmatpush1.msra.mxu0 0.0
    %2462 = vmatprep.subr.mxu0 0.0
    %2463 = vmatpush1.msra.mxu0 0.0
    %2464 = vmatprep.subr.mxu0 0.0
    %2465 = vmatpush1.msra.mxu0 0.0
    %2466 = vmatprep.subr.mxu0 0.0
    %2467 = vmatpush1.msra.mxu0 0.0
    %2468 = vmatprep.subr.mxu0 0.0
    %2469 = vmatpush1.msra.mxu0 0.0
    %2470 = vmatprep.subr.mxu0 0.0
    %2471 = vmatpush1.msra.mxu0 0.0
    %2472 = vmatprep.subr.mxu0 0.0
    %2473 = vmatpush1.msra.mxu0 0.0
    %2474 = vmatprep.subr.mxu0 0.0
    %2475 = vmatpush1.msra.mxu0 0.0
    %2476 = vmatprep.subr.mxu0 0.0
    %2477 = vmatpush1.msra.mxu0 0.0
    %2478 = vmatprep.subr.mxu0 0.0
    %2479 = vmatpush1.msra.mxu0 0.0
    %2480 = vmatprep.subr.mxu0 0.0
    %2481 = vmatpush1.msra.mxu0 0.0
    %2482 = vmatprep.subr.mxu0 0.0
    %2483 = vmatpush1.msra.mxu0 0.0
    %2484 = vmatprep.subr.mxu0 %v1916
    %2485 = vmatpush1.msra.mxu0 %v1913
    %2486 = vmatprep.subr.mxu0 %v1898
    %2487 = vmatpush1.msra.mxu0 %v1897
    %2488 = vmatprep.subr.mxu0 %v1894
    %2489 = vmatpush1.msra.mxu0 %v1893
    %2490 = vmatprep.subr.mxu0 0.0
    %2491 = vmatpush2.msra.mxu0 0.0
    %2492 = vmatprep.subr.mxu0 0.0
    %2493 = vmatpush2.msra.mxu0 0.0
    %2494 = vmatprep.subr.mxu0 0.0
    %2495 = vmatpush2.msra.mxu0 0.0
    %2496 = vmatprep.subr.mxu0 0.0
    %2497 = vmatpush2.msra.mxu0 0.0
    %2498 = vmatprep.subr.mxu0 0.0
    %2499 = vmatpush2.msra.mxu0 0.0
    %2500 = vmatprep.subr.mxu0 0.0
    %2501 = vmatpush2.msra.mxu0 0.0
    %2502 = vmatprep.subr.mxu0 0.0
    %2503 = vmatpush2.msra.mxu0 0.0
    %2504 = vmatprep.subr.mxu0 0.0
    %2505 = vmatpush2.msra.mxu0 0.0
    %2506 = vmatprep.subr.mxu0 0.0
    %2507 = vmatpush2.msra.mxu0 0.0
    %2508 = vmatprep.subr.mxu0 0.0
    %2509 = vmatpush2.msra.mxu0 0.0
    %2510 = vmatprep.subr.mxu0 0.0
    %2511 = vmatpush2.msra.mxu0 0.0
    %2512 = vmatprep.subr.mxu0 0.0
    %2513 = vmatpush2.msra.mxu0 0.0
    %2514 = vmatprep.subr.mxu0 0.0
    %2515 = vmatpush2.msra.mxu0 0.0
    %2516 = vmatprep.subr.mxu0 0.0
    %2517 = vmatpush2.msra.mxu0 0.0
    %2518 = vmatprep.subr.mxu0 0.0
    %2519 = vmatpush2.msra.mxu0 0.0
    %2520 = vmatprep.subr.mxu0 0.0
    %2521 = vmatpush2.msra.mxu0 0.0
    %2522 = vmatprep.mubr.f32.mxu0 0.0
    %2523 = vmatmul.mubr.f32.gmra.mxu0 %v2456
    %v2524 = vpop.f32.mrf.mxu0
    %v2525 = vadd.f32 0.0, %v2524
    %v2526 = vpop.f32.mrf.mxu0
    %v2527 = vadd.f32 0.0, %v2526
    %2528 = vdwg.mxu0
    %2529 = vmatprep.subr.mxu0 0.0
    %2530 = vmatpush1.msra.mxu0 0.0
    %2531 = vmatprep.subr.mxu0 0.0
    %2532 = vmatpush1.msra.mxu0 0.0
    %2533 = vmatprep.subr.mxu0 0.0
    %2534 = vmatpush1.msra.mxu0 0.0
    %2535 = vmatprep.subr.mxu0 0.0
    %2536 = vmatpush1.msra.mxu0 0.0
    %2537 = vmatprep.subr.mxu0 0.0
    %2538 = vmatpush1.msra.mxu0 0.0
    %2539 = vmatprep.subr.mxu0 0.0
    %2540 = vmatpush1.msra.mxu0 0.0
    %2541 = vmatprep.subr.mxu0 0.0
    %2542 = vmatpush1.msra.mxu0 0.0
    %2543 = vmatprep.subr.mxu0 0.0
    %2544 = vmatpush1.msra.mxu0 0.0
    %2545 = vmatprep.subr.mxu0 0.0
    %2546 = vmatpush1.msra.mxu0 0.0
    %2547 = vmatprep.subr.mxu0 0.0
    %2548 = vmatpush1.msra.mxu0 0.0
    %2549 = vmatprep.subr.mxu0 0.0
    %2550 = vmatpush1.msra.mxu0 0.0
    %2551 = vmatprep.subr.mxu0 0.0
    %2552 = vmatpush1.msra.mxu0 0.0
    %2553 = vmatprep.subr.mxu0 0.0
    %2554 = vmatpush1.msra.mxu0 0.0
    %2555 = vmatprep.subr.mxu0 %v1922
    %2556 = vmatpush1.msra.mxu0 %v1919
    %2557 = vmatprep.subr.mxu0 %v1900
    %2558 = vmatpush1.msra.mxu0 %v1899
    %2559 = vmatprep.subr.mxu0 %v1896
    %2560 = vmatpush1.msra.mxu0 %v1895
    %2561 = vmatprep.subr.mxu0 0.0
    %2562 = vmatpush2.msra.mxu0 0.0
    %2563 = vmatprep.subr.mxu0 0.0
    %2564 = vmatpush2.msra.mxu0 0.0
    %2565 = vmatprep.subr.mxu0 0.0
    %2566 = vmatpush2.msra.mxu0 0.0
    %2567 = vmatprep.subr.mxu0 0.0
    %2568 = vmatpush2.msra.mxu0 0.0
    %2569 = vmatprep.subr.mxu0 0.0
    %2570 = vmatpush2.msra.mxu0 0.0
    %2571 = vmatprep.subr.mxu0 0.0
    %2572 = vmatpush2.msra.mxu0 0.0
    %2573 = vmatprep.subr.mxu0 0.0
    %2574 = vmatpush2.msra.mxu0 0.0
    %2575 = vmatprep.subr.mxu0 0.0
    %2576 = vmatpush2.msra.mxu0 0.0
    %2577 = vmatprep.subr.mxu0 0.0
    %2578 = vmatpush2.msra.mxu0 0.0
    %2579 = vmatprep.subr.mxu0 0.0
    %2580 = vmatpush2.msra.mxu0 0.0
    %2581 = vmatprep.subr.mxu0 0.0
    %2582 = vmatpush2.msra.mxu0 0.0
    %2583 = vmatprep.subr.mxu0 0.0
    %2584 = vmatpush2.msra.mxu0 0.0
    %2585 = vmatprep.subr.mxu0 0.0
    %2586 = vmatpush2.msra.mxu0 0.0
    %2587 = vmatprep.subr.mxu0 0.0
    %2588 = vmatpush2.msra.mxu0 0.0
    %2589 = vmatprep.subr.mxu0 0.0
    %2590 = vmatpush2.msra.mxu0 0.0
    %2591 = vmatprep.subr.mxu0 0.0
    %2592 = vmatpush2.msra.mxu0 0.0
    %2593 = vmatprep.mubr.f32.mxu0 0.0
    %2594 = vmatmul.mubr.f32.gmra.mxu0 %v2456
    %v2595 = vpop.f32.mrf.mxu0
    %v2596 = vadd.f32 0.0, %v2595
    %v2597 = vpop.f32.mrf.mxu0
    %v2598 = vadd.f32 0.0, %v2597
    %2599 = vdwg.mxu0
    %v2600 = vadd.f32 %v2451, %v2525
    %v2601 = vadd.f32 %v2452, %v2527
    %v2602 = vadd.f32 %v2453, %v2596
    %v2603 = vadd.f32 %v2454, %v2598
    %v2604 = vxor.u32 %v2600, 2147483648
    %v2605 = vmul.f32 %v2604, 1.442695
    %v2606 = vpow.pop %v2605
    %v2607 = vadd.f32 %v2606, 1.0
    %v2608 = vrcp.pop %v2607
    %v2609 = vmul.f32 1.0, %v2608
    %v2610 = vxor.u32 %v2601, 2147483648
    %v2611 = vmul.f32 %v2610, 1.442695
    %v2612 = vpow.pop %v2611
    %v2613 = vadd.f32 %v2612, 1.0
    %v2614 = vrcp.pop %v2613
    %v2615 = vmul.f32 1.0, %v2614
    %v2616 = vtanh.pop %v2602
    %v2617 = vxor.u32 %v2603, 2147483648
    %v2618 = vmul.f32 %v2617, 1.442695
    %v2619 = vpow.pop %v2618
    %v2620 = vadd.f32 %v2619, 1.0
    %v2621 = vrcp.pop %v2620
    %v2622 = vmul.f32 1.0, %v2621
    %v2623 = vmul.f32 %v2615, %v2447
    %v2624 = vmul.f32 %v2609, %v2616
    %v2625 = vadd.f32 %v2623, %v2624
    %v2626 = vtanh.pop %v2625
    %v2627 = vmul.f32 %v2622, %v2626
    %2628 = vst.msk [vmem:[#allocation3 + $0x18] sm:$0xff] %vm602, %v2627
    %v2629 = vld [vmem:[#allocation2 + $0x120] sm:$0xff]
    %v2630 = vld [vmem:[#allocation2 + $0x128] sm:$0xff]
    %v2631 = vld [vmem:[#allocation2 + $0x130] sm:$0xff]
    %v2632 = vld [vmem:[#allocation2 + $0x138] sm:$0xff]
    %v2634 = vsel %vm602, %v2627, 0
    %2636 = vmatprep.subr.mxu0 0.0
    %2637 = vmatpush1.msra.mxu0 0.0
    %2638 = vmatprep.subr.mxu0 0.0
    %2639 = vmatpush1.msra.mxu0 0.0
    %2640 = vmatprep.subr.mxu0 0.0
    %2641 = vmatpush1.msra.mxu0 0.0
    %2642 = vmatprep.subr.mxu0 0.0
    %2643 = vmatpush1.msra.mxu0 0.0
    %2644 = vmatprep.subr.mxu0 0.0
    %2645 = vmatpush1.msra.mxu0 0.0
    %2646 = vmatprep.subr.mxu0 0.0
    %2647 = vmatpush1.msra.mxu0 0.0
    %2648 = vmatprep.subr.mxu0 0.0
    %2649 = vmatpush1.msra.mxu0 0.0
    %2650 = vmatprep.subr.mxu0 0.0
    %2651 = vmatpush1.msra.mxu0 0.0
    %2652 = vmatprep.subr.mxu0 0.0
    %2653 = vmatpush1.msra.mxu0 0.0
    %2654 = vmatprep.subr.mxu0 0.0
    %2655 = vmatpush1.msra.mxu0 0.0
    %2656 = vmatprep.subr.mxu0 0.0
    %2657 = vmatpush1.msra.mxu0 0.0
    %2658 = vmatprep.subr.mxu0 0.0
    %2659 = vmatpush1.msra.mxu0 0.0
    %2660 = vmatprep.subr.mxu0 0.0
    %2661 = vmatpush1.msra.mxu0 0.0
    %2662 = vmatprep.subr.mxu0 %v1916
    %2663 = vmatpush1.msra.mxu0 %v1913
    %2664 = vmatprep.subr.mxu0 %v1898
    %2665 = vmatpush1.msra.mxu0 %v1897
    %2666 = vmatprep.subr.mxu0 %v1894
    %2667 = vmatpush1.msra.mxu0 %v1893
    %2668 = vmatprep.subr.mxu0 0.0
    %2669 = vmatpush2.msra.mxu0 0.0
    %2670 = vmatprep.subr.mxu0 0.0
    %2671 = vmatpush2.msra.mxu0 0.0
    %2672 = vmatprep.subr.mxu0 0.0
    %2673 = vmatpush2.msra.mxu0 0.0
    %2674 = vmatprep.subr.mxu0 0.0
    %2675 = vmatpush2.msra.mxu0 0.0
    %2676 = vmatprep.subr.mxu0 0.0
    %2677 = vmatpush2.msra.mxu0 0.0
    %2678 = vmatprep.subr.mxu0 0.0
    %2679 = vmatpush2.msra.mxu0 0.0
    %2680 = vmatprep.subr.mxu0 0.0
    %2681 = vmatpush2.msra.mxu0 0.0
    %2682 = vmatprep.subr.mxu0 0.0
    %2683 = vmatpush2.msra.mxu0 0.0
    %2684 = vmatprep.subr.mxu0 0.0
    %2685 = vmatpush2.msra.mxu0 0.0
    %2686 = vmatprep.subr.mxu0 0.0
    %2687 = vmatpush2.msra.mxu0 0.0
    %2688 = vmatprep.subr.mxu0 0.0
    %2689 = vmatpush2.msra.mxu0 0.0
    %2690 = vmatprep.subr.mxu0 0.0
    %2691 = vmatpush2.msra.mxu0 0.0
    %2692 = vmatprep.subr.mxu0 0.0
    %2693 = vmatpush2.msra.mxu0 0.0
    %2694 = vmatprep.subr.mxu0 0.0
    %2695 = vmatpush2.msra.mxu0 0.0
    %2696 = vmatprep.subr.mxu0 0.0
    %2697 = vmatpush2.msra.mxu0 0.0
    %2698 = vmatprep.subr.mxu0 0.0
    %2699 = vmatpush2.msra.mxu0 0.0
    %2700 = vmatprep.mubr.f32.mxu0 0.0
    %2701 = vmatmul.mubr.f32.gmra.mxu0 %v2634
    %v2702 = vpop.f32.mrf.mxu0
    %v2703 = vadd.f32 0.0, %v2702
    %v2704 = vpop.f32.mrf.mxu0
    %v2705 = vadd.f32 0.0, %v2704
    %2706 = vdwg.mxu0
    %2707 = vmatprep.subr.mxu0 0.0
    %2708 = vmatpush1.msra.mxu0 0.0
    %2709 = vmatprep.subr.mxu0 0.0
    %2710 = vmatpush1.msra.mxu0 0.0
    %2711 = vmatprep.subr.mxu0 0.0
    %2712 = vmatpush1.msra.mxu0 0.0
    %2713 = vmatprep.subr.mxu0 0.0
    %2714 = vmatpush1.msra.mxu0 0.0
    %2715 = vmatprep.subr.mxu0 0.0
    %2716 = vmatpush1.msra.mxu0 0.0
    %2717 = vmatprep.subr.mxu0 0.0
    %2718 = vmatpush1.msra.mxu0 0.0
    %2719 = vmatprep.subr.mxu0 0.0
    %2720 = vmatpush1.msra.mxu0 0.0
    %2721 = vmatprep.subr.mxu0 0.0
    %2722 = vmatpush1.msra.mxu0 0.0
    %2723 = vmatprep.subr.mxu0 0.0
    %2724 = vmatpush1.msra.mxu0 0.0
    %2725 = vmatprep.subr.mxu0 0.0
    %2726 = vmatpush1.msra.mxu0 0.0
    %2727 = vmatprep.subr.mxu0 0.0
    %2728 = vmatpush1.msra.mxu0 0.0
    %2729 = vmatprep.subr.mxu0 0.0
    %2730 = vmatpush1.msra.mxu0 0.0
    %2731 = vmatprep.subr.mxu0 0.0
    %2732 = vmatpush1.msra.mxu0 0.0
    %2733 = vmatprep.subr.mxu0 %v1922
    %2734 = vmatpush1.msra.mxu0 %v1919
    %2735 = vmatprep.subr.mxu0 %v1900
    %2736 = vmatpush1.msra.mxu0 %v1899
    %2737 = vmatprep.subr.mxu0 %v1896
    %2738 = vmatpush1.msra.mxu0 %v1895
    %2739 = vmatprep.subr.mxu0 0.0
    %2740 = vmatpush2.msra.mxu0 0.0
    %2741 = vmatprep.subr.mxu0 0.0
    %2742 = vmatpush2.msra.mxu0 0.0
    %2743 = vmatprep.subr.mxu0 0.0
    %2744 = vmatpush2.msra.mxu0 0.0
    %2745 = vmatprep.subr.mxu0 0.0
    %2746 = vmatpush2.msra.mxu0 0.0
    %2747 = vmatprep.subr.mxu0 0.0
    %2748 = vmatpush2.msra.mxu0 0.0
    %2749 = vmatprep.subr.mxu0 0.0
    %2750 = vmatpush2.msra.mxu0 0.0
    %2751 = vmatprep.subr.mxu0 0.0
    %2752 = vmatpush2.msra.mxu0 0.0
    %2753 = vmatprep.subr.mxu0 0.0
    %2754 = vmatpush2.msra.mxu0 0.0
    %2755 = vmatprep.subr.mxu0 0.0
    %2756 = vmatpush2.msra.mxu0 0.0
    %2757 = vmatprep.subr.mxu0 0.0
    %2758 = vmatpush2.msra.mxu0 0.0
    %2759 = vmatprep.subr.mxu0 0.0
    %2760 = vmatpush2.msra.mxu0 0.0
    %2761 = vmatprep.subr.mxu0 0.0
    %2762 = vmatpush2.msra.mxu0 0.0
    %2763 = vmatprep.subr.mxu0 0.0
    %2764 = vmatpush2.msra.mxu0 0.0
    %2765 = vmatprep.subr.mxu0 0.0
    %2766 = vmatpush2.msra.mxu0 0.0
    %2767 = vmatprep.subr.mxu0 0.0
    %2768 = vmatpush2.msra.mxu0 0.0
    %2769 = vmatprep.subr.mxu0 0.0
    %2770 = vmatpush2.msra.mxu0 0.0
    %2771 = vmatprep.mubr.f32.mxu0 0.0
    %2772 = vmatmul.mubr.f32.gmra.mxu0 %v2634
    %v2773 = vpop.f32.mrf.mxu0
    %v2774 = vadd.f32 0.0, %v2773
    %v2775 = vpop.f32.mrf.mxu0
    %v2776 = vadd.f32 0.0, %v2775
    %2777 = vdwg.mxu0
    %v2778 = vadd.f32 %v2629, %v2703
    %v2779 = vadd.f32 %v2630, %v2705
    %v2780 = vadd.f32 %v2631, %v2774
    %v2781 = vadd.f32 %v2632, %v2776
    %v2782 = vxor.u32 %v2778, 2147483648
    %v2783 = vmul.f32 %v2782, 1.442695
    %v2784 = vpow.pop %v2783
    %v2785 = vadd.f32 %v2784, 1.0
    %v2786 = vrcp.pop %v2785
    %v2787 = vmul.f32 1.0, %v2786
    %v2788 = vxor.u32 %v2779, 2147483648
    %v2789 = vmul.f32 %v2788, 1.442695
    %v2790 = vpow.pop %v2789
    %v2791 = vadd.f32 %v2790, 1.0
    %v2792 = vrcp.pop %v2791
    %v2793 = vmul.f32 1.0, %v2792
    %v2794 = vtanh.pop %v2780
    %v2795 = vxor.u32 %v2781, 2147483648
    %v2796 = vmul.f32 %v2795, 1.442695
    %v2797 = vpow.pop %v2796
    %v2798 = vadd.f32 %v2797, 1.0
    %v2799 = vrcp.pop %v2798
    %v2800 = vmul.f32 1.0, %v2799
    %v2801 = vmul.f32 %v2793, %v2625
    %v2802 = vmul.f32 %v2787, %v2794
    %v2803 = vadd.f32 %v2801, %v2802
    %v2804 = vtanh.pop %v2803
    %v2805 = vmul.f32 %v2800, %v2804
    %2806 = vst.msk [vmem:[#allocation3 + $0x20] sm:$0xff] %vm602, %v2805
    %v2807 = vld [vmem:[#allocation2 + $0x160] sm:$0xff]
    %v2808 = vld [vmem:[#allocation2 + $0x168] sm:$0xff]
    %v2809 = vld [vmem:[#allocation2 + $0x170] sm:$0xff]
    %v2810 = vld [vmem:[#allocation2 + $0x178] sm:$0xff]
    %v2812 = vsel %vm602, %v2805, 0
    %2814 = vmatprep.subr.mxu0 0.0
    %2815 = vmatpush1.msra.mxu0 0.0
    %2816 = vmatprep.subr.mxu0 0.0
    %2817 = vmatpush1.msra.mxu0 0.0
    %2818 = vmatprep.subr.mxu0 0.0
    %2819 = vmatpush1.msra.mxu0 0.0
    %2820 = vmatprep.subr.mxu0 0.0
    %2821 = vmatpush1.msra.mxu0 0.0
    %2822 = vmatprep.subr.mxu0 0.0
    %2823 = vmatpush1.msra.mxu0 0.0
    %2824 = vmatprep.subr.mxu0 0.0
    %2825 = vmatpush1.msra.mxu0 0.0
    %2826 = vmatprep.subr.mxu0 0.0
    %2827 = vmatpush1.msra.mxu0 0.0
    %2828 = vmatprep.subr.mxu0 0.0
    %2829 = vmatpush1.msra.mxu0 0.0
    %2830 = vmatprep.subr.mxu0 0.0
    %2831 = vmatpush1.msra.mxu0 0.0
    %2832 = vmatprep.subr.mxu0 0.0
    %2833 = vmatpush1.msra.mxu0 0.0
    %2834 = vmatprep.subr.mxu0 0.0
    %2835 = vmatpush1.msra.mxu0 0.0
    %2836 = vmatprep.subr.mxu0 0.0
    %2837 = vmatpush1.msra.mxu0 0.0
    %2838 = vmatprep.subr.mxu0 0.0
    %2839 = vmatpush1.msra.mxu0 0.0
    %2840 = vmatprep.subr.mxu0 %v1916
    %2841 = vmatpush1.msra.mxu0 %v1913
    %2842 = vmatprep.subr.mxu0 %v1898
    %2843 = vmatpush1.msra.mxu0 %v1897
    %2844 = vmatprep.subr.mxu0 %v1894
    %2845 = vmatpush1.msra.mxu0 %v1893
    %2846 = vmatprep.subr.mxu0 0.0
    %2847 = vmatpush2.msra.mxu0 0.0
    %2848 = vmatprep.subr.mxu0 0.0
    %2849 = vmatpush2.msra.mxu0 0.0
    %2850 = vmatprep.subr.mxu0 0.0
    %2851 = vmatpush2.msra.mxu0 0.0
    %2852 = vmatprep.subr.mxu0 0.0
    %2853 = vmatpush2.msra.mxu0 0.0
    %2854 = vmatprep.subr.mxu0 0.0
    %2855 = vmatpush2.msra.mxu0 0.0
    %2856 = vmatprep.subr.mxu0 0.0
    %2857 = vmatpush2.msra.mxu0 0.0
    %2858 = vmatprep.subr.mxu0 0.0
    %2859 = vmatpush2.msra.mxu0 0.0
    %2860 = vmatprep.subr.mxu0 0.0
    %2861 = vmatpush2.msra.mxu0 0.0
    %2862 = vmatprep.subr.mxu0 0.0
    %2863 = vmatpush2.msra.mxu0 0.0
    %2864 = vmatprep.subr.mxu0 0.0
    %2865 = vmatpush2.msra.mxu0 0.0
    %2866 = vmatprep.subr.mxu0 0.0
    %2867 = vmatpush2.msra.mxu0 0.0
    %2868 = vmatprep.subr.mxu0 0.0
    %2869 = vmatpush2.msra.mxu0 0.0
    %2870 = vmatprep.subr.mxu0 0.0
    %2871 = vmatpush2.msra.mxu0 0.0
    %2872 = vmatprep.subr.mxu0 0.0
    %2873 = vmatpush2.msra.mxu0 0.0
    %2874 = vmatprep.subr.mxu0 0.0
    %2875 = vmatpush2.msra.mxu0 0.0
    %2876 = vmatprep.subr.mxu0 0.0
    %2877 = vmatpush2.msra.mxu0 0.0
    %2878 = vmatprep.mubr.f32.mxu0 0.0
    %2879 = vmatmul.mubr.f32.gmra.mxu0 %v2812
    %v2880 = vpop.f32.mrf.mxu0
    %v2881 = vadd.f32 0.0, %v2880
    %v2882 = vpop.f32.mrf.mxu0
    %v2883 = vadd.f32 0.0, %v2882
    %2884 = vdwg.mxu0
    %2885 = vmatprep.subr.mxu0 0.0
    %2886 = vmatpush1.msra.mxu0 0.0
    %2887 = vmatprep.subr.mxu0 0.0
    %2888 = vmatpush1.msra.mxu0 0.0
    %2889 = vmatprep.subr.mxu0 0.0
    %2890 = vmatpush1.msra.mxu0 0.0
    %2891 = vmatprep.subr.mxu0 0.0
    %2892 = vmatpush1.msra.mxu0 0.0
    %2893 = vmatprep.subr.mxu0 0.0
    %2894 = vmatpush1.msra.mxu0 0.0
    %2895 = vmatprep.subr.mxu0 0.0
    %2896 = vmatpush1.msra.mxu0 0.0
    %2897 = vmatprep.subr.mxu0 0.0
    %2898 = vmatpush1.msra.mxu0 0.0
    %2899 = vmatprep.subr.mxu0 0.0
    %2900 = vmatpush1.msra.mxu0 0.0
    %2901 = vmatprep.subr.mxu0 0.0
    %2902 = vmatpush1.msra.mxu0 0.0
    %2903 = vmatprep.subr.mxu0 0.0
    %2904 = vmatpush1.msra.mxu0 0.0
    %2905 = vmatprep.subr.mxu0 0.0
    %2906 = vmatpush1.msra.mxu0 0.0
    %2907 = vmatprep.subr.mxu0 0.0
    %2908 = vmatpush1.msra.mxu0 0.0
    %2909 = vmatprep.subr.mxu0 0.0
    %2910 = vmatpush1.msra.mxu0 0.0
    %2911 = vmatprep.subr.mxu0 %v1922
    %2912 = vmatpush1.msra.mxu0 %v1919
    %2913 = vmatprep.subr.mxu0 %v1900
    %2914 = vmatpush1.msra.mxu0 %v1899
    %2915 = vmatprep.subr.mxu0 %v1896
    %2916 = vmatpush1.msra.mxu0 %v1895
    %2917 = vmatprep.subr.mxu0 0.0
    %2918 = vmatpush2.msra.mxu0 0.0
    %2919 = vmatprep.subr.mxu0 0.0
    %2920 = vmatpush2.msra.mxu0 0.0
    %2921 = vmatprep.subr.mxu0 0.0
    %2922 = vmatpush2.msra.mxu0 0.0
    %2923 = vmatprep.subr.mxu0 0.0
    %2924 = vmatpush2.msra.mxu0 0.0
    %2925 = vmatprep.subr.mxu0 0.0
    %2926 = vmatpush2.msra.mxu0 0.0
    %2927 = vmatprep.subr.mxu0 0.0
    %2928 = vmatpush2.msra.mxu0 0.0
    %2929 = vmatprep.subr.mxu0 0.0
    %2930 = vmatpush2.msra.mxu0 0.0
    %2931 = vmatprep.subr.mxu0 0.0
    %2932 = vmatpush2.msra.mxu0 0.0
    %2933 = vmatprep.subr.mxu0 0.0
    %2934 = vmatpush2.msra.mxu0 0.0
    %2935 = vmatprep.subr.mxu0 0.0
    %2936 = vmatpush2.msra.mxu0 0.0
    %2937 = vmatprep.subr.mxu0 0.0
    %2938 = vmatpush2.msra.mxu0 0.0
    %2939 = vmatprep.subr.mxu0 0.0
    %2940 = vmatpush2.msra.mxu0 0.0
    %2941 = vmatprep.subr.mxu0 0.0
    %2942 = vmatpush2.msra.mxu0 0.0
    %2943 = vmatprep.subr.mxu0 0.0
    %2944 = vmatpush2.msra.mxu0 0.0
    %2945 = vmatprep.subr.mxu0 0.0
    %2946 = vmatpush2.msra.mxu0 0.0
    %2947 = vmatprep.subr.mxu0 0.0
    %2948 = vmatpush2.msra.mxu0 0.0
    %2949 = vmatprep.mubr.f32.mxu0 0.0
    %2950 = vmatmul.mubr.f32.gmra.mxu0 %v2812
    %v2951 = vpop.f32.mrf.mxu0
    %v2952 = vadd.f32 0.0, %v2951
    %v2953 = vpop.f32.mrf.mxu0
    %v2954 = vadd.f32 0.0, %v2953
    %2955 = vdwg.mxu0
    %v2956 = vadd.f32 %v2807, %v2881
    %v2957 = vadd.f32 %v2808, %v2883
    %v2958 = vadd.f32 %v2809, %v2952
    %v2959 = vadd.f32 %v2810, %v2954
    %v2960 = vxor.u32 %v2956, 2147483648
    %v2961 = vmul.f32 %v2960, 1.442695
    %v2962 = vpow.pop %v2961
    %v2963 = vadd.f32 %v2962, 1.0
    %v2964 = vrcp.pop %v2963
    %v2965 = vmul.f32 1.0, %v2964
    %v2966 = vxor.u32 %v2957, 2147483648
    %v2967 = vmul.f32 %v2966, 1.442695
    %v2968 = vpow.pop %v2967
    %v2969 = vadd.f32 %v2968, 1.0
    %v2970 = vrcp.pop %v2969
    %v2971 = vmul.f32 1.0, %v2970
    %v2972 = vtanh.pop %v2958
    %v2973 = vxor.u32 %v2959, 2147483648
    %v2974 = vmul.f32 %v2973, 1.442695
    %v2975 = vpow.pop %v2974
    %v2976 = vadd.f32 %v2975, 1.0
    %v2977 = vrcp.pop %v2976
    %v2978 = vmul.f32 1.0, %v2977
    %v2979 = vmul.f32 %v2971, %v2803
    %v2980 = vmul.f32 %v2965, %v2972
    %v2981 = vadd.f32 %v2979, %v2980
    %v2982 = vtanh.pop %v2981
    %v2983 = vmul.f32 %v2978, %v2982
    %2984 = vst.msk [vmem:[#allocation3 + $0x28] sm:$0xff] %vm602, %v2983
    %v2985 = vld [vmem:[#allocation8 + $0x50] sm:$0xff]
    %v2986 = vld [vmem:[#allocation8 + $0xa8] sm:$0xff]
    %v2987 = vld [vmem:[#allocation8 + $0x100] sm:$0xf]
    %v2988 = vld [vmem:[#allocation3] sm:$0xff]
    %v2989 = vld [vmem:[#allocation3 + $0x8] sm:$0xff]
    %v2990 = vld [vmem:[#allocation3 + $0x10] sm:$0xff]
    %v2991 = vld [vmem:[#allocation3 + $0x18] sm:$0xff]
    %v2992 = vld [vmem:[#allocation3 + $0x20] sm:$0xff]
    %v2993 = vld [vmem:[#allocation3 + $0x28] sm:$0xff]
    %v2994 = vld [vmem:[%s4 + $0x14] ss:$0 sm:$0xff]
    %v2996 = vsel %vm602, %v2988, 0
    %v2999 = vsel %vm602, %v2989, 0
    %v3002 = vsel %vm602, %v2990, 0
    %v3005 = vsel %vm602, %v2991, 0
    %v3008 = vsel %vm602, %v2992, 0
    %v3011 = vsel %vm602, %v2993, 0
    %v3014 = vsel %vm606, %v2987, 0
    %3016 = vmatprep.subr.mxu0 0.0
    %3017 = vmatpush1.msra.mxu0 0.0
    %3018 = vmatprep.subr.mxu0 0.0
    %3019 = vmatpush1.msra.mxu0 0.0
    %3020 = vmatprep.subr.mxu0 0.0
    %3021 = vmatpush1.msra.mxu0 0.0
    %3022 = vmatprep.subr.mxu0 0.0
    %3023 = vmatpush1.msra.mxu0 0.0
    %3024 = vmatprep.subr.mxu0 0.0
    %3025 = vmatpush1.msra.mxu0 0.0
    %3026 = vmatprep.subr.mxu0 0.0
    %3027 = vmatpush1.msra.mxu0 0.0
    %3028 = vmatprep.subr.mxu0 0.0
    %3029 = vmatpush1.msra.mxu0 0.0
    %3030 = vmatprep.subr.mxu0 0.0
    %3031 = vmatpush1.msra.mxu0 0.0
    %3032 = vmatprep.subr.mxu0 0.0
    %3033 = vmatpush1.msra.mxu0 0.0
    %3034 = vmatprep.subr.mxu0 0.0
    %3035 = vmatpush1.msra.mxu0 0.0
    %3036 = vmatprep.subr.mxu0 0.0
    %3037 = vmatpush1.msra.mxu0 0.0
    %3038 = vmatprep.subr.mxu0 0.0
    %3039 = vmatpush1.msra.mxu0 0.0
    %3040 = vmatprep.subr.mxu0 0.0
    %3041 = vmatpush1.msra.mxu0 0.0
    %3042 = vmatprep.subr.mxu0 0.0
    %3043 = vmatpush1.msra.mxu0 %v3014
    %3044 = vmatprep.subr.mxu0 0.0
    %3045 = vmatpush1.msra.mxu0 %v2986
    %3046 = vmatprep.subr.mxu0 0.0
    %3047 = vmatpush1.msra.mxu0 %v2985
    %3048 = vmatprep.subr.mxu0 0.0
    %3049 = vmatpush2.msra.mxu0 0.0
    %3050 = vmatprep.subr.mxu0 0.0
    %3051 = vmatpush2.msra.mxu0 0.0
    %3052 = vmatprep.subr.mxu0 0.0
    %3053 = vmatpush2.msra.mxu0 0.0
    %3054 = vmatprep.subr.mxu0 0.0
    %3055 = vmatpush2.msra.mxu0 0.0
    %3056 = vmatprep.subr.mxu0 0.0
    %3057 = vmatpush2.msra.mxu0 0.0
    %3058 = vmatprep.subr.mxu0 0.0
    %3059 = vmatpush2.msra.mxu0 0.0
    %3060 = vmatprep.subr.mxu0 0.0
    %3061 = vmatpush2.msra.mxu0 0.0
    %3062 = vmatprep.subr.mxu0 0.0
    %3063 = vmatpush2.msra.mxu0 0.0
    %3064 = vmatprep.subr.mxu0 0.0
    %3065 = vmatpush2.msra.mxu0 0.0
    %3066 = vmatprep.subr.mxu0 0.0
    %3067 = vmatpush2.msra.mxu0 0.0
    %3068 = vmatprep.subr.mxu0 0.0
    %3069 = vmatpush2.msra.mxu0 0.0
    %3070 = vmatprep.subr.mxu0 0.0
    %3071 = vmatpush2.msra.mxu0 0.0
    %3072 = vmatprep.subr.mxu0 0.0
    %3073 = vmatpush2.msra.mxu0 0.0
    %3074 = vmatprep.subr.mxu0 0.0
    %3075 = vmatpush2.msra.mxu0 0.0
    %3076 = vmatprep.subr.mxu0 0.0
    %3077 = vmatpush2.msra.mxu0 0.0
    %3078 = vmatprep.subr.mxu0 0.0
    %3079 = vmatpush2.msra.mxu0 0.0
    %3080 = vmatprep.mubr.f32.mxu0 0.0
    %3081 = vmatmul.mubr.f32.gmra.mxu0 %v2996
    %v3082 = vpop.f32.mrf.mxu0
    %v3083 = vadd.f32 %v2994, %v3082
    %v3084 = vpop.f32.mrf.mxu0
    %3085 = vmatprep.mubr.f32.mxu0 0.0
    %3086 = vmatmul.mubr.f32.gmra.mxu0 %v2999
    %v3087 = vpop.f32.mrf.mxu0
    %v3088 = vadd.f32 %v2994, %v3087
    %v3089 = vpop.f32.mrf.mxu0
    %3090 = vmatprep.mubr.f32.mxu0 0.0
    %3091 = vmatmul.mubr.f32.gmra.mxu0 %v3002
    %v3092 = vpop.f32.mrf.mxu0
    %v3093 = vadd.f32 %v2994, %v3092
    %v3094 = vpop.f32.mrf.mxu0
    %3095 = vmatprep.mubr.f32.mxu0 0.0
    %3096 = vmatmul.mubr.f32.gmra.mxu0 %v3005
    %v3097 = vpop.f32.mrf.mxu0
    %v3098 = vadd.f32 %v2994, %v3097
    %v3099 = vpop.f32.mrf.mxu0
    %3100 = vmatprep.mubr.f32.mxu0 0.0
    %3101 = vmatmul.mubr.f32.gmra.mxu0 %v3008
    %v3102 = vpop.f32.mrf.mxu0
    %v3103 = vadd.f32 %v2994, %v3102
    %v3104 = vpop.f32.mrf.mxu0
    %3105 = vmatprep.mubr.f32.mxu0 0.0
    %3106 = vmatmul.mubr.f32.gmra.mxu0 %v3011
    %v3107 = vpop.f32.mrf.mxu0
    %v3108 = vadd.f32 %v2994, %v3107
    %v3109 = vpop.f32.mrf.mxu0
    %3110 = vdwg.mxu0
    %vm3111 = vcmask 203776
    %3112 = vst.msk [vmem:[%s5] sm:$0xff] %vm3111, %v3083
    %3113 = vst.msk [vmem:[%s5 + $0x8] sm:$0xff] %vm3111, %v3088
    %3114 = vst.msk [vmem:[%s5 + $0x10] sm:$0xff] %vm3111, %v3093
    %3115 = vst.msk [vmem:[%s5 + $0x18] sm:$0xff] %vm3111, %v3098
    %3116 = vst.msk [vmem:[%s5 + $0x20] sm:$0xff] %vm3111, %v3103
    %3117 = vst.msk [vmem:[%s5 + $0x28] sm:$0xff] %vm3111, %v3108
    %s3118 = smul.u32 8, 1
    %s3119 = sshll.u32 %s3118, 4
    %3120 = dma.done [#allocation5], %s3119
    // Predicated region
    $region34: #{tpu_custom_call.1} parent=1 // pred_check
      _
    $region35: #{tpu_custom_call.1} parent=1 // pred_check_branch
      %3122 = sbr.rel (0) target = $region37
    $region36: #{tpu_custom_call.1} parent=1 // pred_region
      _
    $region37: #{tpu_custom_call.1} parent=1 // pred_fallthru
      _
    // Predicated region
    $region38: #{tpu_custom_call.1} parent=1 // pred_check
      _
    $region39: #{tpu_custom_call.1} parent=1 // pred_check_branch
      %3124 = sbr.rel (0) target = $region41
    $region40: #{tpu_custom_call.1} parent=1 // pred_region
      _
    $region41: #{tpu_custom_call.1} parent=1 // pred_fallthru
      _
    %3125 = vsyncpa [#allocation7], 1
    %3126 = vsyncpa [#allocation9], 1
  %3127 = vsyncmov [#allocation5]
  %s3128 = vpop.sfrf %3127
  %p3129 = scmp.eq.s32.totalorder %s3128, 0
  %p3130 = pneg %p3129
  %3132 = shalt.err (%p3130)

</llo_original>
